<compile_context>
chip_gen: v5e
topology: v5e:2x2
jax: 0.10.0
libtpu: 0.0.40
codegen_flags: <defaults>
</compile_context>

<pallas_src>
import math

import jax
import jax.numpy as jnp
from jax.experimental import pallas as pl
from jax.experimental.pallas import tpu as pltpu


def _layernorm(x, w, b, eps):
    mu = jnp.mean(x, axis=-1, keepdims=True)
    xc = x - mu
    var = jnp.mean(xc * xc, axis=-1, keepdims=True)
    return xc * jax.lax.rsqrt(var + eps) * w + b


def _silu(x):
    return x * jax.nn.sigmoid(x)


def make_block_kernel(*, seq_len, dim, n_heads, head_dim, ffn_hidden,
                      seq_tile, norm_eps, ln_eps):
    S, D, H, tQ = seq_len, dim, ffn_hidden, seq_tile
    scale = 1.0 / math.sqrt(head_dim)
    bf16, f32 = jnp.bfloat16, jnp.float32

    def kernel(x_ref, mod_ref, cos_ref, sin_ref,
               wqkv_ref, wo_ref, w13_ref, w2_ref, ln_ref,
               out_ref, q_c, k_c, v_c, attn_scr):
        ph = pl.program_id(1)
        j = pl.program_id(2)
        js = pl.multiple_of(j * tQ, tQ)

        m6 = mod_ref[0]      # (6, D) rows: sMSA, cMSA, gMSA, sMLP, cMLP, gMLP
        lnp = ln_ref[...]    # (8, D) rows: qn_w, qn_b, kn_w, kn_b, an_w, an_b, fn_w, fn_b

        # ---------------- phase 0: build Q/K/V cache for sequence tile j ----------
        @pl.when(ph == 0)
        def _():
            shift_msa, scale_msa = m6[0:1, :], m6[1:2, :]
            x_t = x_ref[0]                                       # (tQ, D) f32
            h = _layernorm(x_t, lnp[4:5, :], lnp[5:6, :], norm_eps)
            h = h * (1.0 + scale_msa) + shift_msa                # adaLN modulate
            qkv = jnp.dot(h.astype(bf16), wqkv_ref[...],
                          preferred_element_type=f32)            # (tQ, 3D) f32
            q = _layernorm(qkv[:, 0:D], lnp[0:1, :], lnp[1:2, :], ln_eps)
            k = _layernorm(qkv[:, D:2 * D], lnp[2:3, :], lnp[3:4, :], ln_eps)
            v = qkv[:, 2 * D:3 * D]

            # RoPE: pairwise lane swap via two rolls + select (no MXU).  The pair
            # sign (-sin on even lanes, +sin on odd lanes) is folded into sin_ref by
            # the wrapper; the iota/partner check makes the construction independent
            # of the roll direction convention.  Mask is (tQ, D) (not (S, D)).
            cos = cos_ref[...].astype(f32)
            sin = sin_ref[...].astype(f32)
            lane = jax.lax.broadcasted_iota(jnp.int32, (tQ, D), 1)
            partner = lane + 1 - 2 * (lane % 2)
            use_r1 = pltpu.roll(lane, 1, axis=1) == partner

            def pair_swap(t):
                return jnp.where(use_r1, pltpu.roll(t, 1, axis=1),
                                 pltpu.roll(t, D - 1, axis=1))

            q = q * cos + pair_swap(q) * sin
            k = k * cos + pair_swap(k) * sin
            q_c[pl.ds(js, tQ), :] = (q * scale).astype(bf16)     # fold 1/sqrt(hd) in
            k_c[pl.ds(js, tQ), :] = k.astype(bf16)
            v_c[pl.ds(js, tQ), :] = v.astype(bf16)

        # ------------- phase 1: attention + WO + residual + SwiGLU FFN -----------
        @pl.when(ph == 1)
        def _():
            gate_msa = m6[2:3, :]
            shift_mlp, scale_mlp, gate_mlp = m6[3:4, :], m6[4:5, :], m6[5:6, :]
            x_t = x_ref[0]                                       # (tQ, D) f32
            q_t = q_c[pl.ds(js, tQ), :]                          # (tQ, D) bf16

            # Small static head loop (4 heads in the test == full unroll).
            # TODO(synk): for many heads use lax.fori_loop(..., unroll=True) over
            #             head groups; for production S switch to flash-style
            #             online softmax over KV chunks.
            for hh in range(n_heads):
                sl = slice(hh * head_dim, (hh + 1) * head_dim)
                s = jax.lax.dot_general(q_t[:, sl], k_c[:, sl],
                                        (((1,), (1,)), ((), ())),
                                        preferred_element_type=f32)   # (tQ, S)
                m = jnp.max(s, axis=-1, keepdims=True)
                e = jnp.exp(s - m)
                l = jnp.sum(e, axis=-1, keepdims=True)
                pv = jnp.dot(e.astype(bf16), v_c[:, sl],
                             preferred_element_type=f32)              # (tQ, hd)
                # normalize after PV (EUP rcp); stash at this head's lane offset
                attn_scr[:, sl] = (pv * pl.reciprocal(l, approx=True)).astype(bf16)

            # single K=D WO matmul instead of n_heads K=head_dim matmuls
            o = jnp.dot(attn_scr[...], wo_ref[...], preferred_element_type=f32)
            x1 = x_t + gate_msa * o

            h2 = _layernorm(x1, lnp[6:7, :], lnp[7:8, :], norm_eps)
            h2 = h2 * (1.0 + scale_mlp) + shift_mlp
            g = jnp.dot(h2.astype(bf16), w13_ref[...],
                        preferred_element_type=f32)                   # (tQ, 2H)
            ff = jnp.dot((_silu(g[:, 0:H]) * g[:, H:2 * H]).astype(bf16),
                         w2_ref[...], preferred_element_type=f32)     # (tQ, D)

            out_ref[0] = x1 + gate_mlp * ff

    return kernel


def transformer_block(x, adaln_input, freqs_cos, freqs_sin, params,
                      *, n_heads, norm_eps, ln_eps=1e-5, seq_tile=None):
    """x: (B, S, D) f32; adaln_input: (B, Dc) f32; freqs_cos/sin: (S, head_dim//2)."""
    B, S, D = x.shape
    assert D % n_heads == 0
    head_dim = D // n_heads
    assert head_dim % 2 == 0, "RoPE pair swap assumes even head_dim"
    ffn_hidden = params["w2"].shape[0]

    f32, bf16 = jnp.float32, jnp.bfloat16

    try:
        vmem_cap = pltpu.get_tpu_info().vmem_capacity_bytes
    except Exception:
        vmem_cap = 64 * 2 ** 20

    if seq_tile is None:
        # smaller default tile on small-VMEM generations (v7x)
        seq_tile = min(S, 128 if vmem_cap <= (64 << 20) else 256)
    assert S % seq_tile == 0 and seq_tile % 8 == 0
    nQ = S // seq_tile

    # ---- adaLN hoisted to XLA (M=1 GEMV; keeps Dc x 6D weight out of VMEM) ----
    ada = (jax.nn.silu(adaln_input.astype(f32)) @ params["ada_w"].astype(f32)
           + params["ada_b"].astype(f32))                 # (B, 6D)
    mod = ada.reshape(B, 6, D)

    # ---- RoPE tables: cos repeated per pair; pair sign folded into sin; bf16,
    #      blocked (seq_tile, D) inside the kernel so they are never whole-S resident.
    cos2 = jnp.tile(jnp.repeat(freqs_cos.astype(f32), 2, axis=1),
                    (1, n_heads)).astype(bf16)
    sign = jnp.tile(jnp.array([-1.0, 1.0], dtype=f32), head_dim // 2)
    sin2 = jnp.tile(jnp.repeat(freqs_sin.astype(f32), 2, axis=1) * sign[None, :],
                    (1, n_heads)).astype(bf16)
    # TODO(synk): pass (S, head_dim) tables and broadcast across heads in-kernel to
    #             also remove the n_heads-fold redundant HBM footprint / DMA.

    # ---- fused bf16 weights ----
    wqkv = jnp.concatenate([params["wq"], params["wk"], params["wv"]],
                           axis=1).astype(bf16)           # (D, 3D)
    w13 = jnp.concatenate([params["w1"], params["w3"]], axis=1).astype(bf16)
    wo = params["wo"].astype(bf16)
    w2 = params["w2"].astype(bf16)

    # ---- LayerNorm scale/bias rows packed into one (8, D) tile ----
    ln_rows = jnp.stack([params["qn_w"], params["qn_b"],
                         params["kn_w"], params["kn_b"],
                         params["an_w"], params["an_b"],
                         params["fn_w"], params["fn_b"]], axis=0).astype(f32)

    args = (x.astype(f32), mod, cos2, sin2, wqkv, wo, w13, w2, ln_rows)

    kernel = make_block_kernel(seq_len=S, dim=D, n_heads=n_heads,
                               head_dim=head_dim, ffn_hidden=ffn_hidden,
                               seq_tile=seq_tile, norm_eps=norm_eps,
                               ln_eps=ln_eps)

    # static per-call byte counts for the explicit VMEM working-set estimate
    w_bytes = int(wqkv.size + wo.size + w13.size + w2.size) * 2 + int(ln_rows.size) * 4
    cache_bytes = 3 * S * D * 2 + seq_tile * D * 2               # q/k/v caches + attn scratch
    tile_bytes = 2 * (seq_tile * D * 4      # x block (double-buffered)
                      + 6 * D * 4           # modulation rows
                      + 2 * seq_tile * D * 2  # cos + sin tiles
                      + seq_tile * D * 4)   # output block

    def run(single_buffer_weights):
        wb = 1 if single_buffer_weights else 2
        est = w_bytes * wb + cache_bytes + tile_bytes
        assert est <= vmem_cap, (
            f"estimated VMEM working set {est/2**20:.1f} MiB exceeds capacity "
            f"{vmem_cap/2**20:.1f} MiB; reduce seq_tile or use flash-style attention")
        vmem_limit = int(min(vmem_cap * 0.9, max(est + (8 << 20), 32 << 20)))

        def resident(a):
            kw = {}
            if single_buffer_weights:
                kw["pipeline_mode"] = pl.Buffered(1)
            return pl.BlockSpec(a.shape, lambda b, ph, j, _n=a.ndim: (0,) * _n, **kw)

        in_specs = [
            pl.BlockSpec((1, seq_tile, D), lambda b, ph, j: (b, j, 0)),        # x tile
            pl.BlockSpec((1, 6, D), lambda b, ph, j: (b, 0, 0)),               # modulation
            pl.BlockSpec((seq_tile, D), lambda b, ph, j: (j * (1 - ph), 0)),   # cos tile
            pl.BlockSpec((seq_tile, D), lambda b, ph, j: (j * (1 - ph), 0)),   # sin tile
        ] + [resident(a) for a in args[4:]]                                    # weights + LN rows

        return pl.pallas_call(
            kernel,
            out_shape=jax.ShapeDtypeStruct((B, S, D), jnp.float32),
            grid=(B, 2, nQ),
            in_specs=in_specs,
            # phase 0 keeps the out block index constant -> no garbage writebacks;
            # phase 1 writes tile j.
            out_specs=pl.BlockSpec((1, seq_tile, D), lambda b, ph, j: (b, j * ph, 0)),
            scratch_shapes=[
                pltpu.VMEM((S, D), bf16),          # q cache (rope'd, pre-scaled)
                pltpu.VMEM((S, D), bf16),          # k cache (rope'd)
                pltpu.VMEM((S, D), bf16),          # v cache
                pltpu.VMEM((seq_tile, D), bf16),   # per-tile attention output (pre-WO)
            ],
            compiler_params=pltpu.CompilerParams(
                dimension_semantics=("parallel", "arbitrary", "arbitrary"),
                vmem_limit_bytes=vmem_limit),
        )(*args)

    try:
        # single-buffer the grid-invariant weights (halves their VMEM footprint)
        return run(True)
    except (pltpu.LoweringException, NotImplementedError, ValueError, TypeError) as e:
        print("WARNING: single-buffered resident weights rejected "
              f"({type(e).__name__}: {e}); falling back to default double buffering.")
        return run(False)


# ---------------- pure-JAX f32 reference (mirrors the PyTorch semantics) ----------
def reference_forward(x, adaln_input, freqs_cos, freqs_sin, params,
                      n_heads, norm_eps, ln_eps=1e-5):
    B, S, D = x.shape
    hd = D // n_heads
    f32 = jnp.float32
    p = {k: v.astype(f32) for k, v in params.items()}

    def ln(t, w, b, eps):
        mu = t.mean(-1, keepdims=True)
        var = ((t - mu) ** 2).mean(-1, keepdims=True)
        return (t - mu) / jnp.sqrt(var + eps) * w + b

    silu = lambda t: t * jax.nn.sigmoid(t)
    mo = lambda t, sh, sc: t * (1 + sc[:, None, :]) + sh[:, None, :]

    ada = silu(adaln_input.astype(f32)) @ p["ada_w"] + p["ada_b"]
    sm, cm, gm, smlp, cmlp, gmlp = jnp.split(ada, 6, axis=1)

    h = mo(ln(x, p["an_w"], p["an_b"], norm_eps), sm, cm)
    xq = ln(h @ p["wq"], p["qn_w"], p["qn_b"], ln_eps)
    xk = ln(h @ p["wk"], p["kn_w"], p["kn_b"], ln_eps)
    xv = (h @ p["wv"]).reshape(B, S, n_heads, hd)
    xq = xq.reshape(B, S, n_heads, hd)
    xk = xk.reshape(B, S, n_heads, hd)

    def rope(t):
        tr = t.reshape(B, S, n_heads, hd // 2, 2)
        re, im = tr[..., 0], tr[..., 1]
        c = freqs_cos[None, :, None, :]
        s = freqs_sin[None, :, None, :]
        return jnp.stack([re * c - im * s, re * s + im * c],
                         axis=-1).reshape(B, S, n_heads, hd)

    xq, xk = rope(xq), rope(xk)
    scores = jnp.einsum("bqhd,bkhd->bhqk", xq, xk) / math.sqrt(hd)
    probs = jax.nn.softmax(scores, axis=-1)
    attn = jnp.einsum("bhqk,bkhd->bqhd", probs, xv).reshape(B, S, D) @ p["wo"]
    x1 = x + gm[:, None, :] * attn

    h2 = mo(ln(x1, p["fn_w"], p["fn_b"], norm_eps), smlp, cmlp)
    ff = (silu(h2 @ p["w1"]) * (h2 @ p["w3"])) @ p["w2"]
    return x1 + gmlp[:, None, :] * ff


if __name__ == "__main__":
    # small shapes consistent with the module (dim multiple of 128 for lane alignment)
    B, S, D, nH = 2, 32, 128, 4
    Hd = D // nH                       # 32
    multiple_of = 256
    norm_eps = 1e-5
    ffn_hidden = int(2 * (4 * D) / 3)
    ffn_hidden = multiple_of * ((ffn_hidden + multiple_of - 1) // multiple_of)  # 512
    Dc = min(D, 1024)                  # 128

    key = jax.random.PRNGKey(0)
    ks = jax.random.split(key, 20)
    f32, bf16 = jnp.float32, jnp.bfloat16

    def nrm(k, shape, s=0.02):
        return jax.random.normal(k, shape, f32) * s

    params = dict(
        wq=nrm(ks[0], (D, D)).astype(bf16), wk=nrm(ks[1], (D, D)).astype(bf16),
        wv=nrm(ks[2], (D, D)).astype(bf16), wo=nrm(ks[3], (D, D)).astype(bf16),
        qn_w=1.0 + nrm(ks[4], (D,)), qn_b=nrm(ks[5], (D,)),
        kn_w=1.0 + nrm(ks[6], (D,)), kn_b=nrm(ks[7], (D,)),
        an_w=1.0 + nrm(ks[8], (D,)), an_b=nrm(ks[9], (D,)),
        fn_w=1.0 + nrm(ks[10], (D,)), fn_b=nrm(ks[11], (D,)),
        w1=nrm(ks[12], (D, ffn_hidden)).astype(bf16),
        w3=nrm(ks[13], (D, ffn_hidden)).astype(bf16),
        w2=nrm(ks[14], (ffn_hidden, D)).astype(bf16),
        ada_w=nrm(ks[15], (Dc, 6 * D)), ada_b=nrm(ks[16], (6 * D,)),
    )
    x = jax.random.normal(ks[17], (B, S, D), f32)
    adaln_input = jax.random.normal(ks[18], (B, Dc), f32)

    # rotary frequency tables (cos/sin of the usual 1e4^(-2j/Hd) angles)
    pos = jnp.arange(S, dtype=f32)
    inv = 1.0 / (10000.0 ** (jnp.arange(0, Hd, 2, dtype=f32) / Hd))
    ang = pos[:, None] * inv[None, :]                 # (S, Hd//2)
    freqs_cos, freqs_sin = jnp.cos(ang), jnp.sin(ang)

    out = transformer_block(x, adaln_input, freqs_cos, freqs_sin, params,
                            n_heads=nH, norm_eps=norm_eps, seq_tile=16)
    out = jax.block_until_ready(out)

    ref = reference_forward(x, adaln_input, freqs_cos, freqs_sin, params,
                            nH, norm_eps)
    assert out.shape == (B, S, D)
    err = float(jnp.max(jnp.abs(out - ref)))
    assert jnp.allclose(out, ref, rtol=2e-2, atol=2e-2), err
    print("KERNEL_OK")
</pallas_src>

<mosaic_0001>
module attributes {stable_mosaic.version = 11 : i64} {
  func.func @kernel(%arg0: i32, %arg1: i32, %arg2: i32, %arg3: memref<1x16x128xf32, #tpu.memory_space<vmem>>, %arg4: memref<1x6x128xf32, #tpu.memory_space<vmem>>, %arg5: memref<16x128xbf16, #tpu.memory_space<vmem>>, %arg6: memref<16x128xbf16, #tpu.memory_space<vmem>>, %arg7: memref<128x384xbf16, #tpu.memory_space<vmem>>, %arg8: memref<128x128xbf16, #tpu.memory_space<vmem>>, %arg9: memref<128x1024xbf16, #tpu.memory_space<vmem>>, %arg10: memref<512x128xbf16, #tpu.memory_space<vmem>>, %arg11: memref<8x128xf32, #tpu.memory_space<vmem>>, %arg12: memref<1x16x128xf32, #tpu.memory_space<vmem>>, %arg13: memref<32x128xbf16, #tpu.memory_space<vmem>>, %arg14: memref<32x128xbf16, #tpu.memory_space<vmem>>, %arg15: memref<32x128xbf16, #tpu.memory_space<vmem>>, %arg16: memref<16x128xbf16, #tpu.memory_space<vmem>>) attributes {dimension_semantics = [#tpu.dimension_semantics<parallel>, #tpu.dimension_semantics<arbitrary>, #tpu.dimension_semantics<arbitrary>], iteration_bounds = array<i64: 2, 2, 2>, scalar_prefetch = 0 : i64, scratch_operands = 4 : i64, tpu.core_type = #tpu.core_type<tc>, window_params = [{transform_indices = @transform_0, window_bounds = array<i64: 1, 16, 128>}, {transform_indices = @transform_1, window_bounds = array<i64: 1, 6, 128>}, {transform_indices = @transform_2, window_bounds = array<i64: 16, 128>}, {transform_indices = @transform_3, window_bounds = array<i64: 16, 128>}, {pipeline_mode = #tpu.pipeline_mode<synchronous>, transform_indices = @transform_4, window_bounds = array<i64: 128, 384>}, {pipeline_mode = #tpu.pipeline_mode<synchronous>, transform_indices = @transform_5, window_bounds = array<i64: 128, 128>}, {pipeline_mode = #tpu.pipeline_mode<synchronous>, transform_indices = @transform_6, window_bounds = array<i64: 128, 1024>}, {pipeline_mode = #tpu.pipeline_mode<synchronous>, transform_indices = @transform_7, window_bounds = array<i64: 512, 128>}, {pipeline_mode = #tpu.pipeline_mode<synchronous>, transform_indices = @transform_8, window_bounds = array<i64: 8, 128>}, {transform_indices = @transform_9, window_bounds = array<i64: 1, 16, 128>}]} {
    %c16_i32 = arith.constant 16 : i32
    %0 = arith.muli %arg2, %c16_i32 : i32
    %1 = tpu.assume_multiple %0, 16 : i32
    %c0 = arith.constant 0 : index
    %c0_0 = arith.constant 0 : index
    %c0_1 = arith.constant 0 : index
    %2 = vector.load %arg4[%c0, %c0_0, %c0_1] : memref<1x6x128xf32, #tpu.memory_space<vmem>>, vector<1x6x128xf32>
    %3 = vector.shape_cast %2 : vector<1x6x128xf32> to vector<6x128xf32>
    %c0_2 = arith.constant 0 : index
    %c0_3 = arith.constant 0 : index
    %4 = vector.load %arg11[%c0_2, %c0_3] : memref<8x128xf32, #tpu.memory_space<vmem>>, vector<8x128xf32>
    %c0_i32 = arith.constant 0 : i32
    %5 = arith.cmpi eq, %arg1, %c0_i32 : i32
    %6 = arith.extui %5 : i1 to i32
    %c0_i32_4 = arith.constant 0 : i32
    %7 = arith.cmpi ne, %6, %c0_i32_4 : i32
    scf.if %7 {
      %11 = vector.extract_strided_slice %3 {offsets = [0, 0], sizes = [1, 128], strides = [1, 1]} : vector<6x128xf32> to vector<1x128xf32>
      %12 = vector.extract_strided_slice %3 {offsets = [1, 0], sizes = [1, 128], strides = [1, 1]} : vector<6x128xf32> to vector<1x128xf32>
      %c0_6 = arith.constant 0 : index
      %c0_7 = arith.constant 0 : index
      %c0_8 = arith.constant 0 : index
      %13 = vector.load %arg3[%c0_6, %c0_7, %c0_8] : memref<1x16x128xf32, #tpu.memory_space<vmem>>, vector<1x16x128xf32>
      %14 = vector.shape_cast %13 : vector<1x16x128xf32> to vector<16x128xf32>
      %15 = vector.extract_strided_slice %4 {offsets = [4, 0], sizes = [1, 128], strides = [1, 1]} : vector<8x128xf32> to vector<1x128xf32>
      %16 = vector.extract_strided_slice %4 {offsets = [5, 0], sizes = [1, 128], strides = [1, 1]} : vector<8x128xf32> to vector<1x128xf32>
      %cst = arith.constant dense<0.000000e+00> : vector<16xf32>
      %17 = vector.multi_reduction <add>, %14, %cst [1] : vector<16x128xf32> to vector<16xf32>
      %18 = vector.shape_cast %17 : vector<16xf32> to vector<16x1xf32>
      %cst_9 = arith.constant 1.280000e+02 : f32
      %19 = vector.broadcast %cst_9 : f32 to vector<16x1xf32>
      %20 = arith.divf %18, %19 : vector<16x1xf32>
      %21 = vector.broadcast %20 : vector<16x1xf32> to vector<16x128xf32>
      %22 = arith.subf %14, %21 : vector<16x128xf32>
      %23 = arith.mulf %22, %22 : vector<16x128xf32>
      %cst_10 = arith.constant dense<0.000000e+00> : vector<16xf32>
      %24 = vector.multi_reduction <add>, %23, %cst_10 [1] : vector<16x128xf32> to vector<16xf32>
      %25 = vector.shape_cast %24 : vector<16xf32> to vector<16x1xf32>
      %cst_11 = arith.constant 1.280000e+02 : f32
      %26 = vector.broadcast %cst_11 : f32 to vector<16x1xf32>
      %27 = arith.divf %25, %26 : vector<16x1xf32>
      %cst_12 = arith.constant 9.99999974E-6 : f32
      %28 = vector.broadcast %cst_12 : f32 to vector<16x1xf32>
      %29 = arith.addf %27, %28 : vector<16x1xf32>
      %30 = math.rsqrt %29 : vector<16x1xf32>
      %31 = vector.broadcast %30 : vector<16x1xf32> to vector<16x128xf32>
      %32 = arith.mulf %22, %31 : vector<16x128xf32>
      %33 = vector.broadcast %15 : vector<1x128xf32> to vector<16x128xf32>
      %34 = arith.mulf %32, %33 : vector<16x128xf32>
      %35 = vector.broadcast %16 : vector<1x128xf32> to vector<16x128xf32>
      %36 = arith.addf %34, %35 : vector<16x128xf32>
      %cst_13 = arith.constant 1.000000e+00 : f32
      %37 = vector.broadcast %cst_13 : f32 to vector<1x128xf32>
      %38 = arith.addf %37, %12 : vector<1x128xf32>
      %39 = vector.broadcast %38 : vector<1x128xf32> to vector<16x128xf32>
      %40 = arith.mulf %36, %39 : vector<16x128xf32>
      %41 = vector.broadcast %11 : vector<1x128xf32> to vector<16x128xf32>
      %42 = arith.addf %40, %41 : vector<16x128xf32>
      %43 = arith.truncf %42 : vector<16x128xf32> to vector<16x128xbf16>
      %c0_14 = arith.constant 0 : index
      %c0_15 = arith.constant 0 : index
      %44 = vector.load %arg7[%c0_14, %c0_15] : memref<128x384xbf16, #tpu.memory_space<vmem>>, vector<128x384xbf16>
      %cst_16 = arith.constant dense<0.000000e+00> : vector<16x384xf32>
      %45 = tpu.matmul %43, %44, %cst_16 {dimension_numbers = #tpu.dot_dimension_numbers<[1], [0], [0], [1], [0, 0, 1, 1], [], []>} : vector<16x128xbf16>, vector<128x384xbf16>, vector<16x384xf32> -> vector<16x384xf32>
      %46 = vector.extract_strided_slice %45 {offsets = [0, 0], sizes = [16, 128], strides = [1, 1]} : vector<16x384xf32> to vector<16x128xf32>
      %47 = vector.extract_strided_slice %4 {offsets = [0, 0], sizes = [1, 128], strides = [1, 1]} : vector<8x128xf32> to vector<1x128xf32>
      %48 = vector.extract_strided_slice %4 {offsets = [1, 0], sizes = [1, 128], strides = [1, 1]} : vector<8x128xf32> to vector<1x128xf32>
      %cst_17 = arith.constant dense<0.000000e+00> : vector<16xf32>
      %49 = vector.multi_reduction <add>, %46, %cst_17 [1] : vector<16x128xf32> to vector<16xf32>
      %50 = vector.shape_cast %49 : vector<16xf32> to vector<16x1xf32>
      %cst_18 = arith.constant 1.280000e+02 : f32
      %51 = vector.broadcast %cst_18 : f32 to vector<16x1xf32>
      %52 = arith.divf %50, %51 : vector<16x1xf32>
      %53 = vector.broadcast %52 : vector<16x1xf32> to vector<16x128xf32>
      %54 = arith.subf %46, %53 : vector<16x128xf32>
      %55 = arith.mulf %54, %54 : vector<16x128xf32>
      %cst_19 = arith.constant dense<0.000000e+00> : vector<16xf32>
      %56 = vector.multi_reduction <add>, %55, %cst_19 [1] : vector<16x128xf32> to vector<16xf32>
      %57 = vector.shape_cast %56 : vector<16xf32> to vector<16x1xf32>
      %cst_20 = arith.constant 1.280000e+02 : f32
      %58 = vector.broadcast %cst_20 : f32 to vector<16x1xf32>
      %59 = arith.divf %57, %58 : vector<16x1xf32>
      %cst_21 = arith.constant 9.99999974E-6 : f32
      %60 = vector.broadcast %cst_21 : f32 to vector<16x1xf32>
      %61 = arith.addf %59, %60 : vector<16x1xf32>
      %62 = math.rsqrt %61 : vector<16x1xf32>
      %63 = vector.broadcast %62 : vector<16x1xf32> to vector<16x128xf32>
      %64 = arith.mulf %54, %63 : vector<16x128xf32>
      %65 = vector.broadcast %47 : vector<1x128xf32> to vector<16x128xf32>
      %66 = arith.mulf %64, %65 : vector<16x128xf32>
      %67 = vector.broadcast %48 : vector<1x128xf32> to vector<16x128xf32>
      %68 = arith.addf %66, %67 : vector<16x128xf32>
      %69 = vector.extract_strided_slice %45 {offsets = [0, 128], sizes = [16, 128], strides = [1, 1]} : vector<16x384xf32> to vector<16x128xf32>
      %70 = vector.extract_strided_slice %4 {offsets = [2, 0], sizes = [1, 128], strides = [1, 1]} : vector<8x128xf32> to vector<1x128xf32>
      %71 = vector.extract_strided_slice %4 {offsets = [3, 0], sizes = [1, 128], strides = [1, 1]} : vector<8x128xf32> to vector<1x128xf32>
      %cst_22 = arith.constant dense<0.000000e+00> : vector<16xf32>
      %72 = vector.multi_reduction <add>, %69, %cst_22 [1] : vector<16x128xf32> to vector<16xf32>
      %73 = vector.shape_cast %72 : vector<16xf32> to vector<16x1xf32>
      %cst_23 = arith.constant 1.280000e+02 : f32
      %74 = vector.broadcast %cst_23 : f32 to vector<16x1xf32>
      %75 = arith.divf %73, %74 : vector<16x1xf32>
      %76 = vector.broadcast %75 : vector<16x1xf32> to vector<16x128xf32>
      %77 = arith.subf %69, %76 : vector<16x128xf32>
      %78 = arith.mulf %77, %77 : vector<16x128xf32>
      %cst_24 = arith.constant dense<0.000000e+00> : vector<16xf32>
      %79 = vector.multi_reduction <add>, %78, %cst_24 [1] : vector<16x128xf32> to vector<16xf32>
      %80 = vector.shape_cast %79 : vector<16xf32> to vector<16x1xf32>
      %cst_25 = arith.constant 1.280000e+02 : f32
      %81 = vector.broadcast %cst_25 : f32 to vector<16x1xf32>
      %82 = arith.divf %80, %81 : vector<16x1xf32>
      %cst_26 = arith.constant 9.99999974E-6 : f32
      %83 = vector.broadcast %cst_26 : f32 to vector<16x1xf32>
      %84 = arith.addf %82, %83 : vector<16x1xf32>
      %85 = math.rsqrt %84 : vector<16x1xf32>
      %86 = vector.broadcast %85 : vector<16x1xf32> to vector<16x128xf32>
      %87 = arith.mulf %77, %86 : vector<16x128xf32>
      %88 = vector.broadcast %70 : vector<1x128xf32> to vector<16x128xf32>
      %89 = arith.mulf %87, %88 : vector<16x128xf32>
      %90 = vector.broadcast %71 : vector<1x128xf32> to vector<16x128xf32>
      %91 = arith.addf %89, %90 : vector<16x128xf32>
      %92 = vector.extract_strided_slice %45 {offsets = [0, 256], sizes = [16, 128], strides = [1, 1]} : vector<16x384xf32> to vector<16x128xf32>
      %c0_27 = arith.constant 0 : index
      %c0_28 = arith.constant 0 : index
      %93 = vector.load %arg5[%c0_27, %c0_28] : memref<16x128xbf16, #tpu.memory_space<vmem>>, vector<16x128xbf16>
      %94 = arith.extf %93 : vector<16x128xbf16> to vector<16x128xf32>
      %c0_29 = arith.constant 0 : index
      %c0_30 = arith.constant 0 : index
      %95 = vector.load %arg6[%c0_29, %c0_30] : memref<16x128xbf16, #tpu.memory_space<vmem>>, vector<16x128xbf16>
      %96 = arith.extf %95 : vector<16x128xbf16> to vector<16x128xf32>
      %97 = tpu.iota {dimensions = array<i32: 1>} : vector<16x128xi32>
      %c1_i32_31 = arith.constant 1 : i32
      %98 = vector.broadcast %c1_i32_31 : i32 to vector<16x128xi32>
      %99 = arith.addi %97, %98 : vector<16x128xi32>
      %c2_i32 = arith.constant 2 : i32
      %c0_i32_32 = arith.constant 0 : i32
      %100 = arith.cmpi eq, %c2_i32, %c0_i32_32 : i32
      %c1_i32_33 = arith.constant 1 : i32
      %101 = arith.select %100, %c1_i32_33, %c2_i32 : i32
      %102 = vector.broadcast %101 : i32 to vector<16x128xi32>
      %103 = arith.remsi %97, %102 : vector<16x128xi32>
      %c0_i32_34 = arith.constant 0 : i32
      %104 = vector.broadcast %c0_i32_34 : i32 to vector<16x128xi32>
      %105 = arith.cmpi ne, %103, %104 : vector<16x128xi32>
      %c0_i32_35 = arith.constant 0 : i32
      %106 = vector.broadcast %c0_i32_35 : i32 to vector<16x128xi32>
      %107 = arith.cmpi slt, %103, %106 : vector<16x128xi32>
      %c0_i32_36 = arith.constant 0 : i32
      %108 = arith.cmpi slt, %101, %c0_i32_36 : i32
      %109 = vector.broadcast %108 : i1 to vector<16x128xi1>
      %110 = vector.broadcast %109 : vector<16x128xi1> to vector<16x128xi1>
      %111 = arith.xori %107, %110 : vector<16x128xi1>
      %112 = arith.andi %111, %105 : vector<16x128xi1>
      %113 = vector.broadcast %101 : i32 to vector<16x128xi32>
      %114 = arith.addi %103, %113 : vector<16x128xi32>
      %115 = arith.select %112, %114, %103 : vector<16x128xi1>, vector<16x128xi32>
      %c2_i32_37 = arith.constant 2 : i32
      %116 = vector.broadcast %c2_i32_37 : i32 to vector<16x128xi32>
      %117 = arith.muli %116, %115 : vector<16x128xi32>
      %118 = arith.subi %99, %117 : vector<16x128xi32>
      %c1_i32_38 = arith.constant 1 : i32
      %119 = tpu.dynamic_rotate %97 by %c1_i32_38 dim 1 : vector<16x128xi32>, i32 -> vector<16x128xi32>
      %120 = arith.cmpi eq, %119, %118 : vector<16x128xi32>
      %121 = arith.mulf %68, %94 : vector<16x128xf32>
      %c1_i32_39 = arith.constant 1 : i32
      %122 = tpu.dynamic_rotate %68 by %c1_i32_39 dim 1 : vector<16x128xf32>, i32 -> vector<16x128xf32>
      %c127_i32 = arith.constant 127 : i32
      %123 = tpu.dynamic_rotate %68 by %c127_i32 dim 1 : vector<16x128xf32>, i32 -> vector<16x128xf32>
      %124 = arith.select %120, %122, %123 : vector<16x128xi1>, vector<16x128xf32>
      %125 = arith.mulf %124, %96 : vector<16x128xf32>
      %126 = arith.addf %121, %125 : vector<16x128xf32>
      %127 = arith.mulf %91, %94 : vector<16x128xf32>
      %c1_i32_40 = arith.constant 1 : i32
      %128 = tpu.dynamic_rotate %91 by %c1_i32_40 dim 1 : vector<16x128xf32>, i32 -> vector<16x128xf32>
      %c127_i32_41 = arith.constant 127 : i32
      %129 = tpu.dynamic_rotate %91 by %c127_i32_41 dim 1 : vector<16x128xf32>, i32 -> vector<16x128xf32>
      %130 = arith.select %120, %128, %129 : vector<16x128xi1>, vector<16x128xf32>
      %131 = arith.mulf %130, %96 : vector<16x128xf32>
      %132 = arith.addf %127, %131 : vector<16x128xf32>
      %cst_42 = arith.constant 0.176776692 : f32
      %133 = vector.broadcast %cst_42 : f32 to vector<16x128xf32>
      %134 = arith.mulf %126, %133 : vector<16x128xf32>
      %135 = arith.truncf %134 : vector<16x128xf32> to vector<16x128xbf16>
      %136 = arith.index_cast %1 : i32 to index
      %c0_43 = arith.constant 0 : index
      %137 = vector.load %arg13[%136, %c0_43] : memref<32x128xbf16, #tpu.memory_space<vmem>>, vector<16x128xbf16>
      tpu.vector_store %arg13[%136, %c0_43], %135 {strides = array<i32>} : memref<32x128xbf16, #tpu.memory_space<vmem>>, vector<16x128xbf16>,
      %138 = arith.truncf %132 : vector<16x128xf32> to vector<16x128xbf16>
      %139 = arith.index_cast %1 : i32 to index
      %c0_44 = arith.constant 0 : index
      %140 = vector.load %arg14[%139, %c0_44] : memref<32x128xbf16, #tpu.memory_space<vmem>>, vector<16x128xbf16>
      tpu.vector_store %arg14[%139, %c0_44], %138 {strides = array<i32>} : memref<32x128xbf16, #tpu.memory_space<vmem>>, vector<16x128xbf16>,
      %141 = arith.truncf %92 : vector<16x128xf32> to vector<16x128xbf16>
      %142 = arith.index_cast %1 : i32 to index
      %c0_45 = arith.constant 0 : index
      %143 = vector.load %arg15[%142, %c0_45] : memref<32x128xbf16, #tpu.memory_space<vmem>>, vector<16x128xbf16>
      tpu.vector_store %arg15[%142, %c0_45], %141 {strides = array<i32>} : memref<32x128xbf16, #tpu.memory_space<vmem>>, vector<16x128xbf16>,
    } else {
    }
    %c1_i32 = arith.constant 1 : i32
    %8 = arith.cmpi eq, %arg1, %c1_i32 : i32
    %9 = arith.extui %8 : i1 to i32
    %c0_i32_5 = arith.constant 0 : i32
    %10 = arith.cmpi ne, %9, %c0_i32_5 : i32
    scf.if %10 {
      %11 = vector.extract_strided_slice %3 {offsets = [2, 0], sizes = [1, 128], strides = [1, 1]} : vector<6x128xf32> to vector<1x128xf32>
      %12 = vector.extract_strided_slice %3 {offsets = [3, 0], sizes = [1, 128], strides = [1, 1]} : vector<6x128xf32> to vector<1x128xf32>
      %13 = vector.extract_strided_slice %3 {offsets = [4, 0], sizes = [1, 128], strides = [1, 1]} : vector<6x128xf32> to vector<1x128xf32>
      %14 = vector.extract_strided_slice %3 {offsets = [5, 0], sizes = [1, 128], strides = [1, 1]} : vector<6x128xf32> to vector<1x128xf32>
      %c0_6 = arith.constant 0 : index
      %c0_7 = arith.constant 0 : index
      %c0_8 = arith.constant 0 : index
      %15 = vector.load %arg3[%c0_6, %c0_7, %c0_8] : memref<1x16x128xf32, #tpu.memory_space<vmem>>, vector<1x16x128xf32>
      %16 = vector.shape_cast %15 : vector<1x16x128xf32> to vector<16x128xf32>
      %17 = arith.index_cast %1 : i32 to index
      %c0_9 = arith.constant 0 : index
      %18 = vector.load %arg13[%17, %c0_9] : memref<32x128xbf16, #tpu.memory_space<vmem>>, vector<16x128xbf16>
      %19 = vector.extract_strided_slice %18 {offsets = [0, 0], sizes = [16, 32], strides = [1, 1]} : vector<16x128xbf16> to vector<16x32xbf16>
      %c0_10 = arith.constant 0 : index
      %c0_11 = arith.constant 0 : index
      %20 = vector.load %arg14[%c0_10, %c0_11] : memref<32x128xbf16, #tpu.memory_space<vmem>>, vector<32x32xbf16>
      %cst = arith.constant dense<0.000000e+00> : vector<16x32xf32>
      %21 = tpu.matmul %19, %20, %cst {dimension_numbers = #tpu.dot_dimension_numbers<[1], [1], [0], [0], [0, 0, 1, 0], [], []>} : vector<16x32xbf16>, vector<32x32xbf16>, vector<16x32xf32> -> vector<16x32xf32>
      %cst_12 = arith.constant dense<0xFF800000> : vector<16xf32>
      %22 = vector.multi_reduction <maximumf>, %21, %cst_12 [1] : vector<16x32xf32> to vector<16xf32>
      %23 = vector.shape_cast %22 : vector<16xf32> to vector<16x1xf32>
      %24 = vector.broadcast %23 : vector<16x1xf32> to vector<16x32xf32>
      %25 = arith.subf %21, %24 : vector<16x32xf32>
      %26 = math.exp %25 : vector<16x32xf32>
      %cst_13 = arith.constant dense<0.000000e+00> : vector<16xf32>
      %27 = vector.multi_reduction <add>, %26, %cst_13 [1] : vector<16x32xf32> to vector<16xf32>
      %28 = vector.shape_cast %27 : vector<16xf32> to vector<16x1xf32>
      %29 = arith.truncf %26 : vector<16x32xf32> to vector<16x32xbf16>
      %c0_14 = arith.constant 0 : index
      %c0_15 = arith.constant 0 : index
      %30 = vector.load %arg15[%c0_14, %c0_15] : memref<32x128xbf16, #tpu.memory_space<vmem>>, vector<32x32xbf16>
      %cst_16 = arith.constant dense<0.000000e+00> : vector<16x32xf32>
      %31 = tpu.matmul %29, %30, %cst_16 {dimension_numbers = #tpu.dot_dimension_numbers<[1], [0], [0], [1], [0, 0, 1, 1], [], []>} : vector<16x32xbf16>, vector<32x32xbf16>, vector<16x32xf32> -> vector<16x32xf32>
      %32 = tpu.reciprocal %28 {approx = true} : vector<16x1xf32> -> vector<16x1xf32>
      %33 = vector.broadcast %32 : vector<16x1xf32> to vector<16x32xf32>
      %34 = arith.mulf %31, %33 : vector<16x32xf32>
      %35 = arith.truncf %34 : vector<16x32xf32> to vector<16x32xbf16>
      %c0_17 = arith.constant 0 : index
      %c0_18 = arith.constant 0 : index
      %36 = vector.load %arg16[%c0_17, %c0_18] : memref<16x128xbf16, #tpu.memory_space<vmem>>, vector<16x32xbf16>
      tpu.vector_store %arg16[%c0_17, %c0_18], %35 {strides = array<i32>} : memref<16x128xbf16, #tpu.memory_space<vmem>>, vector<16x32xbf16>,
      %37 = vector.extract_strided_slice %18 {offsets = [0, 32], sizes = [16, 32], strides = [1, 1]} : vector<16x128xbf16> to vector<16x32xbf16>
      %c0_19 = arith.constant 0 : index
      %c32 = arith.constant 32 : index
      %38 = vector.load %arg14[%c0_19, %c32] : memref<32x128xbf16, #tpu.memory_space<vmem>>, vector<32x32xbf16>
      %cst_20 = arith.constant dense<0.000000e+00> : vector<16x32xf32>
      %39 = tpu.matmul %37, %38, %cst_20 {dimension_numbers = #tpu.dot_dimension_numbers<[1], [1], [0], [0], [0, 0, 1, 0], [], []>} : vector<16x32xbf16>, vector<32x32xbf16>, vector<16x32xf32> -> vector<16x32xf32>
      %cst_21 = arith.constant dense<0xFF800000> : vector<16xf32>
      %40 = vector.multi_reduction <maximumf>, %39, %cst_21 [1] : vector<16x32xf32> to vector<16xf32>
      %41 = vector.shape_cast %40 : vector<16xf32> to vector<16x1xf32>
      %42 = vector.broadcast %41 : vector<16x1xf32> to vector<16x32xf32>
      %43 = arith.subf %39, %42 : vector<16x32xf32>
      %44 = math.exp %43 : vector<16x32xf32>
      %cst_22 = arith.constant dense<0.000000e+00> : vector<16xf32>
      %45 = vector.multi_reduction <add>, %44, %cst_22 [1] : vector<16x32xf32> to vector<16xf32>
      %46 = vector.shape_cast %45 : vector<16xf32> to vector<16x1xf32>
      %47 = arith.truncf %44 : vector<16x32xf32> to vector<16x32xbf16>
      %c0_23 = arith.constant 0 : index
      %c32_24 = arith.constant 32 : index
      %48 = vector.load %arg15[%c0_23, %c32_24] : memref<32x128xbf16, #tpu.memory_space<vmem>>, vector<32x32xbf16>
      %cst_25 = arith.constant dense<0.000000e+00> : vector<16x32xf32>
      %49 = tpu.matmul %47, %48, %cst_25 {dimension_numbers = #tpu.dot_dimension_numbers<[1], [0], [0], [1], [0, 0, 1, 1], [], []>} : vector<16x32xbf16>, vector<32x32xbf16>, vector<16x32xf32> -> vector<16x32xf32>
      %50 = tpu.reciprocal %46 {approx = true} : vector<16x1xf32> -> vector<16x1xf32>
      %51 = vector.broadcast %50 : vector<16x1xf32> to vector<16x32xf32>
      %52 = arith.mulf %49, %51 : vector<16x32xf32>
      %53 = arith.truncf %52 : vector<16x32xf32> to vector<16x32xbf16>
      %c0_26 = arith.constant 0 : index
      %c32_27 = arith.constant 32 : index
      %54 = vector.load %arg16[%c0_26, %c32_27] : memref<16x128xbf16, #tpu.memory_space<vmem>>, vector<16x32xbf16>
      tpu.vector_store %arg16[%c0_26, %c32_27], %53 {strides = array<i32>} : memref<16x128xbf16, #tpu.memory_space<vmem>>, vector<16x32xbf16>,
      %55 = vector.extract_strided_slice %18 {offsets = [0, 64], sizes = [16, 32], strides = [1, 1]} : vector<16x128xbf16> to vector<16x32xbf16>
      %c0_28 = arith.constant 0 : index
      %c64 = arith.constant 64 : index
      %56 = vector.load %arg14[%c0_28, %c64] : memref<32x128xbf16, #tpu.memory_space<vmem>>, vector<32x32xbf16>
      %cst_29 = arith.constant dense<0.000000e+00> : vector<16x32xf32>
      %57 = tpu.matmul %55, %56, %cst_29 {dimension_numbers = #tpu.dot_dimension_numbers<[1], [1], [0], [0], [0, 0, 1, 0], [], []>} : vector<16x32xbf16>, vector<32x32xbf16>, vector<16x32xf32> -> vector<16x32xf32>
      %cst_30 = arith.constant dense<0xFF800000> : vector<16xf32>
      %58 = vector.multi_reduction <maximumf>, %57, %cst_30 [1] : vector<16x32xf32> to vector<16xf32>
      %59 = vector.shape_cast %58 : vector<16xf32> to vector<16x1xf32>
      %60 = vector.broadcast %59 : vector<16x1xf32> to vector<16x32xf32>
      %61 = arith.subf %57, %60 : vector<16x32xf32>
      %62 = math.exp %61 : vector<16x32xf32>
      %cst_31 = arith.constant dense<0.000000e+00> : vector<16xf32>
      %63 = vector.multi_reduction <add>, %62, %cst_31 [1] : vector<16x32xf32> to vector<16xf32>
      %64 = vector.shape_cast %63 : vector<16xf32> to vector<16x1xf32>
      %65 = arith.truncf %62 : vector<16x32xf32> to vector<16x32xbf16>
      %c0_32 = arith.constant 0 : index
      %c64_33 = arith.constant 64 : index
      %66 = vector.load %arg15[%c0_32, %c64_33] : memref<32x128xbf16, #tpu.memory_space<vmem>>, vector<32x32xbf16>
      %cst_34 = arith.constant dense<0.000000e+00> : vector<16x32xf32>
      %67 = tpu.matmul %65, %66, %cst_34 {dimension_numbers = #tpu.dot_dimension_numbers<[1], [0], [0], [1], [0, 0, 1, 1], [], []>} : vector<16x32xbf16>, vector<32x32xbf16>, vector<16x32xf32> -> vector<16x32xf32>
      %68 = tpu.reciprocal %64 {approx = true} : vector<16x1xf32> -> vector<16x1xf32>
      %69 = vector.broadcast %68 : vector<16x1xf32> to vector<16x32xf32>
      %70 = arith.mulf %67, %69 : vector<16x32xf32>
      %71 = arith.truncf %70 : vector<16x32xf32> to vector<16x32xbf16>
      %c0_35 = arith.constant 0 : index
      %c64_36 = arith.constant 64 : index
      %72 = vector.load %arg16[%c0_35, %c64_36] : memref<16x128xbf16, #tpu.memory_space<vmem>>, vector<16x32xbf16>
      tpu.vector_store %arg16[%c0_35, %c64_36], %71 {strides = array<i32>} : memref<16x128xbf16, #tpu.memory_space<vmem>>, vector<16x32xbf16>,
      %73 = vector.extract_strided_slice %18 {offsets = [0, 96], sizes = [16, 32], strides = [1, 1]} : vector<16x128xbf16> to vector<16x32xbf16>
      %c0_37 = arith.constant 0 : index
      %c96 = arith.constant 96 : index
      %74 = vector.load %arg14[%c0_37, %c96] : memref<32x128xbf16, #tpu.memory_space<vmem>>, vector<32x32xbf16>
      %cst_38 = arith.constant dense<0.000000e+00> : vector<16x32xf32>
      %75 = tpu.matmul %73, %74, %cst_38 {dimension_numbers = #tpu.dot_dimension_numbers<[1], [1], [0], [0], [0, 0, 1, 0], [], []>} : vector<16x32xbf16>, vector<32x32xbf16>, vector<16x32xf32> -> vector<16x32xf32>
      %cst_39 = arith.constant dense<0xFF800000> : vector<16xf32>
      %76 = vector.multi_reduction <maximumf>, %75, %cst_39 [1] : vector<16x32xf32> to vector<16xf32>
      %77 = vector.shape_cast %76 : vector<16xf32> to vector<16x1xf32>
      %78 = vector.broadcast %77 : vector<16x1xf32> to vector<16x32xf32>
      %79 = arith.subf %75, %78 : vector<16x32xf32>
      %80 = math.exp %79 : vector<16x32xf32>
      %cst_40 = arith.constant dense<0.000000e+00> : vector<16xf32>
      %81 = vector.multi_reduction <add>, %80, %cst_40 [1] : vector<16x32xf32> to vector<16xf32>
      %82 = vector.shape_cast %81 : vector<16xf32> to vector<16x1xf32>
      %83 = arith.truncf %80 : vector<16x32xf32> to vector<16x32xbf16>
      %c0_41 = arith.constant 0 : index
      %c96_42 = arith.constant 96 : index
      %84 = vector.load %arg15[%c0_41, %c96_42] : memref<32x128xbf16, #tpu.memory_space<vmem>>, vector<32x32xbf16>
      %cst_43 = arith.constant dense<0.000000e+00> : vector<16x32xf32>
      %85 = tpu.matmul %83, %84, %cst_43 {dimension_numbers = #tpu.dot_dimension_numbers<[1], [0], [0], [1], [0, 0, 1, 1], [], []>} : vector<16x32xbf16>, vector<32x32xbf16>, vector<16x32xf32> -> vector<16x32xf32>
      %86 = tpu.reciprocal %82 {approx = true} : vector<16x1xf32> -> vector<16x1xf32>
      %87 = vector.broadcast %86 : vector<16x1xf32> to vector<16x32xf32>
      %88 = arith.mulf %85, %87 : vector<16x32xf32>
      %89 = arith.truncf %88 : vector<16x32xf32> to vector<16x32xbf16>
      %c0_44 = arith.constant 0 : index
      %c96_45 = arith.constant 96 : index
      %90 = vector.load %arg16[%c0_44, %c96_45] : memref<16x128xbf16, #tpu.memory_space<vmem>>, vector<16x32xbf16>
      tpu.vector_store %arg16[%c0_44, %c96_45], %89 {strides = array<i32>} : memref<16x128xbf16, #tpu.memory_space<vmem>>, vector<16x32xbf16>,
      %c0_46 = arith.constant 0 : index
      %c0_47 = arith.constant 0 : index
      %91 = vector.load %arg16[%c0_46, %c0_47] : memref<16x128xbf16, #tpu.memory_space<vmem>>, vector<16x128xbf16>
      %c0_48 = arith.constant 0 : index
      %c0_49 = arith.constant 0 : index
      %92 = vector.load %arg8[%c0_48, %c0_49] : memref<128x128xbf16, #tpu.memory_space<vmem>>, vector<128x128xbf16>
      %cst_50 = arith.constant dense<0.000000e+00> : vector<16x128xf32>
      %93 = tpu.matmul %91, %92, %cst_50 {dimension_numbers = #tpu.dot_dimension_numbers<[1], [0], [0], [1], [0, 0, 1, 1], [], []>} : vector<16x128xbf16>, vector<128x128xbf16>, vector<16x128xf32> -> vector<16x128xf32>
      %94 = vector.broadcast %11 : vector<1x128xf32> to vector<16x128xf32>
      %95 = arith.mulf %94, %93 : vector<16x128xf32>
      %96 = arith.addf %16, %95 : vector<16x128xf32>
      %97 = vector.extract_strided_slice %4 {offsets = [6, 0], sizes = [1, 128], strides = [1, 1]} : vector<8x128xf32> to vector<1x128xf32>
      %98 = vector.extract_strided_slice %4 {offsets = [7, 0], sizes = [1, 128], strides = [1, 1]} : vector<8x128xf32> to vector<1x128xf32>
      %cst_51 = arith.constant dense<0.000000e+00> : vector<16xf32>
      %99 = vector.multi_reduction <add>, %96, %cst_51 [1] : vector<16x128xf32> to vector<16xf32>
      %100 = vector.shape_cast %99 : vector<16xf32> to vector<16x1xf32>
      %cst_52 = arith.constant 1.280000e+02 : f32
      %101 = vector.broadcast %cst_52 : f32 to vector<16x1xf32>
      %102 = arith.divf %100, %101 : vector<16x1xf32>
      %103 = vector.broadcast %102 : vector<16x1xf32> to vector<16x128xf32>
      %104 = arith.subf %96, %103 : vector<16x128xf32>
      %105 = arith.mulf %104, %104 : vector<16x128xf32>
      %cst_53 = arith.constant dense<0.000000e+00> : vector<16xf32>
      %106 = vector.multi_reduction <add>, %105, %cst_53 [1] : vector<16x128xf32> to vector<16xf32>
      %107 = vector.shape_cast %106 : vector<16xf32> to vector<16x1xf32>
      %cst_54 = arith.constant 1.280000e+02 : f32
      %108 = vector.broadcast %cst_54 : f32 to vector<16x1xf32>
      %109 = arith.divf %107, %108 : vector<16x1xf32>
      %cst_55 = arith.constant 9.99999974E-6 : f32
      %110 = vector.broadcast %cst_55 : f32 to vector<16x1xf32>
      %111 = arith.addf %109, %110 : vector<16x1xf32>
      %112 = math.rsqrt %111 : vector<16x1xf32>
      %113 = vector.broadcast %112 : vector<16x1xf32> to vector<16x128xf32>
      %114 = arith.mulf %104, %113 : vector<16x128xf32>
      %115 = vector.broadcast %97 : vector<1x128xf32> to vector<16x128xf32>
      %116 = arith.mulf %114, %115 : vector<16x128xf32>
      %117 = vector.broadcast %98 : vector<1x128xf32> to vector<16x128xf32>
      %118 = arith.addf %116, %117 : vector<16x128xf32>
      %cst_56 = arith.constant 1.000000e+00 : f32
      %119 = vector.broadcast %cst_56 : f32 to vector<1x128xf32>
      %120 = arith.addf %119, %13 : vector<1x128xf32>
      %121 = vector.broadcast %120 : vector<1x128xf32> to vector<16x128xf32>
      %122 = arith.mulf %118, %121 : vector<16x128xf32>
      %123 = vector.broadcast %12 : vector<1x128xf32> to vector<16x128xf32>
      %124 = arith.addf %122, %123 : vector<16x128xf32>
      %125 = arith.truncf %124 : vector<16x128xf32> to vector<16x128xbf16>
      %c0_57 = arith.constant 0 : index
      %c0_58 = arith.constant 0 : index
      %126 = vector.load %arg9[%c0_57, %c0_58] : memref<128x1024xbf16, #tpu.memory_space<vmem>>, vector<128x1024xbf16>
      %cst_59 = arith.constant dense<0.000000e+00> : vector<16x1024xf32>
      %127 = tpu.matmul %125, %126, %cst_59 {dimension_numbers = #tpu.dot_dimension_numbers<[1], [0], [0], [1], [0, 0, 1, 1], [], []>} : vector<16x128xbf16>, vector<128x1024xbf16>, vector<16x1024xf32> -> vector<16x1024xf32>
      %128 = vector.extract_strided_slice %127 {offsets = [0, 0], sizes = [16, 512], strides = [1, 1]} : vector<16x1024xf32> to vector<16x512xf32>
      %129 = arith.negf %128 : vector<16x512xf32>
      %130 = math.exp %129 : vector<16x512xf32>
      %cst_60 = arith.constant 1.000000e+00 : f32
      %131 = vector.broadcast %cst_60 : f32 to vector<16x512xf32>
      %132 = arith.addf %131, %130 : vector<16x512xf32>
      %133 = arith.divf %131, %132 : vector<16x512xf32>
      %134 = arith.mulf %128, %133 : vector<16x512xf32>
      %135 = vector.extract_strided_slice %127 {offsets = [0, 512], sizes = [16, 512], strides = [1, 1]} : vector<16x1024xf32> to vector<16x512xf32>
      %136 = arith.mulf %134, %135 : vector<16x512xf32>
      %137 = arith.truncf %136 : vector<16x512xf32> to vector<16x512xbf16>
      %c0_61 = arith.constant 0 : index
      %c0_62 = arith.constant 0 : index
      %138 = vector.load %arg10[%c0_61, %c0_62] : memref<512x128xbf16, #tpu.memory_space<vmem>>, vector<512x128xbf16>
      %cst_63 = arith.constant dense<0.000000e+00> : vector<16x128xf32>
      %139 = tpu.matmul %137, %138, %cst_63 {dimension_numbers = #tpu.dot_dimension_numbers<[1], [0], [0], [1], [0, 0, 1, 1], [], []>} : vector<16x512xbf16>, vector<512x128xbf16>, vector<16x128xf32> -> vector<16x128xf32>
      %140 = vector.broadcast %14 : vector<1x128xf32> to vector<16x128xf32>
      %141 = arith.mulf %140, %139 : vector<16x128xf32>
      %142 = arith.addf %96, %141 : vector<16x128xf32>
      %c0_64 = arith.constant 0 : index
      %c0_65 = arith.constant 0 : index
      %c0_66 = arith.constant 0 : index
      %143 = vector.load %arg12[%c0_64, %c0_65, %c0_66] : memref<1x16x128xf32, #tpu.memory_space<vmem>>, vector<1x16x128xf32>
      %144 = vector.shape_cast %143 : vector<1x16x128xf32> to vector<16x128xf32>
      %145 = vector.shape_cast %142 : vector<16x128xf32> to vector<1x16x128xf32>
      tpu.vector_store %arg12[%c0_64, %c0_65, %c0_66], %145 {strides = array<i32>} : memref<1x16x128xf32, #tpu.memory_space<vmem>>, vector<1x16x128xf32>,
    } else {
    }
    return
  }
  func.func @transform_0(%arg0: i32, %arg1: i32, %arg2: i32) -> (i32, i32, i32) {
    %c0_i32 = arith.constant 0 : i32
    %c0_i32_0 = arith.constant 0 : i32
    return %arg0, %arg2, %c0_i32 : i32, i32, i32
  }
  func.func @transform_1(%arg0: i32, %arg1: i32, %arg2: i32) -> (i32, i32, i32) {
    %c0_i32 = arith.constant 0 : i32
    %c0_i32_0 = arith.constant 0 : i32
    %c0_i32_1 = arith.constant 0 : i32
    return %arg0, %c0_i32, %c0_i32_0 : i32, i32, i32
  }
  func.func @transform_2(%arg0: i32, %arg1: i32, %arg2: i32) -> (i32, i32) {
    %c1_i32 = arith.constant 1 : i32
    %0 = arith.subi %c1_i32, %arg1 : i32
    %1 = arith.muli %arg2, %0 : i32
    %c0_i32 = arith.constant 0 : i32
    %c0_i32_0 = arith.constant 0 : i32
    return %1, %c0_i32 : i32, i32
  }
  func.func @transform_3(%arg0: i32, %arg1: i32, %arg2: i32) -> (i32, i32) {
    %c1_i32 = arith.constant 1 : i32
    %0 = arith.subi %c1_i32, %arg1 : i32
    %1 = arith.muli %arg2, %0 : i32
    %c0_i32 = arith.constant 0 : i32
    %c0_i32_0 = arith.constant 0 : i32
    return %1, %c0_i32 : i32, i32
  }
  func.func @transform_4(%arg0: i32, %arg1: i32, %arg2: i32) -> (i32, i32) {
    %c0_i32 = arith.constant 0 : i32
    %c0_i32_0 = arith.constant 0 : i32
    %c0_i32_1 = arith.constant 0 : i32
    return %c0_i32, %c0_i32_0 : i32, i32
  }
  func.func @transform_5(%arg0: i32, %arg1: i32, %arg2: i32) -> (i32, i32) {
    %c0_i32 = arith.constant 0 : i32
    %c0_i32_0 = arith.constant 0 : i32
    %c0_i32_1 = arith.constant 0 : i32
    return %c0_i32, %c0_i32_0 : i32, i32
  }
  func.func @transform_6(%arg0: i32, %arg1: i32, %arg2: i32) -> (i32, i32) {
    %c0_i32 = arith.constant 0 : i32
    %c0_i32_0 = arith.constant 0 : i32
    %c0_i32_1 = arith.constant 0 : i32
    return %c0_i32, %c0_i32_0 : i32, i32
  }
  func.func @transform_7(%arg0: i32, %arg1: i32, %arg2: i32) -> (i32, i32) {
    %c0_i32 = arith.constant 0 : i32
    %c0_i32_0 = arith.constant 0 : i32
    %c0_i32_1 = arith.constant 0 : i32
    return %c0_i32, %c0_i32_0 : i32, i32
  }
  func.func @transform_8(%arg0: i32, %arg1: i32, %arg2: i32) -> (i32, i32) {
    %c0_i32 = arith.constant 0 : i32
    %c0_i32_0 = arith.constant 0 : i32
    %c0_i32_1 = arith.constant 0 : i32
    return %c0_i32, %c0_i32_0 : i32, i32
  }
  func.func @transform_9(%arg0: i32, %arg1: i32, %arg2: i32) -> (i32, i32, i32) {
    %0 = arith.muli %arg2, %arg1 : i32
    %c0_i32 = arith.constant 0 : i32
    %c0_i32_0 = arith.constant 0 : i32
    return %arg0, %0, %c0_i32 : i32, i32, i32
  }
}

</mosaic_0001>

<llo_original>
// kernel: tpu_custom_call.1
$region0: #{tpu_custom_call.1}
  #allocation0 [shape = 'u32[]', space=smem, size = 0x4, offset = 0x4, fixed_abs, tag = 'smem constant byte address 0x4 - core index']
  #allocation1 [shape = 'u32[72,128]{1,0:T(1,128)}', space=vmem, size = 0x9000, scoped, tag = 'internal scratch']
  #allocation2 [shape = 'bf16[32,128]{1,0:T(8,128)(2,1)}', space=vmem, size = 0x2000, scoped, tag = 'scratch operand']
  #allocation3 [shape = 'bf16[32,128]{1,0:T(8,128)(2,1)}', space=vmem, size = 0x2000, scoped, tag = 'scratch operand']
  #allocation4 [shape = 'bf16[32,128]{1,0:T(8,128)(2,1)}', space=vmem, size = 0x2000, scoped, tag = 'scratch operand']
  #allocation5 [shape = 'bf16[16,128]{1,0:T(8,128)(2,1)}', space=vmem, size = 0x1000, scoped, tag = 'scratch operand']
  %s0 = inlined_call_operand.hbm [shape: f32[2,32,128], index: 0, kind: input, shape index: {}]
  %s1 = inlined_call_operand.vmem [shape: f32[2,6,128], index: 1, kind: input, shape index: {}]
  %s2 = inlined_call_operand.vmem [shape: bf16[32,128], index: 2, kind: input, shape index: {}]
  %s3 = inlined_call_operand.hbm [shape: bf16[32,128], index: 3, kind: input, shape index: {}]
  %s4 = inlined_call_operand.hbm [shape: bf16[128,384], index: 4, kind: input, shape index: {}]
  %s5 = inlined_call_operand.hbm [shape: bf16[128,128], index: 5, kind: input, shape index: {}]
  %s6 = inlined_call_operand.hbm [shape: bf16[128,1024], index: 6, kind: input, shape index: {}]
  %s7 = inlined_call_operand.hbm [shape: bf16[512,128], index: 7, kind: input, shape index: {}]
  %s8 = inlined_call_operand.vmem [shape: f32[8,128], index: 8, kind: input, shape index: {}]
  %s9 = inlined_call_operand.hbm [shape: f32[2,32,128], index: 9, kind: output, shape index: {}]
  %s10 = sld [smem:[#allocation0]]
  $region101: #{tpu_custom_call.1} parent=0
    _
  %s12 = ssub.s32 1, %s10
  %s13 = scalar_select 0, %s12, %s10
  $region1: #{tpu_custom_call.1} parent=0
    #allocation6 [shape = 'u8[16384]{0}', space=vmem, size = 0x4000, scoped, tag = 'input window, operand 0']
    #allocation7 [shape = 's32[2]{0}', space=sflag, size = 0x8, scoped, tag = 'scoped memory for tpu_custom_call.1']
    #allocation8 [shape = 's32[2]{0}', space=sflag, size = 0x8, scoped, tag = 'scoped memory for tpu_custom_call.1']
    #allocation9 [shape = 'u8[8192]{0}', space=vmem, size = 0x2000, scoped, tag = 'input window, operand 3']
    #allocation10 [shape = 's32[2]{0}', space=sflag, size = 0x8, scoped, tag = 'scoped memory for tpu_custom_call.1']
    #allocation11 [shape = 'u8[98304]{0}', space=vmem, size = 0x18000, scoped, tag = 'input window, operand 4, single buffered']
    #allocation12 [shape = 'u8[32768]{0}', space=vmem, size = 0x8000, scoped, tag = 'input window, operand 5, single buffered']
    #allocation13 [shape = 's32[1]{0}', space=sflag, size = 0x4, scoped, tag = 'scoped memory for tpu_custom_call.1']
    #allocation14 [shape = 'u8[262144]{0}', space=vmem, size = 0x40000, scoped, tag = 'input window, operand 6, single buffered']
    #allocation15 [shape = 'u8[131072]{0}', space=vmem, size = 0x20000, scoped, tag = 'input window, operand 7, single buffered']
    #allocation16 [shape = 's32[1]{0}', space=sflag, size = 0x4, scoped, tag = 'scoped memory for tpu_custom_call.1']
    #allocation17 [shape = 'u8[16384]{0}', space=vmem, size = 0x4000, scoped, tag = 'output window, operand 0']
    %14 = vsyncpa [#allocation7], 0
    %s15 = scalar_lea.sflag [#allocation7], 1
    %16 = vsyncpa %s15, 0
    %17 = vsyncpa [#allocation10], 0
    %s18 = scalar_lea.sflag [#allocation10], 1
    %19 = vsyncpa %s18, 0
    %20 = vsyncpa [#allocation13], 0
    %21 = vsyncpa [#allocation16], 0
    %22 = vsyncpa [#allocation8], 0
    %s23 = scalar_lea.sflag [#allocation8], 1
    %24 = vsyncpa %s23, 0
    loop: start=0, step=1, limit=10
    $region2: #{tpu_custom_call.1} parent=1 // loop_pre_header
      _
    $region3: #{tpu_custom_call.1} parent=1 // loop_header
      %s26 = sphi 0, %s30
      %p27 = scmp.ge.s32.totalorder %s26, 10
      %s33 = sphi 0, %s52
      %s34 = sphi 0, %s48
      %s35 = sphi 0, %s44
      %s36 = sphi 0, %s33
      %s37 = sphi 0, %s34
      %s38 = sphi 0, %s35
      %s39 = sphi 0, %s36
      %s40 = sphi 0, %s37
      %s41 = sphi 0, %s38
      %s57 = sphi 0, %s59
      %s60 = sphi 0, %s57
      %s61 = sphi 0, %s60
      %s77 = sphi 0, %s61
      %s83 = sphi 0, %s85
      %s86 = sphi 0, %s83
      %s87 = sphi 0, %s86
      %s103 = sphi 0, %s87
      %s113 = sphi 0, %s115
      %s116 = sphi 0, %s113
      %s117 = sphi 0, %s116
      %s133 = sphi 0, %s117
      %s143 = sphi 0, %s145
      %s146 = sphi 0, %s143
      %s147 = sphi 0, %s146
      %s163 = sphi 0, %s147
      %s167 = sphi 0, %s167
      %s169 = sphi 0, %s167
      %s170 = sphi 0, %s169
      %s184 = sphi 0, %s170
      %s188 = sphi 0, %s188
      %s190 = sphi 0, %s188
      %s191 = sphi 0, %s190
      %s205 = sphi 0, %s191
      %s209 = sphi 0, %s209
      %s211 = sphi 0, %s209
      %s212 = sphi 0, %s211
      %s226 = sphi 0, %s212
      %s230 = sphi 0, %s230
      %s232 = sphi 0, %s230
      %s233 = sphi 0, %s232
      %s247 = sphi 0, %s233
      %s251 = sphi 0, %s251
      %s253 = sphi 0, %s251
      %s254 = sphi 0, %s253
      %s268 = sphi 0, %s254
      %s278 = sphi 0, %s280
      %s281 = sphi 0, %s278
      %s282 = sphi 0, %s281
      %s298 = sphi 0, %s282
    $region4: #{tpu_custom_call.1} parent=1 // loop_header_branch
      %29 = sbr.rel (%p27) target = $region8
    $region5: #{tpu_custom_call.1} parent=1 // loop_body
      %s31 = ssub.s32 %s26, 1
      %s32 = ssub.s32 %s26, 2
      %s42 = sadd.s32 1, %s35
      %p43 = scmp.ge.s32.totalorder %s42, 2
      %s44 = scalar_select %p43, 0, %s42
      %s45 = sadd.s32 1, %s34
      %s46 = scalar_select %p43, %s45, %s34
      %p47 = scmp.ge.s32.totalorder %s46, 2
      %s48 = scalar_select %p47, 0, %s46
      %s49 = sadd.s32 1, %s33
      %s50 = scalar_select %p47, %s49, %s33
      %p51 = scmp.ge.s32.totalorder %s50, 2
      %s52 = scalar_select %p51, 0, %s50
      %s53 = ssub.s32 %s33, %s52
      %s54 = ssub.s32 %s35, %s44
      %s55 = sor.u32 %s53, %s54
      %p56 = scmp.eq.s32.totalorder %s55, 0
      %s58 = sadd.s32 %s57, 1
      %s59 = scalar_select %p56, %s57, %s58
      %p62 = pneg %p56
      %p63 = scmp.eq.s32.totalorder %s26, 7
      %p64 = por %p62, %p63
      %p65 = scmp.ne.s32.totalorder %s57, %s60
      %p66 = scmp.eq.s32.totalorder %s26, 0
      %p67 = por %p65, %p66
      %p68 = scmp.ne.s32.totalorder %s57, %s60
      %p69 = scmp.eq.s32.totalorder %s31, 7
      %p70 = por %p68, %p69
      %p71 = scmp.ne.s32.totalorder %s60, %s61
      %p72 = scmp.eq.s32.totalorder %s31, 0
      %p73 = por %p71, %p72
      %p74 = scmp.ne.s32.totalorder %s60, %s61
      %p75 = scmp.eq.s32.totalorder %s32, 7
      %p76 = por %p74, %p75
      %p78 = scmp.ne.s32.totalorder %s61, %s77
      %p79 = scmp.eq.s32.totalorder %s32, 0
      %p80 = por %p78, %p79
      %s81 = ssub.s32 %s33, %s52
      %p82 = scmp.eq.s32.totalorder %s81, 0
      %s84 = sadd.s32 %s83, 1
      %s85 = scalar_select %p82, %s83, %s84
      %p88 = pneg %p82
      %p89 = scmp.eq.s32.totalorder %s26, 7
      %p90 = por %p88, %p89
      %p91 = scmp.ne.s32.totalorder %s83, %s86
      %p92 = scmp.eq.s32.totalorder %s26, 0
      %p93 = por %p91, %p92
      %p94 = scmp.ne.s32.totalorder %s83, %s86
      %p95 = scmp.eq.s32.totalorder %s31, 7
      %p96 = por %p94, %p95
      %p97 = scmp.ne.s32.totalorder %s86, %s87
      %p98 = scmp.eq.s32.totalorder %s31, 0
      %p99 = por %p97, %p98
      %p100 = scmp.ne.s32.totalorder %s86, %s87
      %p101 = scmp.eq.s32.totalorder %s32, 7
      %p102 = por %p100, %p101
      %p104 = scmp.ne.s32.totalorder %s87, %s103
      %p105 = scmp.eq.s32.totalorder %s32, 0
      %p106 = por %p104, %p105
      %s107 = ssub.s32 1, %s34
      %s108 = smul.u32 %s35, %s107
      %s109 = ssub.s32 1, %s48
      %s110 = smul.u32 %s44, %s109
      %s111 = ssub.s32 %s108, %s110
      %p112 = scmp.eq.s32.totalorder %s111, 0
      %s114 = sadd.s32 %s113, 1
      %s115 = scalar_select %p112, %s113, %s114
      %p118 = pneg %p112
      %p119 = scmp.eq.s32.totalorder %s26, 7
      %p120 = por %p118, %p119
      %p121 = scmp.ne.s32.totalorder %s113, %s116
      %p122 = scmp.eq.s32.totalorder %s26, 0
      %p123 = por %p121, %p122
      %p124 = scmp.ne.s32.totalorder %s113, %s116
      %p125 = scmp.eq.s32.totalorder %s31, 7
      %p126 = por %p124, %p125
      %p127 = scmp.ne.s32.totalorder %s116, %s117
      %p128 = scmp.eq.s32.totalorder %s31, 0
      %p129 = por %p127, %p128
      %p130 = scmp.ne.s32.totalorder %s116, %s117
      %p131 = scmp.eq.s32.totalorder %s32, 7
      %p132 = por %p130, %p131
      %p134 = scmp.ne.s32.totalorder %s117, %s133
      %p135 = scmp.eq.s32.totalorder %s32, 0
      %p136 = por %p134, %p135
      %s137 = ssub.s32 1, %s34
      %s138 = smul.u32 %s35, %s137
      %s139 = ssub.s32 1, %s48
      %s140 = smul.u32 %s44, %s139
      %s141 = ssub.s32 %s138, %s140
      %p142 = scmp.eq.s32.totalorder %s141, 0
      %s144 = sadd.s32 %s143, 1
      %s145 = scalar_select %p142, %s143, %s144
      %p148 = pneg %p142
      %p149 = scmp.eq.s32.totalorder %s26, 7
      %p150 = por %p148, %p149
      %p151 = scmp.ne.s32.totalorder %s143, %s146
      %p152 = scmp.eq.s32.totalorder %s26, 0
      %p153 = por %p151, %p152
      %p154 = scmp.ne.s32.totalorder %s143, %s146
      %p155 = scmp.eq.s32.totalorder %s31, 7
      %p156 = por %p154, %p155
      %p157 = scmp.ne.s32.totalorder %s146, %s147
      %p158 = scmp.eq.s32.totalorder %s31, 0
      %p159 = por %p157, %p158
      %p160 = scmp.ne.s32.totalorder %s146, %s147
      %p161 = scmp.eq.s32.totalorder %s32, 7
      %p162 = por %p160, %p161
      %p164 = scmp.ne.s32.totalorder %s147, %s163
      %p165 = scmp.eq.s32.totalorder %s32, 0
      %p166 = por %p164, %p165
      %s168 = sadd.s32 %s167, 1
      %p171 = scmp.eq.s32.totalorder %s26, 7
      %p172 = scmp.ne.s32.totalorder %s167, %s169
      %p173 = scmp.eq.s32.totalorder %s26, 0
      %p174 = por %p172, %p173
      %p175 = scmp.ne.s32.totalorder %s167, %s169
      %p176 = scmp.eq.s32.totalorder %s31, 7
      %p177 = por %p175, %p176
      %p178 = scmp.ne.s32.totalorder %s169, %s170
      %p179 = scmp.eq.s32.totalorder %s31, 0
      %p180 = por %p178, %p179
      %p181 = scmp.ne.s32.totalorder %s169, %s170
      %p182 = scmp.eq.s32.totalorder %s32, 7
      %p183 = por %p181, %p182
      %p185 = scmp.ne.s32.totalorder %s170, %s184
      %p186 = scmp.eq.s32.totalorder %s32, 0
      %p187 = por %p185, %p186
      %s189 = sadd.s32 %s188, 1
      %p192 = scmp.eq.s32.totalorder %s26, 7
      %p193 = scmp.ne.s32.totalorder %s188, %s190
      %p194 = scmp.eq.s32.totalorder %s26, 0
      %p195 = por %p193, %p194
      %p196 = scmp.ne.s32.totalorder %s188, %s190
      %p197 = scmp.eq.s32.totalorder %s31, 7
      %p198 = por %p196, %p197
      %p199 = scmp.ne.s32.totalorder %s190, %s191
      %p200 = scmp.eq.s32.totalorder %s31, 0
      %p201 = por %p199, %p200
      %p202 = scmp.ne.s32.totalorder %s190, %s191
      %p203 = scmp.eq.s32.totalorder %s32, 7
      %p204 = por %p202, %p203
      %p206 = scmp.ne.s32.totalorder %s191, %s205
      %p207 = scmp.eq.s32.totalorder %s32, 0
      %p208 = por %p206, %p207
      %s210 = sadd.s32 %s209, 1
      %p213 = scmp.eq.s32.totalorder %s26, 7
      %p214 = scmp.ne.s32.totalorder %s209, %s211
      %p215 = scmp.eq.s32.totalorder %s26, 0
      %p216 = por %p214, %p215
      %p217 = scmp.ne.s32.totalorder %s209, %s211
      %p218 = scmp.eq.s32.totalorder %s31, 7
      %p219 = por %p217, %p218
      %p220 = scmp.ne.s32.totalorder %s211, %s212
      %p221 = scmp.eq.s32.totalorder %s31, 0
      %p222 = por %p220, %p221
      %p223 = scmp.ne.s32.totalorder %s211, %s212
      %p224 = scmp.eq.s32.totalorder %s32, 7
      %p225 = por %p223, %p224
      %p227 = scmp.ne.s32.totalorder %s212, %s226
      %p228 = scmp.eq.s32.totalorder %s32, 0
      %p229 = por %p227, %p228
      %s231 = sadd.s32 %s230, 1
      %p234 = scmp.eq.s32.totalorder %s26, 7
      %p235 = scmp.ne.s32.totalorder %s230, %s232
      %p236 = scmp.eq.s32.totalorder %s26, 0
      %p237 = por %p235, %p236
      %p238 = scmp.ne.s32.totalorder %s230, %s232
      %p239 = scmp.eq.s32.totalorder %s31, 7
      %p240 = por %p238, %p239
      %p241 = scmp.ne.s32.totalorder %s232, %s233
      %p242 = scmp.eq.s32.totalorder %s31, 0
      %p243 = por %p241, %p242
      %p244 = scmp.ne.s32.totalorder %s232, %s233
      %p245 = scmp.eq.s32.totalorder %s32, 7
      %p246 = por %p244, %p245
      %p248 = scmp.ne.s32.totalorder %s233, %s247
      %p249 = scmp.eq.s32.totalorder %s32, 0
      %p250 = por %p248, %p249
      %s252 = sadd.s32 %s251, 1
      %p255 = scmp.eq.s32.totalorder %s26, 7
      %p256 = scmp.ne.s32.totalorder %s251, %s253
      %p257 = scmp.eq.s32.totalorder %s26, 0
      %p258 = por %p256, %p257
      %p259 = scmp.ne.s32.totalorder %s251, %s253
      %p260 = scmp.eq.s32.totalorder %s31, 7
      %p261 = por %p259, %p260
      %p262 = scmp.ne.s32.totalorder %s253, %s254
      %p263 = scmp.eq.s32.totalorder %s31, 0
      %p264 = por %p262, %p263
      %p265 = scmp.ne.s32.totalorder %s253, %s254
      %p266 = scmp.eq.s32.totalorder %s32, 7
      %p267 = por %p265, %p266
      %p269 = scmp.ne.s32.totalorder %s254, %s268
      %p270 = scmp.eq.s32.totalorder %s32, 0
      %p271 = por %p269, %p270
      %s272 = smul.u32 %s35, %s34
      %s273 = smul.u32 %s44, %s48
      %s274 = ssub.s32 %s33, %s52
      %s275 = ssub.s32 %s272, %s273
      %s276 = sor.u32 %s274, %s275
      %p277 = scmp.eq.s32.totalorder %s276, 0
      %s279 = sadd.s32 %s278, 1
      %s280 = scalar_select %p277, %s278, %s279
      %p283 = pneg %p277
      %p284 = scmp.eq.s32.totalorder %s26, 7
      %p285 = por %p283, %p284
      %p286 = scmp.ne.s32.totalorder %s278, %s281
      %p287 = scmp.eq.s32.totalorder %s26, 0
      %p288 = por %p286, %p287
      %p289 = scmp.ne.s32.totalorder %s278, %s281
      %p290 = scmp.eq.s32.totalorder %s31, 7
      %p291 = por %p289, %p290
      %p292 = scmp.ne.s32.totalorder %s281, %s282
      %p293 = scmp.eq.s32.totalorder %s31, 0
      %p294 = por %p292, %p293
      %p295 = scmp.ne.s32.totalorder %s281, %s282
      %p296 = scmp.eq.s32.totalorder %s32, 7
      %p297 = por %p295, %p296
      %p299 = scmp.ne.s32.totalorder %s282, %s298
      %p300 = scmp.eq.s32.totalorder %s32, 0
      %p301 = por %p299, %p300
      %p302 = scmp.le.s32.totalorder 1, %s26
      %p303 = scmp.lt.s32.totalorder %s26, 9
      %p304 = pnand %p302, %p303
      %p305 = pneg %p304
      // Predicated region
      $region9: #{tpu_custom_call.1} parent=5 // pred_check
        _
      $region10: #{tpu_custom_call.1} parent=5 // pred_check_branch
        %307 = sbr.rel (%p304) target = $region12
      $region11: #{tpu_custom_call.1} parent=5 // pred_region
        %s308 = ssub.s32 %s26, 1
        // Predicated region
        $region13: #{tpu_custom_call.1} parent=11 // pred_check
          %p309 = pneg %p180
        $region14: #{tpu_custom_call.1} parent=11 // pred_check_branch
          %311 = sbr.rel (%p309) target = $region16
        $region15: #{tpu_custom_call.1} parent=11 // pred_region
          %313 = vsyncadd [#allocation10], 0
          %s314 = sshll.u32 %s4, 4
          %s315 = int_to_ptr.hbm [resolvable:$true] %s314
          %s316 = sshll.u32 [#allocation11], 4
          %s317 = int_to_ptr.vmem [resolvable:$true] %s316
          %322 = dma.hbm_to_vmem [thread:$0]  %s315, 3072, %s317, [#allocation10], 192, 192, 12
        $region16: #{tpu_custom_call.1} parent=11 // pred_fallthru
          _
        // Predicated region
        $region17: #{tpu_custom_call.1} parent=11 // pred_check
          %p323 = pneg %p201
        $region18: #{tpu_custom_call.1} parent=11 // pred_check_branch
          %325 = sbr.rel (%p323) target = $region20
        $region19: #{tpu_custom_call.1} parent=11 // pred_region
          %327 = vsyncadd [#allocation13], 0
          %s328 = sshll.u32 %s5, 4
          %s329 = int_to_ptr.hbm [resolvable:$true] %s328
          %s330 = sshll.u32 [#allocation12], 4
          %s331 = int_to_ptr.vmem [resolvable:$true] %s330
          %336 = dma.hbm_to_vmem [thread:$0]  %s329, 1024, %s331, [#allocation13], 64, 64, 4
        $region20: #{tpu_custom_call.1} parent=11 // pred_fallthru
          _
        // Predicated region
        $region21: #{tpu_custom_call.1} parent=11 // pred_check
          %p337 = pneg %p222
        $region22: #{tpu_custom_call.1} parent=11 // pred_check_branch
          %339 = sbr.rel (%p337) target = $region24
        $region23: #{tpu_custom_call.1} parent=11 // pred_region
          %341 = vsyncadd [#allocation13], 0
          %s342 = sshll.u32 %s6, 4
          %s343 = int_to_ptr.hbm [resolvable:$true] %s342
          %s344 = sshll.u32 [#allocation14], 4
          %s345 = int_to_ptr.vmem [resolvable:$true] %s344
          %350 = dma.hbm_to_vmem [thread:$0]  %s343, 8192, %s345, [#allocation13], 512, 512, 32
        $region24: #{tpu_custom_call.1} parent=11 // pred_fallthru
          _
        // Predicated region
        $region25: #{tpu_custom_call.1} parent=11 // pred_check
          %p351 = pneg %p243
        $region26: #{tpu_custom_call.1} parent=11 // pred_check_branch
          %353 = sbr.rel (%p351) target = $region28
        $region27: #{tpu_custom_call.1} parent=11 // pred_region
          %355 = vsyncadd [#allocation16], 0
          %s356 = sshll.u32 %s7, 4
          %s357 = int_to_ptr.hbm [resolvable:$true] %s356
          %s358 = sshll.u32 [#allocation15], 4
          %s359 = int_to_ptr.vmem [resolvable:$true] %s358
          %364 = dma.hbm_to_vmem [thread:$0]  %s357, 4096, %s359, [#allocation16], 64, 64, 4
        $region28: #{tpu_custom_call.1} parent=11 // pred_fallthru
          _
        // Predicated region
        $region29: #{tpu_custom_call.1} parent=11 // pred_check
          %p365 = pneg %p264
        $region30: #{tpu_custom_call.1} parent=11 // pred_check_branch
          %367 = sbr.rel (%p365) target = $region32
        $region31: #{tpu_custom_call.1} parent=11 // pred_region
          _
        $region32: #{tpu_custom_call.1} parent=11 // pred_fallthru
          _
      $region12: #{tpu_custom_call.1} parent=5 // pred_fallthru
        _
      %p368 = scmp.lt.s32.totalorder %s26, 8
      // Predicated region
      $region33: #{tpu_custom_call.1} parent=5 // pred_check
        %p369 = pneg %p368
      $region34: #{tpu_custom_call.1} parent=5 // pred_check_branch
        %371 = sbr.rel (%p369) target = $region36
      $region35: #{tpu_custom_call.1} parent=5 // pred_region
        // Predicated region
        $region37: #{tpu_custom_call.1} parent=35 // pred_check
          %p372 = pneg %p67
        $region38: #{tpu_custom_call.1} parent=35 // pred_check_branch
          %374 = sbr.rel (%p372) target = $region40
        $region39: #{tpu_custom_call.1} parent=35 // pred_region
          %s375 = sand.u32 %s57, 1
          %s376 = scalar_lea.sflag [#allocation7], %s375
          %s377 = sand.u32 %s57, 1
          %s378 = smul.addr %s377, 16
          %s379 = scalar_lea.vmem [#allocation6], %s378
          %s380 = smul.u32 2, %s35
          %382 = vsyncadd %s376, 0
          %s383 = smul.addr %s33, 4
          %s384 = sadd.s32 %s380, %s383
          %s385 = smul.addr %s384, 8
          %s386 = scalar_lea.hbm %s0, %s385
          %s387 = sshll.u32 %s386, 4
          %s388 = int_to_ptr.hbm [resolvable:$true] %s387
          %s389 = sshll.u32 %s379, 4
          %s390 = int_to_ptr.vmem [resolvable:$true] %s389
          %395 = dma.hbm_to_vmem [thread:$0]  %s388, 256, %s390, %s376, 128, 128, 8
        $region40: #{tpu_custom_call.1} parent=35 // pred_fallthru
          _
        // Predicated region
        $region41: #{tpu_custom_call.1} parent=35 // pred_check
          %p396 = pneg %p93
        $region42: #{tpu_custom_call.1} parent=35 // pred_check_branch
          %398 = sbr.rel (%p396) target = $region44
        $region43: #{tpu_custom_call.1} parent=35 // pred_region
          %p399 = scmp.lt.s32.totalorder %s33, 1
          %s400 = scalar_select %p399, %s33, 1
          %s401 = smul.addr %s400, 8
          %s402 = scalar_lea.vmem %s1, %s401
        $region44: #{tpu_custom_call.1} parent=35 // pred_fallthru
          _
        // Predicated region
        $region45: #{tpu_custom_call.1} parent=35 // pred_check
          %p403 = pneg %p123
        $region46: #{tpu_custom_call.1} parent=35 // pred_check_branch
          %405 = sbr.rel (%p403) target = $region48
        $region47: #{tpu_custom_call.1} parent=35 // pred_region
          %s406 = ssub.s32 1, %s34
          %s407 = smul.u32 %s35, %s406
          %s408 = smul.u32 2, %s407
          %p409 = scmp.lt.s32.totalorder %s408, 3
          %s410 = scalar_select %p409, %s408, 3
          %s411 = smul.addr %s410, 4
          %s412 = scalar_lea.vmem %s2, %s411
          %s413 = ssub.s32 1, %s34
          %s414 = smul.u32 %s35, %s413
          %s415 = smul.u32 2, %s414
        $region48: #{tpu_custom_call.1} parent=35 // pred_fallthru
          _
        // Predicated region
        $region49: #{tpu_custom_call.1} parent=35 // pred_check
          %p416 = pneg %p153
        $region50: #{tpu_custom_call.1} parent=35 // pred_check_branch
          %418 = sbr.rel (%p416) target = $region52
        $region51: #{tpu_custom_call.1} parent=35 // pred_region
          %s419 = sand.u32 %s26, 1
          %s420 = scalar_lea.sflag [#allocation10], %s419
          %s421 = sand.u32 %s143, 1
          %s422 = smul.addr %s421, 8
          %s423 = scalar_lea.vmem [#allocation9], %s422
          %s424 = ssub.s32 1, %s34
          %s425 = smul.u32 %s35, %s424
          %s426 = smul.u32 2, %s425
          %428 = vsyncadd %s420, 0
          %s429 = smul.addr %s426, 4
          %s430 = scalar_lea.hbm %s3, %s429
          %s431 = sshll.u32 %s430, 4
          %s432 = int_to_ptr.hbm [resolvable:$true] %s431
          %s433 = sshll.u32 %s423, 4
          %s434 = int_to_ptr.vmem [resolvable:$true] %s433
          %439 = dma.hbm_to_vmem [thread:$0]  %s432, 128, %s434, %s420, 64, 64, 4
        $region52: #{tpu_custom_call.1} parent=35 // pred_fallthru
          _
      $region36: #{tpu_custom_call.1} parent=5 // pred_fallthru
        _
      %p440 = scmp.le.s32.totalorder 1, %s26
      %p441 = scmp.lt.s32.totalorder %s26, 9
      %p442 = pnand %p440, %p441
      %p443 = pneg %p442
      // Predicated region
      $region53: #{tpu_custom_call.1} parent=5 // pred_check
        _
      $region54: #{tpu_custom_call.1} parent=5 // pred_check_branch
        %445 = sbr.rel (%p442) target = $region56
      $region55: #{tpu_custom_call.1} parent=5 // pred_region
        %s446 = ssub.s32 %s26, 1
        %s447 = sand.u32 %s60, 1
        %s448 = scalar_lea.sflag [#allocation7], %s447
        %s449 = sand.u32 %s60, 1
        %s450 = smul.addr %s449, 16
        %s451 = scalar_lea.vmem [#allocation6], %s450
        // Predicated region
        $region57: #{tpu_custom_call.1} parent=55 // pred_check
          %p452 = pneg %p73
        $region58: #{tpu_custom_call.1} parent=55 // pred_check_branch
          %454 = sbr.rel (%p452) target = $region60
        $region59: #{tpu_custom_call.1} parent=55 // pred_region
          %456 = dma.done %s448, 256
        $region60: #{tpu_custom_call.1} parent=55 // pred_fallthru
          _
        %s457 = sand.u32 %s31, 1
        %s458 = scalar_lea.sflag [#allocation10], %s457
        %s459 = sand.u32 %s146, 1
        %s460 = smul.addr %s459, 8
        %s461 = scalar_lea.vmem [#allocation9], %s460
        // Predicated region
        $region61: #{tpu_custom_call.1} parent=55 // pred_check
          %p462 = pneg %p159
        $region62: #{tpu_custom_call.1} parent=55 // pred_check_branch
          %464 = sbr.rel (%p462) target = $region64
        $region63: #{tpu_custom_call.1} parent=55 // pred_region
          %466 = dma.done %s458, 128
        $region64: #{tpu_custom_call.1} parent=55 // pred_fallthru
          _
        // Predicated region
        $region65: #{tpu_custom_call.1} parent=55 // pred_check
          %p467 = pneg %p180
        $region66: #{tpu_custom_call.1} parent=55 // pred_check_branch
          %469 = sbr.rel (%p467) target = $region68
        $region67: #{tpu_custom_call.1} parent=55 // pred_region
          %471 = dma.done [#allocation10], 3072
        $region68: #{tpu_custom_call.1} parent=55 // pred_fallthru
          _
        // Predicated region
        $region69: #{tpu_custom_call.1} parent=55 // pred_check
          %p472 = pneg %p201
        $region70: #{tpu_custom_call.1} parent=55 // pred_check_branch
          %474 = sbr.rel (%p472) target = $region72
        $region71: #{tpu_custom_call.1} parent=55 // pred_region
          %476 = dma.done [#allocation13], 1024
        $region72: #{tpu_custom_call.1} parent=55 // pred_fallthru
          _
        // Predicated region
        $region73: #{tpu_custom_call.1} parent=55 // pred_check
          %p477 = pneg %p222
        $region74: #{tpu_custom_call.1} parent=55 // pred_check_branch
          %479 = sbr.rel (%p477) target = $region76
        $region75: #{tpu_custom_call.1} parent=55 // pred_region
          %481 = dma.done [#allocation13], 8192
        $region76: #{tpu_custom_call.1} parent=55 // pred_fallthru
          _
        // Predicated region
        $region77: #{tpu_custom_call.1} parent=55 // pred_check
          %p482 = pneg %p243
        $region78: #{tpu_custom_call.1} parent=55 // pred_check_branch
          %484 = sbr.rel (%p482) target = $region80
        $region79: #{tpu_custom_call.1} parent=55 // pred_region
          %486 = dma.done [#allocation16], 4096
        $region80: #{tpu_custom_call.1} parent=55 // pred_fallthru
          _
        %s487 = sand.u32 %s60, 1
        %s488 = scalar_lea.sflag [#allocation7], %s487
        %s489 = sand.u32 %s60, 1
        %s490 = smul.addr %s489, 16
        %s491 = scalar_lea.vmem [#allocation6], %s490
        %p492 = pneg %p73
        %p493 = pneg %p70
        %p494 = scmp.lt.s32.totalorder %s36, 1
        %s495 = scalar_select %p494, %s36, 1
        %s496 = smul.addr %s495, 8
        %s497 = scalar_lea.vmem %s1, %s496
        %p498 = pneg %p99
        %p499 = pneg %p96
        %s500 = ssub.s32 1, %s37
        %s501 = smul.u32 %s38, %s500
        %s502 = smul.u32 2, %s501
        %p503 = scmp.lt.s32.totalorder %s502, 3
        %s504 = scalar_select %p503, %s502, 3
        %s505 = smul.addr %s504, 4
        %s506 = scalar_lea.vmem %s2, %s505
        %p507 = pneg %p129
        %p508 = pneg %p126
        %s509 = sand.u32 %s31, 1
        %s510 = scalar_lea.sflag [#allocation10], %s509
        %s511 = sand.u32 %s146, 1
        %s512 = smul.addr %s511, 8
        %s513 = scalar_lea.vmem [#allocation9], %s512
        %p514 = pneg %p159
        %p515 = pneg %p156
        %p516 = pneg %p180
        %p517 = pneg %p177
        %p518 = pneg %p201
        %p519 = pneg %p198
        %p520 = pneg %p222
        %p521 = pneg %p219
        %p522 = pneg %p243
        %p523 = pneg %p240
        %p524 = pneg %p264
        %p525 = pneg %p261
        %p526 = pneg %p294
        %p527 = pneg %p291
        %s528 = sand.u32 %s281, 1
        %s529 = scalar_lea.sflag [#allocation8], %s528
        %s530 = sand.u32 %s281, 1
        %s531 = smul.addr %s530, 16
        %s532 = scalar_lea.vmem [#allocation17], %s531
        %s533 = smul.u32 2, %s38
        %p534 = scmp.lt.s32.totalorder %s36, 1
        %s535 = scalar_select %p534, %s36, 1
        %s536 = smul.addr %s535, 8
        %s537 = scalar_lea.vmem %s1, %s536
        %s538 = ssub.s32 1, %s37
        %s539 = smul.u32 %s38, %s538
        %s540 = smul.u32 2, %s539
        %p541 = scmp.lt.s32.totalorder %s540, 3
        %s542 = scalar_select %p541, %s540, 3
        %s543 = smul.addr %s542, 4
        %s544 = scalar_lea.vmem %s2, %s543
        %s545 = ssub.s32 1, %s37
        %s546 = smul.u32 %s38, %s545
        %s547 = smul.u32 2, %s546
        %s548 = ssub.s32 1, %s37
        %s549 = smul.u32 %s38, %s548
        %s550 = smul.u32 2, %s549
        %s551 = smul.u32 %s38, %s37
        %s552 = smul.u32 2, %s551
        %s554 = smul.u32 %s38, 16
        %v555 = vld [vmem:[%s537] sm:$0x3f]
        %v556 = vld [vmem:[%s8] sm:$0xff]
        %p557 = scmp.eq.s32.totalorder %s37, 0
        // Predicated region
        $region81: #{tpu_custom_call.1} parent=55 // pred_check
          %p558 = pneg %p557
        $region82: #{tpu_custom_call.1} parent=55 // pred_check_branch
          %560 = sbr.rel (%p558) target = $region84
        $region83: #{tpu_custom_call.1} parent=55 // pred_region
          %v561 = vld [vmem:[%s451] sm:$0xff]
          %v562 = vld [vmem:[%s451 + $0x8] sm:$0xff]
          %563 = vadd.xlane.f32.xlu0 %v561
          %v564 = vpop.xlane.xlu0 %563
          %565 = vadd.xlane.f32.xlu0 %v562
          %v566 = vpop.xlane.xlu0 %565
          %v567 = vrcp.pop 128.0
          %v568 = vmul.f32 128.0, %v567
          %v569 = vsub.f32 1.0, %v568
          %v570 = vmul.f32 %v567, %v569
          %v571 = vadd.f32 %v567, %v570
          %vm572 = vweird.f32 %v567
          %v573 = vsel %vm572, %v567, %v571
          %v574 = vmul.f32 %v564, %v573
          %v575 = vmul.f32 %v566, %v573
          %v576 = vsub.f32 %v561, %v574
          %v577 = vsub.f32 %v562, %v575
          %v578 = vmul.f32 %v576, %v576
          %v579 = vmul.f32 %v577, %v577
          %580 = vadd.xlane.f32.xlu0 %v578
          %v581 = vpop.xlane.xlu0 %580
          %582 = vadd.xlane.f32.xlu0 %v579
          %v583 = vpop.xlane.xlu0 %582
          %v584 = vmul.f32 %v581, %v573
          %v585 = vmul.f32 %v583, %v573
          %v586 = vadd.f32 %v584, 1e-05
          %v587 = vadd.f32 %v585, 1e-05
          %v588 = vrsqrt.pop %v586
          %v589 = vmul.f32 %v588, %v586
          %v590 = vmul.f32 %v589, %v588
          %v591 = vmul.f32 0.5, %v590
          %v592 = vsub.f32 1.5, %v591
          %v593 = vmul.f32 %v588, %v592
          %vm594 = vweird.f32 %v586
          %vm595 = vweird.f32 %v588
          %vm596 = vmor %vm594, %vm595
          %v597 = vsel %vm596, %v588, %v593
          %v598 = vrsqrt.pop %v587
          %v599 = vmul.f32 %v598, %v587
          %v600 = vmul.f32 %v599, %v598
          %v601 = vmul.f32 0.5, %v600
          %v602 = vsub.f32 1.5, %v601
          %v603 = vmul.f32 %v598, %v602
          %vm604 = vweird.f32 %v587
          %vm605 = vweird.f32 %v598
          %vm606 = vmor %vm604, %vm605
          %v607 = vsel %vm606, %v598, %v603
          %v608 = vmul.f32 %v576, %v597
          %v609 = vmul.f32 %v577, %v607
          %v610 = vperm.slane %v556, 4
          %v611 = vmul.f32 %v608, %v610
          %v612 = vmul.f32 %v609, %v610
          %v613 = vperm.slane %v556, 5
          %v614 = vadd.f32 %v611, %v613
          %v615 = vadd.f32 %v612, %v613
          %v616 = vadd.f32 %v555, 1.0
          %v617 = vperm.slane %v616, 1
          %v618 = vmul.f32 %v614, %v617
          %v619 = vmul.f32 %v615, %v617
          %v620 = vperm.slane %v555, 0
          %v621 = vadd.f32 %v618, %v620
          %v622 = vadd.f32 %v619, %v620
          %v623 = vpack.c.bf16 %v622, %v621
          %v624 = vld [vmem:[#allocation11] sm:$0xff]
          %v625 = vld [vmem:[#allocation11 + $0x8] sm:$0xf]
          %v626 = vld [vmem:[#allocation11 + $0xc] sm:$0xff]
          %v627 = vld [vmem:[#allocation11 + $0x14] sm:$0xf]
          %v628 = vld [vmem:[#allocation11 + $0x18] sm:$0xff]
          %v629 = vld [vmem:[#allocation11 + $0x20] sm:$0xf]
          %v630 = vld [vmem:[#allocation11 + $0x24] sm:$0xff]
          %v631 = vld [vmem:[#allocation11 + $0x2c] sm:$0xf]
          %v632 = vld [vmem:[#allocation11 + $0x30] sm:$0xff]
          %v633 = vld [vmem:[#allocation11 + $0x38] sm:$0xf]
          %v634 = vld [vmem:[#allocation11 + $0x3c] sm:$0xff]
          %v635 = vld [vmem:[#allocation11 + $0x44] sm:$0xf]
          %v636 = vld [vmem:[#allocation11 + $0x48] sm:$0xff]
          %v637 = vld [vmem:[#allocation11 + $0x50] sm:$0xf]
          %v638 = vld [vmem:[#allocation11 + $0x54] sm:$0xff]
          %v639 = vld [vmem:[#allocation11 + $0x5c] sm:$0xf]
          %v640 = vld [vmem:[#allocation11 + $0x60] sm:$0xff]
          %v641 = vld [vmem:[#allocation11 + $0x68] sm:$0xf]
          %v642 = vld [vmem:[#allocation11 + $0x6c] sm:$0xff]
          %v643 = vld [vmem:[#allocation11 + $0x74] sm:$0xf]
          %v644 = vld [vmem:[#allocation11 + $0x78] sm:$0xff]
          %v645 = vld [vmem:[#allocation11 + $0x80] sm:$0xf]
          %v646 = vld [vmem:[#allocation11 + $0x84] sm:$0xff]
          %v647 = vld [vmem:[#allocation11 + $0x8c] sm:$0xf]
          %v648 = vld [vmem:[#allocation11 + $0x90] sm:$0xff]
          %v649 = vld [vmem:[#allocation11 + $0x98] sm:$0xf]
          %v650 = vld [vmem:[#allocation11 + $0x9c] sm:$0xff]
          %v651 = vld [vmem:[#allocation11 + $0xa4] sm:$0xf]
          %v652 = vld [vmem:[#allocation11 + $0xa8] sm:$0xff]
          %v653 = vld [vmem:[#allocation11 + $0xb0] sm:$0xf]
          %v654 = vld [vmem:[#allocation11 + $0xb4] sm:$0xff]
          %v655 = vld [vmem:[#allocation11 + $0xbc] sm:$0xf]
          %v688 = vunpack.c.l.b16 %v624
          %v689 = vunpack.c.h.b16 %v624
          %v690 = vunpack.c.l.b16 %v625
          %v691 = vunpack.c.l.b16 %v626
          %v692 = vunpack.c.h.b16 %v626
          %v693 = vunpack.c.l.b16 %v627
          %v694 = vunpack.c.l.b16 %v628
          %v695 = vunpack.c.h.b16 %v628
          %v696 = vunpack.c.l.b16 %v629
          %v697 = vunpack.c.l.b16 %v630
          %v698 = vunpack.c.h.b16 %v630
          %v699 = vunpack.c.l.b16 %v631
          %v700 = vunpack.c.l.b16 %v632
          %v701 = vunpack.c.h.b16 %v632
          %v702 = vunpack.c.l.b16 %v633
          %v703 = vunpack.c.l.b16 %v634
          %v704 = vunpack.c.h.b16 %v634
          %v705 = vunpack.c.l.b16 %v635
          %v706 = vunpack.c.l.b16 %v636
          %v707 = vunpack.c.h.b16 %v636
          %v708 = vunpack.c.l.b16 %v637
          %v709 = vunpack.c.l.b16 %v638
          %v710 = vunpack.c.h.b16 %v638
          %v711 = vunpack.c.l.b16 %v639
          %v712 = vunpack.c.l.b16 %v640
          %v713 = vunpack.c.h.b16 %v640
          %v714 = vunpack.c.l.b16 %v641
          %v715 = vunpack.c.l.b16 %v642
          %v716 = vunpack.c.h.b16 %v642
          %v717 = vunpack.c.l.b16 %v643
          %v718 = vunpack.c.l.b16 %v644
          %v719 = vunpack.c.h.b16 %v644
          %v720 = vunpack.c.l.b16 %v645
          %v721 = vunpack.c.l.b16 %v646
          %v722 = vunpack.c.h.b16 %v646
          %v723 = vunpack.c.l.b16 %v647
          %v724 = vunpack.c.l.b16 %v648
          %v725 = vunpack.c.h.b16 %v648
          %v726 = vunpack.c.l.b16 %v649
          %v727 = vunpack.c.l.b16 %v650
          %v728 = vunpack.c.h.b16 %v650
          %v729 = vunpack.c.l.b16 %v651
          %v730 = vunpack.c.l.b16 %v652
          %v731 = vunpack.c.h.b16 %v652
          %v732 = vunpack.c.l.b16 %v653
          %v733 = vunpack.c.l.b16 %v654
          %v734 = vunpack.c.h.b16 %v654
          %v735 = vunpack.c.l.b16 %v655
          %v736 = vpack.c.b16 %v691, %v688
          %v737 = vpack.c.b16 %v692, %v689
          %v738 = vpack.c.b16 %v693, %v690
          %v739 = vpack.c.b16 %v697, %v694
          %v740 = vpack.c.b16 %v698, %v695
          %v741 = vpack.c.b16 %v699, %v696
          %v742 = vpack.c.b16 %v703, %v700
          %v743 = vpack.c.b16 %v704, %v701
          %v744 = vpack.c.b16 %v705, %v702
          %v745 = vpack.c.b16 %v709, %v706
          %v746 = vpack.c.b16 %v710, %v707
          %v747 = vpack.c.b16 %v711, %v708
          %v748 = vpack.c.b16 %v715, %v712
          %v749 = vpack.c.b16 %v716, %v713
          %v750 = vpack.c.b16 %v717, %v714
          %v751 = vpack.c.b16 %v721, %v718
          %v752 = vpack.c.b16 %v722, %v719
          %v753 = vpack.c.b16 %v723, %v720
          %v754 = vpack.c.b16 %v727, %v724
          %v755 = vpack.c.b16 %v728, %v725
          %v756 = vpack.c.b16 %v729, %v726
          %v757 = vpack.c.b16 %v733, %v730
          %v758 = vpack.c.b16 %v734, %v731
          %v759 = vpack.c.b16 %v735, %v732
          %784 = vmatpush.bf16.msra.mxu0 %v757
          %785 = vmatpush.bf16.msra.mxu0 %v754
          %786 = vmatpush.bf16.msra.mxu0 %v751
          %787 = vmatpush.bf16.msra.mxu0 %v748
          %788 = vmatpush.bf16.msra.mxu0 %v745
          %789 = vmatpush.bf16.msra.mxu0 %v742
          %790 = vmatpush.bf16.msra.mxu0 %v739
          %791 = vmatpush.bf16.msra.mxu0 %v736
          %792 = vmatmul.bf16.gmra.mxu0 %v623
          %v793 = vpop.f32.mrf.mxu0
          %v794 = vadd.f32 0.0, %v793
          %v795 = vpop.f32.mrf.mxu0
          %v796 = vadd.f32 0.0, %v795
          %797 = vdwg.mxu0
          %798 = vmatpush.bf16.msra.mxu0 %v758
          %799 = vmatpush.bf16.msra.mxu0 %v755
          %800 = vmatpush.bf16.msra.mxu0 %v752
          %801 = vmatpush.bf16.msra.mxu0 %v749
          %802 = vmatpush.bf16.msra.mxu0 %v746
          %803 = vmatpush.bf16.msra.mxu0 %v743
          %804 = vmatpush.bf16.msra.mxu0 %v740
          %805 = vmatpush.bf16.msra.mxu0 %v737
          %806 = vmatmul.bf16.gmra.mxu0 %v623
          %v807 = vpop.f32.mrf.mxu0
          %v808 = vadd.f32 0.0, %v807
          %v809 = vpop.f32.mrf.mxu0
          %v810 = vadd.f32 0.0, %v809
          %811 = vdwg.mxu0
          %812 = vmatpush.bf16.msra.mxu0 %v759
          %813 = vmatpush.bf16.msra.mxu0 %v756
          %814 = vmatpush.bf16.msra.mxu0 %v753
          %815 = vmatpush.bf16.msra.mxu0 %v750
          %816 = vmatpush.bf16.msra.mxu0 %v747
          %817 = vmatpush.bf16.msra.mxu0 %v744
          %818 = vmatpush.bf16.msra.mxu0 %v741
          %819 = vmatpush.bf16.msra.mxu0 %v738
          %820 = vmatmul.bf16.gmra.mxu0 %v623
          %v821 = vpop.f32.mrf.mxu0
          %v822 = vadd.f32 0.0, %v821
          %v823 = vpop.f32.mrf.mxu0
          %v824 = vadd.f32 0.0, %v823
          %825 = vdwg.mxu0
          %826 = vadd.xlane.f32.xlu0 %v794
          %v827 = vpop.xlane.xlu0 %826
          %828 = vadd.xlane.f32.xlu0 %v796
          %v829 = vpop.xlane.xlu0 %828
          %v830 = vmul.f32 %v827, %v573
          %v831 = vmul.f32 %v829, %v573
          %v832 = vsub.f32 %v794, %v830
          %v833 = vsub.f32 %v796, %v831
          %v834 = vmul.f32 %v832, %v832
          %v835 = vmul.f32 %v833, %v833
          %836 = vadd.xlane.f32.xlu0 %v834
          %v837 = vpop.xlane.xlu0 %836
          %838 = vadd.xlane.f32.xlu0 %v835
          %v839 = vpop.xlane.xlu0 %838
          %v840 = vmul.f32 %v837, %v573
          %v841 = vmul.f32 %v839, %v573
          %v842 = vadd.f32 %v840, 1e-05
          %v843 = vadd.f32 %v841, 1e-05
          %v844 = vrsqrt.pop %v842
          %v845 = vmul.f32 %v844, %v842
          %v846 = vmul.f32 %v845, %v844
          %v847 = vmul.f32 0.5, %v846
          %v848 = vsub.f32 1.5, %v847
          %v849 = vmul.f32 %v844, %v848
          %vm850 = vweird.f32 %v842
          %vm851 = vweird.f32 %v844
          %vm852 = vmor %vm850, %vm851
          %v853 = vsel %vm852, %v844, %v849
          %v854 = vrsqrt.pop %v843
          %v855 = vmul.f32 %v854, %v843
          %v856 = vmul.f32 %v855, %v854
          %v857 = vmul.f32 0.5, %v856
          %v858 = vsub.f32 1.5, %v857
          %v859 = vmul.f32 %v854, %v858
          %vm860 = vweird.f32 %v843
          %vm861 = vweird.f32 %v854
          %vm862 = vmor %vm860, %vm861
          %v863 = vsel %vm862, %v854, %v859
          %v864 = vmul.f32 %v832, %v853
          %v865 = vmul.f32 %v833, %v863
          %v866 = vperm.slane %v556, 0
          %v867 = vmul.f32 %v864, %v866
          %v868 = vmul.f32 %v865, %v866
          %v869 = vperm.slane %v556, 1
          %v870 = vadd.f32 %v867, %v869
          %v871 = vadd.f32 %v868, %v869
          %872 = vadd.xlane.f32.xlu0 %v808
          %v873 = vpop.xlane.xlu0 %872
          %874 = vadd.xlane.f32.xlu0 %v810
          %v875 = vpop.xlane.xlu0 %874
          %v876 = vmul.f32 %v873, %v573
          %v877 = vmul.f32 %v875, %v573
          %v878 = vsub.f32 %v808, %v876
          %v879 = vsub.f32 %v810, %v877
          %v880 = vmul.f32 %v878, %v878
          %v881 = vmul.f32 %v879, %v879
          %882 = vadd.xlane.f32.xlu0 %v880
          %v883 = vpop.xlane.xlu0 %882
          %884 = vadd.xlane.f32.xlu0 %v881
          %v885 = vpop.xlane.xlu0 %884
          %v886 = vmul.f32 %v883, %v573
          %v887 = vmul.f32 %v885, %v573
          %v888 = vadd.f32 %v886, 1e-05
          %v889 = vadd.f32 %v887, 1e-05
          %v890 = vrsqrt.pop %v888
          %v891 = vmul.f32 %v890, %v888
          %v892 = vmul.f32 %v891, %v890
          %v893 = vmul.f32 0.5, %v892
          %v894 = vsub.f32 1.5, %v893
          %v895 = vmul.f32 %v890, %v894
          %vm896 = vweird.f32 %v888
          %vm897 = vweird.f32 %v890
          %vm898 = vmor %vm896, %vm897
          %v899 = vsel %vm898, %v890, %v895
          %v900 = vrsqrt.pop %v889
          %v901 = vmul.f32 %v900, %v889
          %v902 = vmul.f32 %v901, %v900
          %v903 = vmul.f32 0.5, %v902
          %v904 = vsub.f32 1.5, %v903
          %v905 = vmul.f32 %v900, %v904
          %vm906 = vweird.f32 %v889
          %vm907 = vweird.f32 %v900
          %vm908 = vmor %vm906, %vm907
          %v909 = vsel %vm908, %v900, %v905
          %v910 = vmul.f32 %v878, %v899
          %v911 = vmul.f32 %v879, %v909
          %v912 = vperm.slane %v556, 2
          %v913 = vmul.f32 %v910, %v912
          %v914 = vmul.f32 %v911, %v912
          %v915 = vperm.slane %v556, 3
          %v916 = vadd.f32 %v913, %v915
          %v917 = vadd.f32 %v914, %v915
          %v918 = vld [vmem:[%s544] sm:$0xf]
          %v919 = vld [vmem:[%s544 + $0x4] sm:$0xf]
          %v920 = vunpack.c.l.bf16 %v918
          %v921 = vunpack.c.l.bf16 %v919
          %v922 = vld [vmem:[%s461] sm:$0xf]
          %v923 = vld [vmem:[%s461 + $0x4] sm:$0xf]
          %v924 = vunpack.c.l.bf16 %v922
          %v925 = vunpack.c.l.bf16 %v923
          %v926 = vlaneseq
          %v927 = vand.u32 %v926, 127
          %v928 = vadd.s32 %v927, 1
          %vm929 = vcmp.lt.s32.totalorder %v927, 0
          %v930 = vsub.s32 0, %v927
          %v931 = vsel %vm929, %v930, %v927
          %v932 = vshrl.u32 %v931, 1
          %v933 = vand.u32 %v931, 1
          %v934 = vsub.s32 0, %v933
          %v935 = vsel %vm929, %v934, %v933
          %vm936 = vcmp.ne.s32.totalorder %v935, 0
          %vm937 = vcmp.lt.s32.totalorder %v935, 0
          %vm938 = vmand %vm937, %vm936
          %v939 = vadd.s32 %v935, 2
          %v940 = vsel %vm938, %v939, %v935
          %v941 = vmul.u32 %v940, 2
          %v942 = vsub.s32 %v928, %v941
          %943 = vrot.lane.b32.xlu0 %v927, 1
          %v944 = vpop.permute.xlu0 %943
          %vm945 = vcmp.eq.s32.totalorder %v944, %v942
          %v946 = vmul.f32 %v870, %v920
          %v947 = vmul.f32 %v871, %v921
          %948 = vrot.lane.b32.xlu0 %v870, 1
          %v949 = vpop.permute.xlu0 %948
          %950 = vrot.lane.b32.xlu0 %v871, 1
          %v951 = vpop.permute.xlu0 %950
          %952 = vrot.lane.b32.xlu0 %v870, 127
          %v953 = vpop.permute.xlu0 %952
          %954 = vrot.lane.b32.xlu0 %v871, 127
          %v955 = vpop.permute.xlu0 %954
          %v956 = vsel %vm945, %v949, %v953
          %v957 = vsel %vm945, %v951, %v955
          %v958 = vmul.f32 %v956, %v924
          %v959 = vmul.f32 %v957, %v925
          %v960 = vadd.f32 %v946, %v958
          %v961 = vadd.f32 %v947, %v959
          %v962 = vmul.f32 %v916, %v920
          %v963 = vmul.f32 %v917, %v921
          %964 = vrot.lane.b32.xlu0 %v916, 1
          %v965 = vpop.permute.xlu0 %964
          %966 = vrot.lane.b32.xlu0 %v917, 1
          %v967 = vpop.permute.xlu0 %966
          %968 = vrot.lane.b32.xlu0 %v916, 127
          %v969 = vpop.permute.xlu0 %968
          %970 = vrot.lane.b32.xlu0 %v917, 127
          %v971 = vpop.permute.xlu0 %970
          %v972 = vsel %vm945, %v965, %v969
          %v973 = vsel %vm945, %v967, %v971
          %v974 = vmul.f32 %v972, %v924
          %v975 = vmul.f32 %v973, %v925
          %v976 = vadd.f32 %v962, %v974
          %v977 = vadd.f32 %v963, %v975
          %v978 = vmul.f32 %v960, 0.17677669
          %v979 = vmul.f32 %v961, 0.17677669
          %v980 = vpack.c.bf16 %v978, %v978
          %v981 = vpack.c.bf16 %v979, %v979
          %s982 = sshra.s32 %s554, 3
          %s983 = sand.u32 %s554, 7
          %s984 = smul.addr %s982, 4
          %s985 = scalar_lea.vmem [#allocation2], %s984
          %986 = vst [vmem:[%s985] sm:$0xf] %v980
          %987 = vst [vmem:[%s985 + $0x4] sm:$0xf] %v981
          %v988 = vpack.c.bf16 %v976, %v976
          %v989 = vpack.c.bf16 %v977, %v977
          %s990 = smul.addr %s982, 4
          %s991 = scalar_lea.vmem [#allocation3], %s990
          %992 = vst [vmem:[%s991] sm:$0xf] %v988
          %993 = vst [vmem:[%s991 + $0x4] sm:$0xf] %v989
          %v994 = vpack.c.bf16 %v822, %v822
          %v995 = vpack.c.bf16 %v824, %v824
          %s996 = smul.addr %s982, 4
          %s997 = scalar_lea.vmem [#allocation4], %s996
          %998 = vst [vmem:[%s997] sm:$0xf] %v994
          %999 = vst [vmem:[%s997 + $0x4] sm:$0xf] %v995
        $region84: #{tpu_custom_call.1} parent=55 // pred_fallthru
          _
        %p1000 = scmp.eq.s32.totalorder %s37, 1
        // Predicated region
        $region85: #{tpu_custom_call.1} parent=55 // pred_check
          %p1001 = pneg %p1000
        $region86: #{tpu_custom_call.1} parent=55 // pred_check_branch
          %1003 = sbr.rel (%p1001) target = $region88
        $region87: #{tpu_custom_call.1} parent=55 // pred_region
          %v1004 = vld [vmem:[%s451] sm:$0xff]
          %v1005 = vld [vmem:[%s451 + $0x8] sm:$0xff]
          %s1006 = sshra.s32 %s554, 3
          %s1007 = sand.u32 %s554, 7
          %s1008 = smul.addr %s1006, 4
          %s1009 = scalar_lea.vmem [#allocation2], %s1008
          %v1010 = vld [vmem:[%s1009] sm:$0xf]
          %v1011 = vld [vmem:[%s1009 + $0x4] sm:$0xf]
          %v1012 = vld [vmem:[#allocation3] sm:$0xf]
          %v1013 = vld [vmem:[#allocation3 + $0x4] sm:$0xf]
          %v1014 = vld [vmem:[#allocation3 + $0x8] sm:$0xf]
          %v1015 = vld [vmem:[#allocation3 + $0xc] sm:$0xf]
          %v1018 = vunpack.c.l.b16 %v1010
          %v1019 = vunpack.c.l.b16 %v1011
          %v1020 = vpack.c.b16 %v1019, %v1018
          %v1025 = vunpack.c.l.b16 %v1012
          %v1026 = vunpack.c.l.b16 %v1013
          %v1027 = vunpack.c.l.b16 %v1014
          %v1028 = vunpack.c.l.b16 %v1015
          %v1029 = vpack.c.b16 %v1026, %v1025
          %v1030 = vpack.c.b16 %v1028, %v1027
          %vm1031 = vcmask 261120
          %v1033 = vsel %vm1031, %v1020, 0
          %v1036 = vsel %vm1031, %v1029, 0
          %v1039 = vsel %vm1031, %v1030, 0
          %1041 = vmatpush.bf16.xpose.msra.mxu0 0
          %1042 = vmatpush.bf16.xpose.msra.mxu0 0
          %1043 = vmatpush.bf16.xpose.msra.mxu0 0
          %1044 = vmatpush.bf16.xpose.msra.mxu0 0
          %1045 = vmatpush.bf16.xpose.msra.mxu0 0
          %1046 = vmatpush.bf16.xpose.msra.mxu0 0
          %1047 = vmatpush.bf16.xpose.msra.mxu0 %v1039
          %1048 = vmatpush.bf16.xpose.msra.mxu0 %v1036
          %1049 = vmatmul.bf16.gmra.mxu0 %v1033
          %v1050 = vpop.f32.mrf.mxu0
          %v1051 = vadd.f32 0.0, %v1050
          %v1052 = vpop.f32.mrf.mxu0
          %v1053 = vadd.f32 0.0, %v1052
          %1054 = vdwg.mxu0
          %v1055 = vsel %vm1031, %v1051, -inf
          %1056 = vmax.xlane.f32.xlu0 %v1055
          %v1057 = vpop.xlane.xlu0 %1056
          %v1058 = vsel %vm1031, %v1053, -inf
          %1059 = vmax.xlane.f32.xlu0 %v1058
          %v1060 = vpop.xlane.xlu0 %1059
          %v1061 = vsub.f32 %v1051, %v1057
          %v1062 = vsub.f32 %v1053, %v1060
          %v1063 = vmul.f32 %v1061, 1.442695
          %v1064 = vpow.pop %v1063
          %v1065 = vmul.f32 %v1062, 1.442695
          %v1066 = vpow.pop %v1065
          %v1067 = vsel %vm1031, %v1064, 0.0
          %1068 = vadd.xlane.f32.xlu0 %v1067
          %v1069 = vpop.xlane.xlu0 %1068
          %v1070 = vsel %vm1031, %v1066, 0.0
          %1071 = vadd.xlane.f32.xlu0 %v1070
          %v1072 = vpop.xlane.xlu0 %1071
          %v1073 = vpack.c.bf16 %v1066, %v1064
          %v1074 = vld [vmem:[#allocation4] sm:$0xf]
          %v1075 = vld [vmem:[#allocation4 + $0x4] sm:$0xf]
          %v1076 = vld [vmem:[#allocation4 + $0x8] sm:$0xf]
          %v1077 = vld [vmem:[#allocation4 + $0xc] sm:$0xf]
          %v1082 = vunpack.c.l.b16 %v1074
          %v1083 = vunpack.c.l.b16 %v1075
          %v1084 = vunpack.c.l.b16 %v1076
          %v1085 = vunpack.c.l.b16 %v1077
          %v1086 = vpack.c.b16 %v1083, %v1082
          %v1087 = vpack.c.b16 %v1085, %v1084
          %v1091 = vsel %vm1031, %v1073, 0
          %1093 = vmatpush.bf16.msra.mxu0 0
          %1094 = vmatpush.bf16.msra.mxu0 0
          %1095 = vmatpush.bf16.msra.mxu0 0
          %1096 = vmatpush.bf16.msra.mxu0 0
          %1097 = vmatpush.bf16.msra.mxu0 0
          %1098 = vmatpush.bf16.msra.mxu0 0
          %1099 = vmatpush.bf16.msra.mxu0 %v1087
          %1100 = vmatpush.bf16.msra.mxu0 %v1086
          %1101 = vmatmul.bf16.gmra.mxu0 %v1091
          %v1102 = vpop.f32.mrf.mxu0
          %v1103 = vadd.f32 0.0, %v1102
          %v1104 = vpop.f32.mrf.mxu0
          %v1105 = vadd.f32 0.0, %v1104
          %1106 = vdwg.mxu0
          %v1107 = vrcp.pop %v1069
          %v1108 = vrcp.pop %v1072
          %v1109 = vmul.f32 %v1103, %v1107
          %v1110 = vmul.f32 %v1105, %v1108
          %v1111 = vpack.c.bf16 %v1109, %v1109
          %v1112 = vpack.c.bf16 %v1110, %v1110
          %vm1113 = vcmask 257024
          %1114 = vst.msk [vmem:[#allocation5] sm:$0xf] %vm1113, %v1111
          %1115 = vst.msk [vmem:[#allocation5 + $0x4] sm:$0xf] %vm1113, %v1112
          %v1116 = vld [vmem:[#allocation3] sm:$0xf]
          %v1117 = vld [vmem:[#allocation3 + $0x4] sm:$0xf]
          %v1118 = vld [vmem:[#allocation3 + $0x8] sm:$0xf]
          %v1119 = vld [vmem:[#allocation3 + $0xc] sm:$0xf]
          %1120 = vrot.lane.b32.xlu0 %v1020, 96
          %v1121 = vpop.permute.xlu0 %1120
          %v1126 = vunpack.c.l.b16 %v1116
          %v1127 = vunpack.c.l.b16 %v1117
          %v1128 = vunpack.c.l.b16 %v1118
          %v1129 = vunpack.c.l.b16 %v1119
          %v1130 = vpack.c.b16 %v1127, %v1126
          %v1131 = vpack.c.b16 %v1129, %v1128
          %1132 = vrot.lane.b32.xlu0 %v1130, 96
          %v1133 = vpop.permute.xlu0 %1132
          %1134 = vrot.lane.b32.xlu0 %v1131, 96
          %v1135 = vpop.permute.xlu0 %1134
          %v1137 = vsel %vm1031, %v1121, 0
          %v1140 = vsel %vm1031, %v1133, 0
          %v1143 = vsel %vm1031, %v1135, 0
          %1145 = vmatpush.bf16.xpose.msra.mxu0 0
          %1146 = vmatpush.bf16.xpose.msra.mxu0 0
          %1147 = vmatpush.bf16.xpose.msra.mxu0 0
          %1148 = vmatpush.bf16.xpose.msra.mxu0 0
          %1149 = vmatpush.bf16.xpose.msra.mxu0 0
          %1150 = vmatpush.bf16.xpose.msra.mxu0 0
          %1151 = vmatpush.bf16.xpose.msra.mxu0 %v1143
          %1152 = vmatpush.bf16.xpose.msra.mxu0 %v1140
          %1153 = vmatmul.bf16.gmra.mxu0 %v1137
          %v1154 = vpop.f32.mrf.mxu0
          %v1155 = vadd.f32 0.0, %v1154
          %v1156 = vpop.f32.mrf.mxu0
          %v1157 = vadd.f32 0.0, %v1156
          %1158 = vdwg.mxu0
          %v1159 = vsel %vm1031, %v1155, -inf
          %1160 = vmax.xlane.f32.xlu0 %v1159
          %v1161 = vpop.xlane.xlu0 %1160
          %v1162 = vsel %vm1031, %v1157, -inf
          %1163 = vmax.xlane.f32.xlu0 %v1162
          %v1164 = vpop.xlane.xlu0 %1163
          %v1165 = vsub.f32 %v1155, %v1161
          %v1166 = vsub.f32 %v1157, %v1164
          %v1167 = vmul.f32 %v1165, 1.442695
          %v1168 = vpow.pop %v1167
          %v1169 = vmul.f32 %v1166, 1.442695
          %v1170 = vpow.pop %v1169
          %v1171 = vsel %vm1031, %v1168, 0.0
          %1172 = vadd.xlane.f32.xlu0 %v1171
          %v1173 = vpop.xlane.xlu0 %1172
          %v1174 = vsel %vm1031, %v1170, 0.0
          %1175 = vadd.xlane.f32.xlu0 %v1174
          %v1176 = vpop.xlane.xlu0 %1175
          %v1177 = vpack.c.bf16 %v1170, %v1168
          %v1178 = vld [vmem:[#allocation4] sm:$0xf]
          %v1179 = vld [vmem:[#allocation4 + $0x4] sm:$0xf]
          %v1180 = vld [vmem:[#allocation4 + $0x8] sm:$0xf]
          %v1181 = vld [vmem:[#allocation4 + $0xc] sm:$0xf]
          %v1186 = vunpack.c.l.b16 %v1178
          %v1187 = vunpack.c.l.b16 %v1179
          %v1188 = vunpack.c.l.b16 %v1180
          %v1189 = vunpack.c.l.b16 %v1181
          %v1190 = vpack.c.b16 %v1187, %v1186
          %v1191 = vpack.c.b16 %v1189, %v1188
          %1192 = vrot.lane.b32.xlu0 %v1190, 96
          %v1193 = vpop.permute.xlu0 %1192
          %1194 = vrot.lane.b32.xlu0 %v1191, 96
          %v1195 = vpop.permute.xlu0 %1194
          %v1199 = vsel %vm1031, %v1177, 0
          %1201 = vmatpush.bf16.msra.mxu0 0
          %1202 = vmatpush.bf16.msra.mxu0 0
          %1203 = vmatpush.bf16.msra.mxu0 0
          %1204 = vmatpush.bf16.msra.mxu0 0
          %1205 = vmatpush.bf16.msra.mxu0 0
          %1206 = vmatpush.bf16.msra.mxu0 0
          %1207 = vmatpush.bf16.msra.mxu0 %v1195
          %1208 = vmatpush.bf16.msra.mxu0 %v1193
          %1209 = vmatmul.bf16.gmra.mxu0 %v1199
          %v1210 = vpop.f32.mrf.mxu0
          %v1211 = vadd.f32 0.0, %v1210
          %v1212 = vpop.f32.mrf.mxu0
          %v1213 = vadd.f32 0.0, %v1212
          %1214 = vdwg.mxu0
          %v1215 = vrcp.pop %v1173
          %v1216 = vrcp.pop %v1176
          %v1217 = vmul.f32 %v1211, %v1215
          %v1218 = vmul.f32 %v1213, %v1216
          %v1219 = vpack.c.bf16 %v1217, %v1217
          %v1220 = vpack.c.bf16 %v1218, %v1218
          %1223 = vrot.lane.b32.xlu0 %v1219, 32
          %v1224 = vpop.permute.xlu0 %1223
          %1225 = vrot.lane.b32.xlu0 %v1220, 32
          %v1226 = vpop.permute.xlu0 %1225
          %vm1229 = vcmask 519424
          %1230 = vst.msk [vmem:[#allocation5] sm:$0xf] %vm1229, %v1224
          %1231 = vst.msk [vmem:[#allocation5 + $0x4] sm:$0xf] %vm1229, %v1226
          %v1232 = vld [vmem:[#allocation3] sm:$0xf]
          %v1233 = vld [vmem:[#allocation3 + $0x4] sm:$0xf]
          %v1234 = vld [vmem:[#allocation3 + $0x8] sm:$0xf]
          %v1235 = vld [vmem:[#allocation3 + $0xc] sm:$0xf]
          %1236 = vrot.lane.b32.xlu0 %v1020, 64
          %v1237 = vpop.permute.xlu0 %1236
          %v1242 = vunpack.c.l.b16 %v1232
          %v1243 = vunpack.c.l.b16 %v1233
          %v1244 = vunpack.c.l.b16 %v1234
          %v1245 = vunpack.c.l.b16 %v1235
          %v1246 = vpack.c.b16 %v1243, %v1242
          %v1247 = vpack.c.b16 %v1245, %v1244
          %1248 = vrot.lane.b32.xlu0 %v1246, 64
          %v1249 = vpop.permute.xlu0 %1248
          %1250 = vrot.lane.b32.xlu0 %v1247, 64
          %v1251 = vpop.permute.xlu0 %1250
          %v1253 = vsel %vm1031, %v1237, 0
          %v1256 = vsel %vm1031, %v1249, 0
          %v1259 = vsel %vm1031, %v1251, 0
          %1261 = vmatpush.bf16.xpose.msra.mxu0 0
          %1262 = vmatpush.bf16.xpose.msra.mxu0 0
          %1263 = vmatpush.bf16.xpose.msra.mxu0 0
          %1264 = vmatpush.bf16.xpose.msra.mxu0 0
          %1265 = vmatpush.bf16.xpose.msra.mxu0 0
          %1266 = vmatpush.bf16.xpose.msra.mxu0 0
          %1267 = vmatpush.bf16.xpose.msra.mxu0 %v1259
          %1268 = vmatpush.bf16.xpose.msra.mxu0 %v1256
          %1269 = vmatmul.bf16.gmra.mxu0 %v1253
          %v1270 = vpop.f32.mrf.mxu0
          %v1271 = vadd.f32 0.0, %v1270
          %v1272 = vpop.f32.mrf.mxu0
          %v1273 = vadd.f32 0.0, %v1272
          %1274 = vdwg.mxu0
          %v1275 = vsel %vm1031, %v1271, -inf
          %1276 = vmax.xlane.f32.xlu0 %v1275
          %v1277 = vpop.xlane.xlu0 %1276
          %v1278 = vsel %vm1031, %v1273, -inf
          %1279 = vmax.xlane.f32.xlu0 %v1278
          %v1280 = vpop.xlane.xlu0 %1279
          %v1281 = vsub.f32 %v1271, %v1277
          %v1282 = vsub.f32 %v1273, %v1280
          %v1283 = vmul.f32 %v1281, 1.442695
          %v1284 = vpow.pop %v1283
          %v1285 = vmul.f32 %v1282, 1.442695
          %v1286 = vpow.pop %v1285
          %v1287 = vsel %vm1031, %v1284, 0.0
          %1288 = vadd.xlane.f32.xlu0 %v1287
          %v1289 = vpop.xlane.xlu0 %1288
          %v1290 = vsel %vm1031, %v1286, 0.0
          %1291 = vadd.xlane.f32.xlu0 %v1290
          %v1292 = vpop.xlane.xlu0 %1291
          %v1293 = vpack.c.bf16 %v1286, %v1284
          %v1294 = vld [vmem:[#allocation4] sm:$0xf]
          %v1295 = vld [vmem:[#allocation4 + $0x4] sm:$0xf]
          %v1296 = vld [vmem:[#allocation4 + $0x8] sm:$0xf]
          %v1297 = vld [vmem:[#allocation4 + $0xc] sm:$0xf]
          %v1302 = vunpack.c.l.b16 %v1294
          %v1303 = vunpack.c.l.b16 %v1295
          %v1304 = vunpack.c.l.b16 %v1296
          %v1305 = vunpack.c.l.b16 %v1297
          %v1306 = vpack.c.b16 %v1303, %v1302
          %v1307 = vpack.c.b16 %v1305, %v1304
          %1308 = vrot.lane.b32.xlu0 %v1306, 64
          %v1309 = vpop.permute.xlu0 %1308
          %1310 = vrot.lane.b32.xlu0 %v1307, 64
          %v1311 = vpop.permute.xlu0 %1310
          %v1315 = vsel %vm1031, %v1293, 0
          %1317 = vmatpush.bf16.msra.mxu0 0
          %1318 = vmatpush.bf16.msra.mxu0 0
          %1319 = vmatpush.bf16.msra.mxu0 0
          %1320 = vmatpush.bf16.msra.mxu0 0
          %1321 = vmatpush.bf16.msra.mxu0 0
          %1322 = vmatpush.bf16.msra.mxu0 0
          %1323 = vmatpush.bf16.msra.mxu0 %v1311
          %1324 = vmatpush.bf16.msra.mxu0 %v1309
          %1325 = vmatmul.bf16.gmra.mxu0 %v1315
          %v1326 = vpop.f32.mrf.mxu0
          %v1327 = vadd.f32 0.0, %v1326
          %v1328 = vpop.f32.mrf.mxu0
          %v1329 = vadd.f32 0.0, %v1328
          %1330 = vdwg.mxu0
          %v1331 = vrcp.pop %v1289
          %v1332 = vrcp.pop %v1292
          %v1333 = vmul.f32 %v1327, %v1331
          %v1334 = vmul.f32 %v1329, %v1332
          %v1335 = vpack.c.bf16 %v1333, %v1333
          %v1336 = vpack.c.bf16 %v1334, %v1334
          %1339 = vrot.lane.b32.xlu0 %v1335, 64
          %v1340 = vpop.permute.xlu0 %1339
          %1341 = vrot.lane.b32.xlu0 %v1336, 64
          %v1342 = vpop.permute.xlu0 %1341
          %vm1345 = vcmask 781824
          %1346 = vst.msk [vmem:[#allocation5] sm:$0xf] %vm1345, %v1340
          %1347 = vst.msk [vmem:[#allocation5 + $0x4] sm:$0xf] %vm1345, %v1342
          %v1348 = vld [vmem:[#allocation3] sm:$0xf]
          %v1349 = vld [vmem:[#allocation3 + $0x4] sm:$0xf]
          %v1350 = vld [vmem:[#allocation3 + $0x8] sm:$0xf]
          %v1351 = vld [vmem:[#allocation3 + $0xc] sm:$0xf]
          %1352 = vrot.lane.b32.xlu0 %v1020, 32
          %v1353 = vpop.permute.xlu0 %1352
          %v1358 = vunpack.c.l.b16 %v1348
          %v1359 = vunpack.c.l.b16 %v1349
          %v1360 = vunpack.c.l.b16 %v1350
          %v1361 = vunpack.c.l.b16 %v1351
          %v1362 = vpack.c.b16 %v1359, %v1358
          %v1363 = vpack.c.b16 %v1361, %v1360
          %1364 = vrot.lane.b32.xlu0 %v1362, 32
          %v1365 = vpop.permute.xlu0 %1364
          %1366 = vrot.lane.b32.xlu0 %v1363, 32
          %v1367 = vpop.permute.xlu0 %1366
          %v1369 = vsel %vm1031, %v1353, 0
          %v1372 = vsel %vm1031, %v1365, 0
          %v1375 = vsel %vm1031, %v1367, 0
          %1377 = vmatpush.bf16.xpose.msra.mxu0 0
          %1378 = vmatpush.bf16.xpose.msra.mxu0 0
          %1379 = vmatpush.bf16.xpose.msra.mxu0 0
          %1380 = vmatpush.bf16.xpose.msra.mxu0 0
          %1381 = vmatpush.bf16.xpose.msra.mxu0 0
          %1382 = vmatpush.bf16.xpose.msra.mxu0 0
          %1383 = vmatpush.bf16.xpose.msra.mxu0 %v1375
          %1384 = vmatpush.bf16.xpose.msra.mxu0 %v1372
          %1385 = vmatmul.bf16.gmra.mxu0 %v1369
          %v1386 = vpop.f32.mrf.mxu0
          %v1387 = vadd.f32 0.0, %v1386
          %v1388 = vpop.f32.mrf.mxu0
          %v1389 = vadd.f32 0.0, %v1388
          %1390 = vdwg.mxu0
          %v1391 = vsel %vm1031, %v1387, -inf
          %1392 = vmax.xlane.f32.xlu0 %v1391
          %v1393 = vpop.xlane.xlu0 %1392
          %v1394 = vsel %vm1031, %v1389, -inf
          %1395 = vmax.xlane.f32.xlu0 %v1394
          %v1396 = vpop.xlane.xlu0 %1395
          %v1397 = vsub.f32 %v1387, %v1393
          %v1398 = vsub.f32 %v1389, %v1396
          %v1399 = vmul.f32 %v1397, 1.442695
          %v1400 = vpow.pop %v1399
          %v1401 = vmul.f32 %v1398, 1.442695
          %v1402 = vpow.pop %v1401
          %v1403 = vsel %vm1031, %v1400, 0.0
          %1404 = vadd.xlane.f32.xlu0 %v1403
          %v1405 = vpop.xlane.xlu0 %1404
          %v1406 = vsel %vm1031, %v1402, 0.0
          %1407 = vadd.xlane.f32.xlu0 %v1406
          %v1408 = vpop.xlane.xlu0 %1407
          %v1409 = vpack.c.bf16 %v1402, %v1400
          %v1410 = vld [vmem:[#allocation4] sm:$0xf]
          %v1411 = vld [vmem:[#allocation4 + $0x4] sm:$0xf]
          %v1412 = vld [vmem:[#allocation4 + $0x8] sm:$0xf]
          %v1413 = vld [vmem:[#allocation4 + $0xc] sm:$0xf]
          %v1418 = vunpack.c.l.b16 %v1410
          %v1419 = vunpack.c.l.b16 %v1411
          %v1420 = vunpack.c.l.b16 %v1412
          %v1421 = vunpack.c.l.b16 %v1413
          %v1422 = vpack.c.b16 %v1419, %v1418
          %v1423 = vpack.c.b16 %v1421, %v1420
          %1424 = vrot.lane.b32.xlu0 %v1422, 32
          %v1425 = vpop.permute.xlu0 %1424
          %1426 = vrot.lane.b32.xlu0 %v1423, 32
          %v1427 = vpop.permute.xlu0 %1426
          %v1431 = vsel %vm1031, %v1409, 0
          %1433 = vmatpush.bf16.msra.mxu0 0
          %1434 = vmatpush.bf16.msra.mxu0 0
          %1435 = vmatpush.bf16.msra.mxu0 0
          %1436 = vmatpush.bf16.msra.mxu0 0
          %1437 = vmatpush.bf16.msra.mxu0 0
          %1438 = vmatpush.bf16.msra.mxu0 0
          %1439 = vmatpush.bf16.msra.mxu0 %v1427
          %1440 = vmatpush.bf16.msra.mxu0 %v1425
          %1441 = vmatmul.bf16.gmra.mxu0 %v1431
          %v1442 = vpop.f32.mrf.mxu0
          %v1443 = vadd.f32 0.0, %v1442
          %v1444 = vpop.f32.mrf.mxu0
          %v1445 = vadd.f32 0.0, %v1444
          %1446 = vdwg.mxu0
          %v1447 = vrcp.pop %v1405
          %v1448 = vrcp.pop %v1408
          %v1449 = vmul.f32 %v1443, %v1447
          %v1450 = vmul.f32 %v1445, %v1448
          %v1451 = vpack.c.bf16 %v1449, %v1449
          %v1452 = vpack.c.bf16 %v1450, %v1450
          %1455 = vrot.lane.b32.xlu0 %v1451, 96
          %v1456 = vpop.permute.xlu0 %1455
          %1457 = vrot.lane.b32.xlu0 %v1452, 96
          %v1458 = vpop.permute.xlu0 %1457
          %vm1461 = vcmask 1044224
          %1462 = vst.msk [vmem:[#allocation5] sm:$0xf] %vm1461, %v1456
          %1463 = vst.msk [vmem:[#allocation5 + $0x4] sm:$0xf] %vm1461, %v1458
          %v1464 = vld [vmem:[#allocation5] sm:$0xf]
          %v1465 = vld [vmem:[#allocation5 + $0x4] sm:$0xf]
          %v1466 = vld [vmem:[#allocation12] sm:$0xf]
          %v1467 = vld [vmem:[#allocation12 + $0x4] sm:$0xf]
          %v1468 = vld [vmem:[#allocation12 + $0x8] sm:$0xf]
          %v1469 = vld [vmem:[#allocation12 + $0xc] sm:$0xf]
          %v1470 = vld [vmem:[#allocation12 + $0x10] sm:$0xf]
          %v1471 = vld [vmem:[#allocation12 + $0x14] sm:$0xf]
          %v1472 = vld [vmem:[#allocation12 + $0x18] sm:$0xf]
          %v1473 = vld [vmem:[#allocation12 + $0x1c] sm:$0xf]
          %v1474 = vld [vmem:[#allocation12 + $0x20] sm:$0xf]
          %v1475 = vld [vmem:[#allocation12 + $0x24] sm:$0xf]
          %v1476 = vld [vmem:[#allocation12 + $0x28] sm:$0xf]
          %v1477 = vld [vmem:[#allocation12 + $0x2c] sm:$0xf]
          %v1478 = vld [vmem:[#allocation12 + $0x30] sm:$0xf]
          %v1479 = vld [vmem:[#allocation12 + $0x34] sm:$0xf]
          %v1480 = vld [vmem:[#allocation12 + $0x38] sm:$0xf]
          %v1481 = vld [vmem:[#allocation12 + $0x3c] sm:$0xf]
          %v1484 = vunpack.c.l.b16 %v1464
          %v1485 = vunpack.c.l.b16 %v1465
          %v1486 = vpack.c.b16 %v1485, %v1484
          %v1504 = vunpack.c.l.b16 %v1466
          %v1505 = vunpack.c.l.b16 %v1467
          %v1506 = vunpack.c.l.b16 %v1468
          %v1507 = vunpack.c.l.b16 %v1469
          %v1508 = vunpack.c.l.b16 %v1470
          %v1509 = vunpack.c.l.b16 %v1471
          %v1510 = vunpack.c.l.b16 %v1472
          %v1511 = vunpack.c.l.b16 %v1473
          %v1512 = vunpack.c.l.b16 %v1474
          %v1513 = vunpack.c.l.b16 %v1475
          %v1514 = vunpack.c.l.b16 %v1476
          %v1515 = vunpack.c.l.b16 %v1477
          %v1516 = vunpack.c.l.b16 %v1478
          %v1517 = vunpack.c.l.b16 %v1479
          %v1518 = vunpack.c.l.b16 %v1480
          %v1519 = vunpack.c.l.b16 %v1481
          %v1520 = vpack.c.b16 %v1505, %v1504
          %v1521 = vpack.c.b16 %v1507, %v1506
          %v1522 = vpack.c.b16 %v1509, %v1508
          %v1523 = vpack.c.b16 %v1511, %v1510
          %v1524 = vpack.c.b16 %v1513, %v1512
          %v1525 = vpack.c.b16 %v1515, %v1514
          %v1526 = vpack.c.b16 %v1517, %v1516
          %v1527 = vpack.c.b16 %v1519, %v1518
          %1536 = vmatpush.bf16.msra.mxu0 %v1527
          %1537 = vmatpush.bf16.msra.mxu0 %v1526
          %1538 = vmatpush.bf16.msra.mxu0 %v1525
          %1539 = vmatpush.bf16.msra.mxu0 %v1524
          %1540 = vmatpush.bf16.msra.mxu0 %v1523
          %1541 = vmatpush.bf16.msra.mxu0 %v1522
          %1542 = vmatpush.bf16.msra.mxu0 %v1521
          %1543 = vmatpush.bf16.msra.mxu0 %v1520
          %1544 = vmatmul.bf16.gmra.mxu0 %v1486
          %v1545 = vpop.f32.mrf.mxu0
          %v1546 = vadd.f32 0.0, %v1545
          %v1547 = vpop.f32.mrf.mxu0
          %v1548 = vadd.f32 0.0, %v1547
          %1549 = vdwg.mxu0
          %v1550 = vperm.slane %v555, 2
          %v1551 = vmul.f32 %v1550, %v1546
          %v1552 = vmul.f32 %v1550, %v1548
          %v1553 = vadd.f32 %v1004, %v1551
          %v1554 = vadd.f32 %v1005, %v1552
          %1555 = vadd.xlane.f32.xlu0 %v1553
          %v1556 = vpop.xlane.xlu0 %1555
          %1557 = vadd.xlane.f32.xlu0 %v1554
          %v1558 = vpop.xlane.xlu0 %1557
          %v1559 = vrcp.pop 128.0
          %v1560 = vmul.f32 128.0, %v1559
          %v1561 = vsub.f32 1.0, %v1560
          %v1562 = vmul.f32 %v1559, %v1561
          %v1563 = vadd.f32 %v1559, %v1562
          %vm1564 = vweird.f32 %v1559
          %v1565 = vsel %vm1564, %v1559, %v1563
          %v1566 = vmul.f32 %v1556, %v1565
          %v1567 = vmul.f32 %v1558, %v1565
          %v1568 = vsub.f32 %v1553, %v1566
          %v1569 = vsub.f32 %v1554, %v1567
          %v1570 = vmul.f32 %v1568, %v1568
          %v1571 = vmul.f32 %v1569, %v1569
          %1572 = vadd.xlane.f32.xlu0 %v1570
          %v1573 = vpop.xlane.xlu0 %1572
          %1574 = vadd.xlane.f32.xlu0 %v1571
          %v1575 = vpop.xlane.xlu0 %1574
          %v1576 = vmul.f32 %v1573, %v1565
          %v1577 = vmul.f32 %v1575, %v1565
          %v1578 = vadd.f32 %v1576, 1e-05
          %v1579 = vadd.f32 %v1577, 1e-05
          %v1580 = vrsqrt.pop %v1578
          %v1581 = vmul.f32 %v1580, %v1578
          %v1582 = vmul.f32 %v1581, %v1580
          %v1583 = vmul.f32 0.5, %v1582
          %v1584 = vsub.f32 1.5, %v1583
          %v1585 = vmul.f32 %v1580, %v1584
          %vm1586 = vweird.f32 %v1578
          %vm1587 = vweird.f32 %v1580
          %vm1588 = vmor %vm1586, %vm1587
          %v1589 = vsel %vm1588, %v1580, %v1585
          %v1590 = vrsqrt.pop %v1579
          %v1591 = vmul.f32 %v1590, %v1579
          %v1592 = vmul.f32 %v1591, %v1590
          %v1593 = vmul.f32 0.5, %v1592
          %v1594 = vsub.f32 1.5, %v1593
          %v1595 = vmul.f32 %v1590, %v1594
          %vm1596 = vweird.f32 %v1579
          %vm1597 = vweird.f32 %v1590
          %vm1598 = vmor %vm1596, %vm1597
          %v1599 = vsel %vm1598, %v1590, %v1595
          %v1600 = vmul.f32 %v1568, %v1589
          %v1601 = vmul.f32 %v1569, %v1599
          %v1602 = vperm.slane %v556, 6
          %v1603 = vmul.f32 %v1600, %v1602
          %v1604 = vmul.f32 %v1601, %v1602
          %v1605 = vperm.slane %v556, 7
          %v1606 = vadd.f32 %v1603, %v1605
          %v1607 = vadd.f32 %v1604, %v1605
          %v1608 = vadd.f32 %v555, 1.0
          %v1609 = vperm.slane %v1608, 4
          %v1610 = vmul.f32 %v1606, %v1609
          %v1611 = vmul.f32 %v1607, %v1609
          %v1612 = vperm.slane %v555, 3
          %v1613 = vadd.f32 %v1610, %v1612
          %v1614 = vadd.f32 %v1611, %v1612
          %v1615 = vpack.c.bf16 %v1614, %v1613
          %v1616 = vld [vmem:[#allocation14] sm:$0xff]
          %v1617 = vld [vmem:[#allocation14 + $0x8] sm:$0xff]
          %v1618 = vld [vmem:[#allocation14 + $0x10] sm:$0xff]
          %v1619 = vld [vmem:[#allocation14 + $0x18] sm:$0xff]
          %v1620 = vld [vmem:[#allocation14 + $0x20] sm:$0xff]
          %v1621 = vld [vmem:[#allocation14 + $0x28] sm:$0xff]
          %v1622 = vld [vmem:[#allocation14 + $0x30] sm:$0xff]
          %v1623 = vld [vmem:[#allocation14 + $0x38] sm:$0xff]
          %v1624 = vld [vmem:[#allocation14 + $0x40] sm:$0xff]
          %v1625 = vld [vmem:[#allocation14 + $0x48] sm:$0xff]
          %v1626 = vld [vmem:[#allocation14 + $0x50] sm:$0xff]
          %v1627 = vld [vmem:[#allocation14 + $0x58] sm:$0xff]
          %v1628 = vld [vmem:[#allocation14 + $0x60] sm:$0xff]
          %v1629 = vld [vmem:[#allocation14 + $0x68] sm:$0xff]
          %v1630 = vld [vmem:[#allocation14 + $0x70] sm:$0xff]
          %v1631 = vld [vmem:[#allocation14 + $0x78] sm:$0xff]
          %v1632 = vld [vmem:[#allocation14 + $0x80] sm:$0xff]
          %v1633 = vld [vmem:[#allocation14 + $0x88] sm:$0xff]
          %v1634 = vld [vmem:[#allocation14 + $0x90] sm:$0xff]
          %v1635 = vld [vmem:[#allocation14 + $0x98] sm:$0xff]
          %v1636 = vld [vmem:[#allocation14 + $0xa0] sm:$0xff]
          %v1637 = vld [vmem:[#allocation14 + $0xa8] sm:$0xff]
          %v1638 = vld [vmem:[#allocation14 + $0xb0] sm:$0xff]
          %v1639 = vld [vmem:[#allocation14 + $0xb8] sm:$0xff]
          %v1640 = vld [vmem:[#allocation14 + $0xc0] sm:$0xff]
          %v1641 = vld [vmem:[#allocation14 + $0xc8] sm:$0xff]
          %v1642 = vld [vmem:[#allocation14 + $0xd0] sm:$0xff]
          %v1643 = vld [vmem:[#allocation14 + $0xd8] sm:$0xff]
          %v1644 = vld [vmem:[#allocation14 + $0xe0] sm:$0xff]
          %v1645 = vld [vmem:[#allocation14 + $0xe8] sm:$0xff]
          %v1646 = vld [vmem:[#allocation14 + $0xf0] sm:$0xff]
          %v1647 = vld [vmem:[#allocation14 + $0xf8] sm:$0xff]
          %v1648 = vld [vmem:[#allocation14 + $0x100] sm:$0xff]
          %v1649 = vld [vmem:[#allocation14 + $0x108] sm:$0xff]
          %v1650 = vld [vmem:[#allocation14 + $0x110] sm:$0xff]
          %v1651 = vld [vmem:[#allocation14 + $0x118] sm:$0xff]
          %v1652 = vld [vmem:[#allocation14 + $0x120] sm:$0xff]
          %v1653 = vld [vmem:[#allocation14 + $0x128] sm:$0xff]
          %v1654 = vld [vmem:[#allocation14 + $0x130] sm:$0xff]
          %v1655 = vld [vmem:[#allocation14 + $0x138] sm:$0xff]
          %v1656 = vld [vmem:[#allocation14 + $0x140] sm:$0xff]
          %v1657 = vld [vmem:[#allocation14 + $0x148] sm:$0xff]
          %v1658 = vld [vmem:[#allocation14 + $0x150] sm:$0xff]
          %v1659 = vld [vmem:[#allocation14 + $0x158] sm:$0xff]
          %v1660 = vld [vmem:[#allocation14 + $0x160] sm:$0xff]
          %v1661 = vld [vmem:[#allocation14 + $0x168] sm:$0xff]
          %v1662 = vld [vmem:[#allocation14 + $0x170] sm:$0xff]
          %v1663 = vld [vmem:[#allocation14 + $0x178] sm:$0xff]
          %v1664 = vld [vmem:[#allocation14 + $0x180] sm:$0xff]
          %v1665 = vld [vmem:[#allocation14 + $0x188] sm:$0xff]
          %v1666 = vld [vmem:[#allocation14 + $0x190] sm:$0xff]
          %v1667 = vld [vmem:[#allocation14 + $0x198] sm:$0xff]
          %v1668 = vld [vmem:[#allocation14 + $0x1a0] sm:$0xff]
          %v1669 = vld [vmem:[#allocation14 + $0x1a8] sm:$0xff]
          %v1670 = vld [vmem:[#allocation14 + $0x1b0] sm:$0xff]
          %v1671 = vld [vmem:[#allocation14 + $0x1b8] sm:$0xff]
          %v1672 = vld [vmem:[#allocation14 + $0x1c0] sm:$0xff]
          %v1673 = vld [vmem:[#allocation14 + $0x1c8] sm:$0xff]
          %v1674 = vld [vmem:[#allocation14 + $0x1d0] sm:$0xff]
          %v1675 = vld [vmem:[#allocation14 + $0x1d8] sm:$0xff]
          %v1676 = vld [vmem:[#allocation14 + $0x1e0] sm:$0xff]
          %v1677 = vld [vmem:[#allocation14 + $0x1e8] sm:$0xff]
          %v1678 = vld [vmem:[#allocation14 + $0x1f0] sm:$0xff]
          %v1679 = vld [vmem:[#allocation14 + $0x1f8] sm:$0xff]
          %v1744 = vunpack.c.l.b16 %v1616
          %v1745 = vunpack.c.h.b16 %v1616
          %v1746 = vunpack.c.l.b16 %v1617
          %v1747 = vunpack.c.h.b16 %v1617
          %v1748 = vunpack.c.l.b16 %v1618
          %v1749 = vunpack.c.h.b16 %v1618
          %v1750 = vunpack.c.l.b16 %v1619
          %v1751 = vunpack.c.h.b16 %v1619
          %v1752 = vunpack.c.l.b16 %v1620
          %v1753 = vunpack.c.h.b16 %v1620
          %v1754 = vunpack.c.l.b16 %v1621
          %v1755 = vunpack.c.h.b16 %v1621
          %v1756 = vunpack.c.l.b16 %v1622
          %v1757 = vunpack.c.h.b16 %v1622
          %v1758 = vunpack.c.l.b16 %v1623
          %v1759 = vunpack.c.h.b16 %v1623
          %v1760 = vunpack.c.l.b16 %v1624
          %v1761 = vunpack.c.h.b16 %v1624
          %v1762 = vunpack.c.l.b16 %v1625
          %v1763 = vunpack.c.h.b16 %v1625
          %v1764 = vunpack.c.l.b16 %v1626
          %v1765 = vunpack.c.h.b16 %v1626
          %v1766 = vunpack.c.l.b16 %v1627
          %v1767 = vunpack.c.h.b16 %v1627
          %v1768 = vunpack.c.l.b16 %v1628
          %v1769 = vunpack.c.h.b16 %v1628
          %v1770 = vunpack.c.l.b16 %v1629
          %v1771 = vunpack.c.h.b16 %v1629
          %v1772 = vunpack.c.l.b16 %v1630
          %v1773 = vunpack.c.h.b16 %v1630
          %v1774 = vunpack.c.l.b16 %v1631
          %v1775 = vunpack.c.h.b16 %v1631
          %v1776 = vunpack.c.l.b16 %v1632
          %v1777 = vunpack.c.h.b16 %v1632
          %v1778 = vunpack.c.l.b16 %v1633
          %v1779 = vunpack.c.h.b16 %v1633
          %v1780 = vunpack.c.l.b16 %v1634
          %v1781 = vunpack.c.h.b16 %v1634
          %v1782 = vunpack.c.l.b16 %v1635
          %v1783 = vunpack.c.h.b16 %v1635
          %v1784 = vunpack.c.l.b16 %v1636
          %v1785 = vunpack.c.h.b16 %v1636
          %v1786 = vunpack.c.l.b16 %v1637
          %v1787 = vunpack.c.h.b16 %v1637
          %v1788 = vunpack.c.l.b16 %v1638
          %v1789 = vunpack.c.h.b16 %v1638
          %v1790 = vunpack.c.l.b16 %v1639
          %v1791 = vunpack.c.h.b16 %v1639
          %v1792 = vunpack.c.l.b16 %v1640
          %v1793 = vunpack.c.h.b16 %v1640
          %v1794 = vunpack.c.l.b16 %v1641
          %v1795 = vunpack.c.h.b16 %v1641
          %v1796 = vunpack.c.l.b16 %v1642
          %v1797 = vunpack.c.h.b16 %v1642
          %v1798 = vunpack.c.l.b16 %v1643
          %v1799 = vunpack.c.h.b16 %v1643
          %v1800 = vunpack.c.l.b16 %v1644
          %v1801 = vunpack.c.h.b16 %v1644
          %v1802 = vunpack.c.l.b16 %v1645
          %v1803 = vunpack.c.h.b16 %v1645
          %v1804 = vunpack.c.l.b16 %v1646
          %v1805 = vunpack.c.h.b16 %v1646
          %v1806 = vunpack.c.l.b16 %v1647
          %v1807 = vunpack.c.h.b16 %v1647
          %v1808 = vunpack.c.l.b16 %v1648
          %v1809 = vunpack.c.h.b16 %v1648
          %v1810 = vunpack.c.l.b16 %v1649
          %v1811 = vunpack.c.h.b16 %v1649
          %v1812 = vunpack.c.l.b16 %v1650
          %v1813 = vunpack.c.h.b16 %v1650
          %v1814 = vunpack.c.l.b16 %v1651
          %v1815 = vunpack.c.h.b16 %v1651
          %v1816 = vunpack.c.l.b16 %v1652
          %v1817 = vunpack.c.h.b16 %v1652
          %v1818 = vunpack.c.l.b16 %v1653
          %v1819 = vunpack.c.h.b16 %v1653
          %v1820 = vunpack.c.l.b16 %v1654
          %v1821 = vunpack.c.h.b16 %v1654
          %v1822 = vunpack.c.l.b16 %v1655
          %v1823 = vunpack.c.h.b16 %v1655
          %v1824 = vunpack.c.l.b16 %v1656
          %v1825 = vunpack.c.h.b16 %v1656
          %v1826 = vunpack.c.l.b16 %v1657
          %v1827 = vunpack.c.h.b16 %v1657
          %v1828 = vunpack.c.l.b16 %v1658
          %v1829 = vunpack.c.h.b16 %v1658
          %v1830 = vunpack.c.l.b16 %v1659
          %v1831 = vunpack.c.h.b16 %v1659
          %v1832 = vunpack.c.l.b16 %v1660
          %v1833 = vunpack.c.h.b16 %v1660
          %v1834 = vunpack.c.l.b16 %v1661
          %v1835 = vunpack.c.h.b16 %v1661
          %v1836 = vunpack.c.l.b16 %v1662
          %v1837 = vunpack.c.h.b16 %v1662
          %v1838 = vunpack.c.l.b16 %v1663
          %v1839 = vunpack.c.h.b16 %v1663
          %v1840 = vunpack.c.l.b16 %v1664
          %v1841 = vunpack.c.h.b16 %v1664
          %v1842 = vunpack.c.l.b16 %v1665
          %v1843 = vunpack.c.h.b16 %v1665
          %v1844 = vunpack.c.l.b16 %v1666
          %v1845 = vunpack.c.h.b16 %v1666
          %v1846 = vunpack.c.l.b16 %v1667
          %v1847 = vunpack.c.h.b16 %v1667
          %v1848 = vunpack.c.l.b16 %v1668
          %v1849 = vunpack.c.h.b16 %v1668
          %v1850 = vunpack.c.l.b16 %v1669
          %v1851 = vunpack.c.h.b16 %v1669
          %v1852 = vunpack.c.l.b16 %v1670
          %v1853 = vunpack.c.h.b16 %v1670
          %v1854 = vunpack.c.l.b16 %v1671
          %v1855 = vunpack.c.h.b16 %v1671
          %v1856 = vunpack.c.l.b16 %v1672
          %v1857 = vunpack.c.h.b16 %v1672
          %v1858 = vunpack.c.l.b16 %v1673
          %v1859 = vunpack.c.h.b16 %v1673
          %v1860 = vunpack.c.l.b16 %v1674
          %v1861 = vunpack.c.h.b16 %v1674
          %v1862 = vunpack.c.l.b16 %v1675
          %v1863 = vunpack.c.h.b16 %v1675
          %v1864 = vunpack.c.l.b16 %v1676
          %v1865 = vunpack.c.h.b16 %v1676
          %v1866 = vunpack.c.l.b16 %v1677
          %v1867 = vunpack.c.h.b16 %v1677
          %v1868 = vunpack.c.l.b16 %v1678
          %v1869 = vunpack.c.h.b16 %v1678
          %v1870 = vunpack.c.l.b16 %v1679
          %v1871 = vunpack.c.h.b16 %v1679
          %v1872 = vpack.c.b16 %v1752, %v1744
          %v1873 = vpack.c.b16 %v1753, %v1745
          %v1874 = vpack.c.b16 %v1754, %v1746
          %v1875 = vpack.c.b16 %v1755, %v1747
          %v1876 = vpack.c.b16 %v1756, %v1748
          %v1877 = vpack.c.b16 %v1757, %v1749
          %v1878 = vpack.c.b16 %v1758, %v1750
          %v1879 = vpack.c.b16 %v1759, %v1751
          %v1880 = vpack.c.b16 %v1768, %v1760
          %v1881 = vpack.c.b16 %v1769, %v1761
          %v1882 = vpack.c.b16 %v1770, %v1762
          %v1883 = vpack.c.b16 %v1771, %v1763
          %v1884 = vpack.c.b16 %v1772, %v1764
          %v1885 = vpack.c.b16 %v1773, %v1765
          %v1886 = vpack.c.b16 %v1774, %v1766
          %v1887 = vpack.c.b16 %v1775, %v1767
          %v1888 = vpack.c.b16 %v1784, %v1776
          %v1889 = vpack.c.b16 %v1785, %v1777
          %v1890 = vpack.c.b16 %v1786, %v1778
          %v1891 = vpack.c.b16 %v1787, %v1779
          %v1892 = vpack.c.b16 %v1788, %v1780
          %v1893 = vpack.c.b16 %v1789, %v1781
          %v1894 = vpack.c.b16 %v1790, %v1782
          %v1895 = vpack.c.b16 %v1791, %v1783
          %v1896 = vpack.c.b16 %v1800, %v1792
          %v1897 = vpack.c.b16 %v1801, %v1793
          %v1898 = vpack.c.b16 %v1802, %v1794
          %v1899 = vpack.c.b16 %v1803, %v1795
          %v1900 = vpack.c.b16 %v1804, %v1796
          %v1901 = vpack.c.b16 %v1805, %v1797
          %v1902 = vpack.c.b16 %v1806, %v1798
          %v1903 = vpack.c.b16 %v1807, %v1799
          %v1904 = vpack.c.b16 %v1816, %v1808
          %v1905 = vpack.c.b16 %v1817, %v1809
          %v1906 = vpack.c.b16 %v1818, %v1810
          %v1907 = vpack.c.b16 %v1819, %v1811
          %v1908 = vpack.c.b16 %v1820, %v1812
          %v1909 = vpack.c.b16 %v1821, %v1813
          %v1910 = vpack.c.b16 %v1822, %v1814
          %v1911 = vpack.c.b16 %v1823, %v1815
          %v1912 = vpack.c.b16 %v1832, %v1824
          %v1913 = vpack.c.b16 %v1833, %v1825
          %v1914 = vpack.c.b16 %v1834, %v1826
          %v1915 = vpack.c.b16 %v1835, %v1827
          %v1916 = vpack.c.b16 %v1836, %v1828
          %v1917 = vpack.c.b16 %v1837, %v1829
          %v1918 = vpack.c.b16 %v1838, %v1830
          %v1919 = vpack.c.b16 %v1839, %v1831
          %v1920 = vpack.c.b16 %v1848, %v1840
          %v1921 = vpack.c.b16 %v1849, %v1841
          %v1922 = vpack.c.b16 %v1850, %v1842
          %v1923 = vpack.c.b16 %v1851, %v1843
          %v1924 = vpack.c.b16 %v1852, %v1844
          %v1925 = vpack.c.b16 %v1853, %v1845
          %v1926 = vpack.c.b16 %v1854, %v1846
          %v1927 = vpack.c.b16 %v1855, %v1847
          %v1928 = vpack.c.b16 %v1864, %v1856
          %v1929 = vpack.c.b16 %v1865, %v1857
          %v1930 = vpack.c.b16 %v1866, %v1858
          %v1931 = vpack.c.b16 %v1867, %v1859
          %v1932 = vpack.c.b16 %v1868, %v1860
          %v1933 = vpack.c.b16 %v1869, %v1861
          %v1934 = vpack.c.b16 %v1870, %v1862
          %v1935 = vpack.c.b16 %v1871, %v1863
          %2000 = vmatpush.bf16.msra.mxu0 %v1928
          %2001 = vmatpush.bf16.msra.mxu0 %v1920
          %2002 = vmatpush.bf16.msra.mxu0 %v1912
          %2003 = vmatpush.bf16.msra.mxu0 %v1904
          %2004 = vmatpush.bf16.msra.mxu0 %v1896
          %2005 = vmatpush.bf16.msra.mxu0 %v1888
          %2006 = vmatpush.bf16.msra.mxu0 %v1880
          %2007 = vmatpush.bf16.msra.mxu0 %v1872
          %2008 = vmatmul.bf16.gmra.mxu0 %v1615
          %v2009 = vpop.f32.mrf.mxu0
          %v2010 = vadd.f32 0.0, %v2009
          %v2011 = vpop.f32.mrf.mxu0
          %v2012 = vadd.f32 0.0, %v2011
          %2013 = vdwg.mxu0
          %2014 = vmatpush.bf16.msra.mxu0 %v1929
          %2015 = vmatpush.bf16.msra.mxu0 %v1921
          %2016 = vmatpush.bf16.msra.mxu0 %v1913
          %2017 = vmatpush.bf16.msra.mxu0 %v1905
          %2018 = vmatpush.bf16.msra.mxu0 %v1897
          %2019 = vmatpush.bf16.msra.mxu0 %v1889
          %2020 = vmatpush.bf16.msra.mxu0 %v1881
          %2021 = vmatpush.bf16.msra.mxu0 %v1873
          %2022 = vmatmul.bf16.gmra.mxu0 %v1615
          %v2023 = vpop.f32.mrf.mxu0
          %v2024 = vadd.f32 0.0, %v2023
          %v2025 = vpop.f32.mrf.mxu0
          %v2026 = vadd.f32 0.0, %v2025
          %2027 = vdwg.mxu0
          %2028 = vmatpush.bf16.msra.mxu0 %v1930
          %2029 = vmatpush.bf16.msra.mxu0 %v1922
          %2030 = vmatpush.bf16.msra.mxu0 %v1914
          %2031 = vmatpush.bf16.msra.mxu0 %v1906
          %2032 = vmatpush.bf16.msra.mxu0 %v1898
          %2033 = vmatpush.bf16.msra.mxu0 %v1890
          %2034 = vmatpush.bf16.msra.mxu0 %v1882
          %2035 = vmatpush.bf16.msra.mxu0 %v1874
          %2036 = vmatmul.bf16.gmra.mxu0 %v1615
          %v2037 = vpop.f32.mrf.mxu0
          %v2038 = vadd.f32 0.0, %v2037
          %v2039 = vpop.f32.mrf.mxu0
          %v2040 = vadd.f32 0.0, %v2039
          %2041 = vdwg.mxu0
          %2042 = vmatpush.bf16.msra.mxu0 %v1931
          %2043 = vmatpush.bf16.msra.mxu0 %v1923
          %2044 = vmatpush.bf16.msra.mxu0 %v1915
          %2045 = vmatpush.bf16.msra.mxu0 %v1907
          %2046 = vmatpush.bf16.msra.mxu0 %v1899
          %2047 = vmatpush.bf16.msra.mxu0 %v1891
          %2048 = vmatpush.bf16.msra.mxu0 %v1883
          %2049 = vmatpush.bf16.msra.mxu0 %v1875
          %2050 = vmatmul.bf16.gmra.mxu0 %v1615
          %v2051 = vpop.f32.mrf.mxu0
          %v2052 = vadd.f32 0.0, %v2051
          %v2053 = vpop.f32.mrf.mxu0
          %v2054 = vadd.f32 0.0, %v2053
          %2055 = vdwg.mxu0
          %2056 = vmatpush.bf16.msra.mxu0 %v1932
          %2057 = vmatpush.bf16.msra.mxu0 %v1924
          %2058 = vmatpush.bf16.msra.mxu0 %v1916
          %2059 = vmatpush.bf16.msra.mxu0 %v1908
          %2060 = vmatpush.bf16.msra.mxu0 %v1900
          %2061 = vmatpush.bf16.msra.mxu0 %v1892
          %2062 = vmatpush.bf16.msra.mxu0 %v1884
          %2063 = vmatpush.bf16.msra.mxu0 %v1876
          %2064 = vmatmul.bf16.gmra.mxu0 %v1615
          %v2065 = vpop.f32.mrf.mxu0
          %v2066 = vadd.f32 0.0, %v2065
          %v2067 = vpop.f32.mrf.mxu0
          %v2068 = vadd.f32 0.0, %v2067
          %2069 = vdwg.mxu0
          %2070 = vmatpush.bf16.msra.mxu0 %v1933
          %2071 = vmatpush.bf16.msra.mxu0 %v1925
          %2072 = vmatpush.bf16.msra.mxu0 %v1917
          %2073 = vmatpush.bf16.msra.mxu0 %v1909
          %2074 = vmatpush.bf16.msra.mxu0 %v1901
          %2075 = vmatpush.bf16.msra.mxu0 %v1893
          %2076 = vmatpush.bf16.msra.mxu0 %v1885
          %2077 = vmatpush.bf16.msra.mxu0 %v1877
          %2078 = vmatmul.bf16.gmra.mxu0 %v1615
          %v2079 = vpop.f32.mrf.mxu0
          %v2080 = vadd.f32 0.0, %v2079
          %v2081 = vpop.f32.mrf.mxu0
          %v2082 = vadd.f32 0.0, %v2081
          %2083 = vdwg.mxu0
          %2084 = vmatpush.bf16.msra.mxu0 %v1934
          %2085 = vmatpush.bf16.msra.mxu0 %v1926
          %2086 = vmatpush.bf16.msra.mxu0 %v1918
          %2087 = vmatpush.bf16.msra.mxu0 %v1910
          %2088 = vmatpush.bf16.msra.mxu0 %v1902
          %2089 = vmatpush.bf16.msra.mxu0 %v1894
          %2090 = vmatpush.bf16.msra.mxu0 %v1886
          %2091 = vmatpush.bf16.msra.mxu0 %v1878
          %2092 = vmatmul.bf16.gmra.mxu0 %v1615
          %v2093 = vpop.f32.mrf.mxu0
          %v2094 = vadd.f32 0.0, %v2093
          %v2095 = vpop.f32.mrf.mxu0
          %v2096 = vadd.f32 0.0, %v2095
          %2097 = vdwg.mxu0
          %2098 = vmatpush.bf16.msra.mxu0 %v1935
          %2099 = vmatpush.bf16.msra.mxu0 %v1927
          %2100 = vmatpush.bf16.msra.mxu0 %v1919
          %2101 = vmatpush.bf16.msra.mxu0 %v1911
          %2102 = vmatpush.bf16.msra.mxu0 %v1903
          %2103 = vmatpush.bf16.msra.mxu0 %v1895
          %2104 = vmatpush.bf16.msra.mxu0 %v1887
          %2105 = vmatpush.bf16.msra.mxu0 %v1879
          %2106 = vmatmul.bf16.gmra.mxu0 %v1615
          %v2107 = vpop.f32.mrf.mxu0
          %v2108 = vadd.f32 0.0, %v2107
          %v2109 = vpop.f32.mrf.mxu0
          %v2110 = vadd.f32 0.0, %v2109
          %2111 = vdwg.mxu0
          %v2112 = vxor.u32 %v2010, 2147483648
          %v2113 = vxor.u32 %v2024, 2147483648
          %v2114 = vxor.u32 %v2038, 2147483648
          %v2115 = vxor.u32 %v2052, 2147483648
          %v2116 = vxor.u32 %v2012, 2147483648
          %v2117 = vxor.u32 %v2026, 2147483648
          %v2118 = vxor.u32 %v2040, 2147483648
          %v2119 = vxor.u32 %v2054, 2147483648
          %v2120 = vmul.f32 %v2112, 1.442695
          %v2121 = vpow.pop %v2120
          %v2122 = vmul.f32 %v2113, 1.442695
          %v2123 = vpow.pop %v2122
          %v2124 = vmul.f32 %v2114, 1.442695
          %v2125 = vpow.pop %v2124
          %v2126 = vmul.f32 %v2115, 1.442695
          %v2127 = vpow.pop %v2126
          %v2128 = vmul.f32 %v2116, 1.442695
          %v2129 = vpow.pop %v2128
          %v2130 = vmul.f32 %v2117, 1.442695
          %v2131 = vpow.pop %v2130
          %v2132 = vmul.f32 %v2118, 1.442695
          %v2133 = vpow.pop %v2132
          %v2134 = vmul.f32 %v2119, 1.442695
          %v2135 = vpow.pop %v2134
          %v2136 = vadd.f32 %v2121, 1.0
          %v2137 = vadd.f32 %v2123, 1.0
          %v2138 = vadd.f32 %v2125, 1.0
          %v2139 = vadd.f32 %v2127, 1.0
          %v2140 = vadd.f32 %v2129, 1.0
          %v2141 = vadd.f32 %v2131, 1.0
          %v2142 = vadd.f32 %v2133, 1.0
          %v2143 = vadd.f32 %v2135, 1.0
          %v2144 = vrcp.pop %v2136
          %v2145 = vmul.f32 %v2136, %v2144
          %v2146 = vsub.f32 1.0, %v2145
          %v2147 = vmul.f32 %v2144, %v2146
          %v2148 = vadd.f32 %v2144, %v2147
          %vm2149 = vweird.f32 %v2136
          %vm2150 = vweird.f32 %v2144
          %vm2151 = vmor %vm2149, %vm2150
          %v2152 = vsel %vm2151, %v2144, %v2148
          %v2153 = vand.u32 2147483647, %v2136
          %vm2154 = vcmp.eq.f32.partialorder %v2153, 8.507059e+37
          %v2155 = vand.u32 %v2136, 2147483648
          %v2156 = vor.u32 1.1754944e-38, %v2155
          %v2157 = vsel %vm2154, %v2156, %v2152
          %v2158 = vmul.f32 1.0, %v2157
          %v2159 = vrcp.pop %v2137
          %v2160 = vmul.f32 %v2137, %v2159
          %v2161 = vsub.f32 1.0, %v2160
          %v2162 = vmul.f32 %v2159, %v2161
          %v2163 = vadd.f32 %v2159, %v2162
          %vm2164 = vweird.f32 %v2137
          %vm2165 = vweird.f32 %v2159
          %vm2166 = vmor %vm2164, %vm2165
          %v2167 = vsel %vm2166, %v2159, %v2163
          %v2168 = vand.u32 2147483647, %v2137
          %vm2169 = vcmp.eq.f32.partialorder %v2168, 8.507059e+37
          %v2170 = vand.u32 %v2137, 2147483648
          %v2171 = vor.u32 1.1754944e-38, %v2170
          %v2172 = vsel %vm2169, %v2171, %v2167
          %v2173 = vmul.f32 1.0, %v2172
          %v2174 = vrcp.pop %v2138
          %v2175 = vmul.f32 %v2138, %v2174
          %v2176 = vsub.f32 1.0, %v2175
          %v2177 = vmul.f32 %v2174, %v2176
          %v2178 = vadd.f32 %v2174, %v2177
          %vm2179 = vweird.f32 %v2138
          %vm2180 = vweird.f32 %v2174
          %vm2181 = vmor %vm2179, %vm2180
          %v2182 = vsel %vm2181, %v2174, %v2178
          %v2183 = vand.u32 2147483647, %v2138
          %vm2184 = vcmp.eq.f32.partialorder %v2183, 8.507059e+37
          %v2185 = vand.u32 %v2138, 2147483648
          %v2186 = vor.u32 1.1754944e-38, %v2185
          %v2187 = vsel %vm2184, %v2186, %v2182
          %v2188 = vmul.f32 1.0, %v2187
          %v2189 = vrcp.pop %v2139
          %v2190 = vmul.f32 %v2139, %v2189
          %v2191 = vsub.f32 1.0, %v2190
          %v2192 = vmul.f32 %v2189, %v2191
          %v2193 = vadd.f32 %v2189, %v2192
          %vm2194 = vweird.f32 %v2139
          %vm2195 = vweird.f32 %v2189
          %vm2196 = vmor %vm2194, %vm2195
          %v2197 = vsel %vm2196, %v2189, %v2193
          %v2198 = vand.u32 2147483647, %v2139
          %vm2199 = vcmp.eq.f32.partialorder %v2198, 8.507059e+37
          %v2200 = vand.u32 %v2139, 2147483648
          %v2201 = vor.u32 1.1754944e-38, %v2200
          %v2202 = vsel %vm2199, %v2201, %v2197
          %v2203 = vmul.f32 1.0, %v2202
          %v2204 = vrcp.pop %v2140
          %v2205 = vmul.f32 %v2140, %v2204
          %v2206 = vsub.f32 1.0, %v2205
          %v2207 = vmul.f32 %v2204, %v2206
          %v2208 = vadd.f32 %v2204, %v2207
          %vm2209 = vweird.f32 %v2140
          %vm2210 = vweird.f32 %v2204
          %vm2211 = vmor %vm2209, %vm2210
          %v2212 = vsel %vm2211, %v2204, %v2208
          %v2213 = vand.u32 2147483647, %v2140
          %vm2214 = vcmp.eq.f32.partialorder %v2213, 8.507059e+37
          %v2215 = vand.u32 %v2140, 2147483648
          %v2216 = vor.u32 1.1754944e-38, %v2215
          %v2217 = vsel %vm2214, %v2216, %v2212
          %v2218 = vmul.f32 1.0, %v2217
          %v2219 = vrcp.pop %v2141
          %v2220 = vmul.f32 %v2141, %v2219
          %v2221 = vsub.f32 1.0, %v2220
          %v2222 = vmul.f32 %v2219, %v2221
          %v2223 = vadd.f32 %v2219, %v2222
          %vm2224 = vweird.f32 %v2141
          %vm2225 = vweird.f32 %v2219
          %vm2226 = vmor %vm2224, %vm2225
          %v2227 = vsel %vm2226, %v2219, %v2223
          %v2228 = vand.u32 2147483647, %v2141
          %vm2229 = vcmp.eq.f32.partialorder %v2228, 8.507059e+37
          %v2230 = vand.u32 %v2141, 2147483648
          %v2231 = vor.u32 1.1754944e-38, %v2230
          %v2232 = vsel %vm2229, %v2231, %v2227
          %v2233 = vmul.f32 1.0, %v2232
          %v2234 = vrcp.pop %v2142
          %v2235 = vmul.f32 %v2142, %v2234
          %v2236 = vsub.f32 1.0, %v2235
          %v2237 = vmul.f32 %v2234, %v2236
          %v2238 = vadd.f32 %v2234, %v2237
          %vm2239 = vweird.f32 %v2142
          %vm2240 = vweird.f32 %v2234
          %vm2241 = vmor %vm2239, %vm2240
          %v2242 = vsel %vm2241, %v2234, %v2238
          %v2243 = vand.u32 2147483647, %v2142
          %vm2244 = vcmp.eq.f32.partialorder %v2243, 8.507059e+37
          %v2245 = vand.u32 %v2142, 2147483648
          %v2246 = vor.u32 1.1754944e-38, %v2245
          %v2247 = vsel %vm2244, %v2246, %v2242
          %v2248 = vmul.f32 1.0, %v2247
          %v2249 = vrcp.pop %v2143
          %v2250 = vmul.f32 %v2143, %v2249
          %v2251 = vsub.f32 1.0, %v2250
          %v2252 = vmul.f32 %v2249, %v2251
          %v2253 = vadd.f32 %v2249, %v2252
          %vm2254 = vweird.f32 %v2143
          %vm2255 = vweird.f32 %v2249
          %vm2256 = vmor %vm2254, %vm2255
          %v2257 = vsel %vm2256, %v2249, %v2253
          %v2258 = vand.u32 2147483647, %v2143
          %vm2259 = vcmp.eq.f32.partialorder %v2258, 8.507059e+37
          %v2260 = vand.u32 %v2143, 2147483648
          %v2261 = vor.u32 1.1754944e-38, %v2260
          %v2262 = vsel %vm2259, %v2261, %v2257
          %v2263 = vmul.f32 1.0, %v2262
          %v2264 = vmul.f32 %v2010, %v2158
          %v2265 = vmul.f32 %v2024, %v2173
          %v2266 = vmul.f32 %v2038, %v2188
          %v2267 = vmul.f32 %v2052, %v2203
          %v2268 = vmul.f32 %v2012, %v2218
          %v2269 = vmul.f32 %v2026, %v2233
          %v2270 = vmul.f32 %v2040, %v2248
          %v2271 = vmul.f32 %v2054, %v2263
          %v2272 = vmul.f32 %v2264, %v2066
          %v2273 = vmul.f32 %v2265, %v2080
          %v2274 = vmul.f32 %v2266, %v2094
          %v2275 = vmul.f32 %v2267, %v2108
          %v2276 = vmul.f32 %v2268, %v2068
          %v2277 = vmul.f32 %v2269, %v2082
          %v2278 = vmul.f32 %v2270, %v2096
          %v2279 = vmul.f32 %v2271, %v2110
          %v2280 = vpack.c.bf16 %v2276, %v2272
          %v2281 = vpack.c.bf16 %v2277, %v2273
          %v2282 = vpack.c.bf16 %v2278, %v2274
          %v2283 = vpack.c.bf16 %v2279, %v2275
          %v2284 = vld [vmem:[#allocation15] sm:$0xf]
          %v2285 = vld [vmem:[#allocation15 + $0x4] sm:$0xf]
          %v2286 = vld [vmem:[#allocation15 + $0x8] sm:$0xf]
          %v2287 = vld [vmem:[#allocation15 + $0xc] sm:$0xf]
          %v2288 = vld [vmem:[#allocation15 + $0x10] sm:$0xf]
          %v2289 = vld [vmem:[#allocation15 + $0x14] sm:$0xf]
          %v2290 = vld [vmem:[#allocation15 + $0x18] sm:$0xf]
          %v2291 = vld [vmem:[#allocation15 + $0x1c] sm:$0xf]
          %v2292 = vld [vmem:[#allocation15 + $0x20] sm:$0xf]
          %v2293 = vld [vmem:[#allocation15 + $0x24] sm:$0xf]
          %v2294 = vld [vmem:[#allocation15 + $0x28] sm:$0xf]
          %v2295 = vld [vmem:[#allocation15 + $0x2c] sm:$0xf]
          %v2296 = vld [vmem:[#allocation15 + $0x30] sm:$0xf]
          %v2297 = vld [vmem:[#allocation15 + $0x34] sm:$0xf]
          %v2298 = vld [vmem:[#allocation15 + $0x38] sm:$0xf]
          %v2299 = vld [vmem:[#allocation15 + $0x3c] sm:$0xf]
          %v2300 = vld [vmem:[#allocation15 + $0x40] sm:$0xf]
          %v2301 = vld [vmem:[#allocation15 + $0x44] sm:$0xf]
          %v2302 = vld [vmem:[#allocation15 + $0x48] sm:$0xf]
          %v2303 = vld [vmem:[#allocation15 + $0x4c] sm:$0xf]
          %v2304 = vld [vmem:[#allocation15 + $0x50] sm:$0xf]
          %v2305 = vld [vmem:[#allocation15 + $0x54] sm:$0xf]
          %v2306 = vld [vmem:[#allocation15 + $0x58] sm:$0xf]
          %v2307 = vld [vmem:[#allocation15 + $0x5c] sm:$0xf]
          %v2308 = vld [vmem:[#allocation15 + $0x60] sm:$0xf]
          %v2309 = vld [vmem:[#allocation15 + $0x64] sm:$0xf]
          %v2310 = vld [vmem:[#allocation15 + $0x68] sm:$0xf]
          %v2311 = vld [vmem:[#allocation15 + $0x6c] sm:$0xf]
          %v2312 = vld [vmem:[#allocation15 + $0x70] sm:$0xf]
          %v2313 = vld [vmem:[#allocation15 + $0x74] sm:$0xf]
          %v2314 = vld [vmem:[#allocation15 + $0x78] sm:$0xf]
          %v2315 = vld [vmem:[#allocation15 + $0x7c] sm:$0xf]
          %v2316 = vld [vmem:[#allocation15 + $0x80] sm:$0xf]
          %v2317 = vld [vmem:[#allocation15 + $0x84] sm:$0xf]
          %v2318 = vld [vmem:[#allocation15 + $0x88] sm:$0xf]
          %v2319 = vld [vmem:[#allocation15 + $0x8c] sm:$0xf]
          %v2320 = vld [vmem:[#allocation15 + $0x90] sm:$0xf]
          %v2321 = vld [vmem:[#allocation15 + $0x94] sm:$0xf]
          %v2322 = vld [vmem:[#allocation15 + $0x98] sm:$0xf]
          %v2323 = vld [vmem:[#allocation15 + $0x9c] sm:$0xf]
          %v2324 = vld [vmem:[#allocation15 + $0xa0] sm:$0xf]
          %v2325 = vld [vmem:[#allocation15 + $0xa4] sm:$0xf]
          %v2326 = vld [vmem:[#allocation15 + $0xa8] sm:$0xf]
          %v2327 = vld [vmem:[#allocation15 + $0xac] sm:$0xf]
          %v2328 = vld [vmem:[#allocation15 + $0xb0] sm:$0xf]
          %v2329 = vld [vmem:[#allocation15 + $0xb4] sm:$0xf]
          %v2330 = vld [vmem:[#allocation15 + $0xb8] sm:$0xf]
          %v2331 = vld [vmem:[#allocation15 + $0xbc] sm:$0xf]
          %v2332 = vld [vmem:[#allocation15 + $0xc0] sm:$0xf]
          %v2333 = vld [vmem:[#allocation15 + $0xc4] sm:$0xf]
          %v2334 = vld [vmem:[#allocation15 + $0xc8] sm:$0xf]
          %v2335 = vld [vmem:[#allocation15 + $0xcc] sm:$0xf]
          %v2336 = vld [vmem:[#allocation15 + $0xd0] sm:$0xf]
          %v2337 = vld [vmem:[#allocation15 + $0xd4] sm:$0xf]
          %v2338 = vld [vmem:[#allocation15 + $0xd8] sm:$0xf]
          %v2339 = vld [vmem:[#allocation15 + $0xdc] sm:$0xf]
          %v2340 = vld [vmem:[#allocation15 + $0xe0] sm:$0xf]
          %v2341 = vld [vmem:[#allocation15 + $0xe4] sm:$0xf]
          %v2342 = vld [vmem:[#allocation15 + $0xe8] sm:$0xf]
          %v2343 = vld [vmem:[#allocation15 + $0xec] sm:$0xf]
          %v2344 = vld [vmem:[#allocation15 + $0xf0] sm:$0xf]
          %v2345 = vld [vmem:[#allocation15 + $0xf4] sm:$0xf]
          %v2346 = vld [vmem:[#allocation15 + $0xf8] sm:$0xf]
          %v2347 = vld [vmem:[#allocation15 + $0xfc] sm:$0xf]
          %v2412 = vunpack.c.l.b16 %v2284
          %v2413 = vunpack.c.l.b16 %v2285
          %v2414 = vunpack.c.l.b16 %v2286
          %v2415 = vunpack.c.l.b16 %v2287
          %v2416 = vunpack.c.l.b16 %v2288
          %v2417 = vunpack.c.l.b16 %v2289
          %v2418 = vunpack.c.l.b16 %v2290
          %v2419 = vunpack.c.l.b16 %v2291
          %v2420 = vunpack.c.l.b16 %v2292
          %v2421 = vunpack.c.l.b16 %v2293
          %v2422 = vunpack.c.l.b16 %v2294
          %v2423 = vunpack.c.l.b16 %v2295
          %v2424 = vunpack.c.l.b16 %v2296
          %v2425 = vunpack.c.l.b16 %v2297
          %v2426 = vunpack.c.l.b16 %v2298
          %v2427 = vunpack.c.l.b16 %v2299
          %v2428 = vunpack.c.l.b16 %v2300
          %v2429 = vunpack.c.l.b16 %v2301
          %v2430 = vunpack.c.l.b16 %v2302
          %v2431 = vunpack.c.l.b16 %v2303
          %v2432 = vunpack.c.l.b16 %v2304
          %v2433 = vunpack.c.l.b16 %v2305
          %v2434 = vunpack.c.l.b16 %v2306
          %v2435 = vunpack.c.l.b16 %v2307
          %v2436 = vunpack.c.l.b16 %v2308
          %v2437 = vunpack.c.l.b16 %v2309
          %v2438 = vunpack.c.l.b16 %v2310
          %v2439 = vunpack.c.l.b16 %v2311
          %v2440 = vunpack.c.l.b16 %v2312
          %v2441 = vunpack.c.l.b16 %v2313
          %v2442 = vunpack.c.l.b16 %v2314
          %v2443 = vunpack.c.l.b16 %v2315
          %v2444 = vunpack.c.l.b16 %v2316
          %v2445 = vunpack.c.l.b16 %v2317
          %v2446 = vunpack.c.l.b16 %v2318
          %v2447 = vunpack.c.l.b16 %v2319
          %v2448 = vunpack.c.l.b16 %v2320
          %v2449 = vunpack.c.l.b16 %v2321
          %v2450 = vunpack.c.l.b16 %v2322
          %v2451 = vunpack.c.l.b16 %v2323
          %v2452 = vunpack.c.l.b16 %v2324
          %v2453 = vunpack.c.l.b16 %v2325
          %v2454 = vunpack.c.l.b16 %v2326
          %v2455 = vunpack.c.l.b16 %v2327
          %v2456 = vunpack.c.l.b16 %v2328
          %v2457 = vunpack.c.l.b16 %v2329
          %v2458 = vunpack.c.l.b16 %v2330
          %v2459 = vunpack.c.l.b16 %v2331
          %v2460 = vunpack.c.l.b16 %v2332
          %v2461 = vunpack.c.l.b16 %v2333
          %v2462 = vunpack.c.l.b16 %v2334
          %v2463 = vunpack.c.l.b16 %v2335
          %v2464 = vunpack.c.l.b16 %v2336
          %v2465 = vunpack.c.l.b16 %v2337
          %v2466 = vunpack.c.l.b16 %v2338
          %v2467 = vunpack.c.l.b16 %v2339
          %v2468 = vunpack.c.l.b16 %v2340
          %v2469 = vunpack.c.l.b16 %v2341
          %v2470 = vunpack.c.l.b16 %v2342
          %v2471 = vunpack.c.l.b16 %v2343
          %v2472 = vunpack.c.l.b16 %v2344
          %v2473 = vunpack.c.l.b16 %v2345
          %v2474 = vunpack.c.l.b16 %v2346
          %v2475 = vunpack.c.l.b16 %v2347
          %v2476 = vpack.c.b16 %v2413, %v2412
          %v2477 = vpack.c.b16 %v2415, %v2414
          %v2478 = vpack.c.b16 %v2417, %v2416
          %v2479 = vpack.c.b16 %v2419, %v2418
          %v2480 = vpack.c.b16 %v2421, %v2420
          %v2481 = vpack.c.b16 %v2423, %v2422
          %v2482 = vpack.c.b16 %v2425, %v2424
          %v2483 = vpack.c.b16 %v2427, %v2426
          %v2484 = vpack.c.b16 %v2429, %v2428
          %v2485 = vpack.c.b16 %v2431, %v2430
          %v2486 = vpack.c.b16 %v2433, %v2432
          %v2487 = vpack.c.b16 %v2435, %v2434
          %v2488 = vpack.c.b16 %v2437, %v2436
          %v2489 = vpack.c.b16 %v2439, %v2438
          %v2490 = vpack.c.b16 %v2441, %v2440
          %v2491 = vpack.c.b16 %v2443, %v2442
          %v2492 = vpack.c.b16 %v2445, %v2444
          %v2493 = vpack.c.b16 %v2447, %v2446
          %v2494 = vpack.c.b16 %v2449, %v2448
          %v2495 = vpack.c.b16 %v2451, %v2450
          %v2496 = vpack.c.b16 %v2453, %v2452
          %v2497 = vpack.c.b16 %v2455, %v2454
          %v2498 = vpack.c.b16 %v2457, %v2456
          %v2499 = vpack.c.b16 %v2459, %v2458
          %v2500 = vpack.c.b16 %v2461, %v2460
          %v2501 = vpack.c.b16 %v2463, %v2462
          %v2502 = vpack.c.b16 %v2465, %v2464
          %v2503 = vpack.c.b16 %v2467, %v2466
          %v2504 = vpack.c.b16 %v2469, %v2468
          %v2505 = vpack.c.b16 %v2471, %v2470
          %v2506 = vpack.c.b16 %v2473, %v2472
          %v2507 = vpack.c.b16 %v2475, %v2474
          %2540 = vmatpush.bf16.msra.mxu0 %v2483
          %2541 = vmatpush.bf16.msra.mxu0 %v2482
          %2542 = vmatpush.bf16.msra.mxu0 %v2481
          %2543 = vmatpush.bf16.msra.mxu0 %v2480
          %2544 = vmatpush.bf16.msra.mxu0 %v2479
          %2545 = vmatpush.bf16.msra.mxu0 %v2478
          %2546 = vmatpush.bf16.msra.mxu0 %v2477
          %2547 = vmatpush.bf16.msra.mxu0 %v2476
          %2548 = vmatmul.bf16.gmra.mxu0 %v2280
          %v2549 = vpop.f32.mrf.mxu0
          %v2550 = vadd.f32 0.0, %v2549
          %v2551 = vpop.f32.mrf.mxu0
          %v2552 = vadd.f32 0.0, %v2551
          %2553 = vdwg.mxu0
          %2554 = vmatpush.bf16.msra.mxu0 %v2491
          %2555 = vmatpush.bf16.msra.mxu0 %v2490
          %2556 = vmatpush.bf16.msra.mxu0 %v2489
          %2557 = vmatpush.bf16.msra.mxu0 %v2488
          %2558 = vmatpush.bf16.msra.mxu0 %v2487
          %2559 = vmatpush.bf16.msra.mxu0 %v2486
          %2560 = vmatpush.bf16.msra.mxu0 %v2485
          %2561 = vmatpush.bf16.msra.mxu0 %v2484
          %2562 = vmatmul.bf16.gmra.mxu0 %v2281
          %v2563 = vpop.f32.mrf.mxu0
          %v2564 = vadd.f32 %v2550, %v2563
          %v2565 = vpop.f32.mrf.mxu0
          %v2566 = vadd.f32 %v2552, %v2565
          %2567 = vdwg.mxu0
          %2568 = vmatpush.bf16.msra.mxu0 %v2499
          %2569 = vmatpush.bf16.msra.mxu0 %v2498
          %2570 = vmatpush.bf16.msra.mxu0 %v2497
          %2571 = vmatpush.bf16.msra.mxu0 %v2496
          %2572 = vmatpush.bf16.msra.mxu0 %v2495
          %2573 = vmatpush.bf16.msra.mxu0 %v2494
          %2574 = vmatpush.bf16.msra.mxu0 %v2493
          %2575 = vmatpush.bf16.msra.mxu0 %v2492
          %2576 = vmatmul.bf16.gmra.mxu0 %v2282
          %v2577 = vpop.f32.mrf.mxu0
          %v2578 = vadd.f32 %v2564, %v2577
          %v2579 = vpop.f32.mrf.mxu0
          %v2580 = vadd.f32 %v2566, %v2579
          %2581 = vdwg.mxu0
          %2582 = vmatpush.bf16.msra.mxu0 %v2507
          %2583 = vmatpush.bf16.msra.mxu0 %v2506
          %2584 = vmatpush.bf16.msra.mxu0 %v2505
          %2585 = vmatpush.bf16.msra.mxu0 %v2504
          %2586 = vmatpush.bf16.msra.mxu0 %v2503
          %2587 = vmatpush.bf16.msra.mxu0 %v2502
          %2588 = vmatpush.bf16.msra.mxu0 %v2501
          %2589 = vmatpush.bf16.msra.mxu0 %v2500
          %2590 = vmatmul.bf16.gmra.mxu0 %v2283
          %v2591 = vpop.f32.mrf.mxu0
          %v2592 = vadd.f32 %v2578, %v2591
          %v2593 = vpop.f32.mrf.mxu0
          %v2594 = vadd.f32 %v2580, %v2593
          %2595 = vdwg.mxu0
          %v2596 = vperm.slane %v555, 5
          %v2597 = vmul.f32 %v2596, %v2592
          %v2598 = vmul.f32 %v2596, %v2594
          %v2599 = vadd.f32 %v1553, %v2597
          %v2600 = vadd.f32 %v1554, %v2598
          %2601 = vst [vmem:[%s532] sm:$0xff] %v2599
          %2602 = vst [vmem:[%s532 + $0x8] sm:$0xff] %v2600
        $region88: #{tpu_custom_call.1} parent=55 // pred_fallthru
          _
        %s2603 = sand.u32 %s281, 1
        %s2604 = scalar_lea.sflag [#allocation8], %s2603
        %s2605 = sand.u32 %s281, 1
        %s2606 = smul.addr %s2605, 16
        %s2607 = scalar_lea.vmem [#allocation17], %s2606
        // Predicated region
        $region89: #{tpu_custom_call.1} parent=55 // pred_check
          %p2608 = pneg %p291
        $region90: #{tpu_custom_call.1} parent=55 // pred_check_branch
          %2610 = sbr.rel (%p2608) target = $region92
        $region91: #{tpu_custom_call.1} parent=55 // pred_region
          %s2611 = smul.u32 %s38, %s37
          %s2612 = smul.u32 2, %s2611
          %2614 = vsyncadd %s2604, 0
          %s2615 = smul.addr %s36, 4
          %s2616 = sadd.s32 %s2612, %s2615
          %s2617 = smul.addr %s2616, 8
          %s2618 = scalar_lea.hbm %s9, %s2617
          %s2619 = sshll.u32 %s2607, 4
          %s2620 = int_to_ptr.vmem [resolvable:$true] %s2619
          %s2621 = sshll.u32 %s2618, 4
          %s2622 = int_to_ptr.hbm [resolvable:$true] %s2621
          %2627 = dma.vmem_to_hbm [thread:$0]  %s2620, 256, %s2622, %s2604, 128, 128, 8
        $region92: #{tpu_custom_call.1} parent=55 // pred_fallthru
          _
      $region56: #{tpu_custom_call.1} parent=5 // pred_fallthru
        _
      %p2628 = scmp.le.s32.totalorder 2, %s26
      // Predicated region
      $region93: #{tpu_custom_call.1} parent=5 // pred_check
        %p2629 = pneg %p2628
      $region94: #{tpu_custom_call.1} parent=5 // pred_check_branch
        %2631 = sbr.rel (%p2629) target = $region96
      $region95: #{tpu_custom_call.1} parent=5 // pred_region
        %s2632 = ssub.s32 %s26, 2
        // Predicated region
        $region97: #{tpu_custom_call.1} parent=95 // pred_check
          %p2633 = pneg %p297
        $region98: #{tpu_custom_call.1} parent=95 // pred_check_branch
          %2635 = sbr.rel (%p2633) target = $region100
        $region99: #{tpu_custom_call.1} parent=95 // pred_region
          %s2636 = sand.u32 %s282, 1
          %s2637 = scalar_lea.sflag [#allocation8], %s2636
          %s2638 = sand.u32 %s282, 1
          %s2639 = smul.addr %s2638, 16
          %s2640 = scalar_lea.vmem [#allocation17], %s2639
          %2642 = dma.done %s2637, 256
        $region100: #{tpu_custom_call.1} parent=95 // pred_fallthru
          _
      $region96: #{tpu_custom_call.1} parent=5 // pred_fallthru
        _
    $region6: #{tpu_custom_call.1} parent=1 // loop_footer
      %s30 = sadd.s32 1, %s26
    $region7: #{tpu_custom_call.1} parent=1 // loop_footer_branch
      %25 = sbr.rel target = $region3
    $region8: #{tpu_custom_call.1} parent=1 // loop_exit
      _
    %2643 = vsyncpa [#allocation7], 1
    %s2644 = scalar_lea.sflag [#allocation7], 1
    %2645 = vsyncpa %s2644, 1
    %2646 = vsyncpa [#allocation10], 1
    %s2647 = scalar_lea.sflag [#allocation10], 1
    %2648 = vsyncpa %s2647, 1
    %2649 = vsyncpa [#allocation13], 1
    %2650 = vsyncpa [#allocation16], 1
    %2651 = vsyncpa [#allocation8], 1
    %s2652 = scalar_lea.sflag [#allocation8], 1
    %2653 = vsyncpa %s2652, 1

</llo_original>
